<compile_context>
chip_gen: v5e
topology: v5e:2x2
jax: 0.10.0
libtpu: 0.0.40
codegen_flags: <defaults>
</compile_context>

<pallas_src>
import functools

import jax
import jax.numpy as jnp
from jax import lax
from jax.experimental import pallas as pl
from jax.experimental.pallas import tpu as pltpu


def _wbl_kernel(pred_ref, target_ref, loss_ref, match_ref):
    p = pred_ref[...].astype(jnp.float32)   # (bb, N, M): axis1 = class n, axis2 = spatial j
    t = target_ref[...]                     # (bb, N, M): axis1 = spatial j, axis2 = class m
    bb, N, M = p.shape                      # N == M (module requirement)

    # Iotas built once per grid step over the whole block (no per-batch rebuilds).
    lane_idx = lax.broadcasted_iota(jnp.int32, (bb, N, M), 2)   # class m / spatial j on lanes
    sub_idx = lax.broadcasted_iota(jnp.int32, (bb, N, M), 1)    # class n / spatial j on sublanes
    sub_f = sub_idx.astype(jnp.float32)

    # --- target argmax over its last dim (first maximal index) -> column (bb, N, 1).
    #     (Lane reduces; target stays in its native dtype.)
    t_max = jnp.max(t, axis=2, keepdims=True)
    tgt_col = jnp.min(jnp.where(t == t_max, lane_idx, M), axis=2,
                      keepdims=True).astype(jnp.float32)                      # (bb, N, 1)

    # Move the index column to a (bb, 1, M) row without an XLU tile transpose:
    # mask with the identity (valid because N == M) and sublane-sum (VPU only).
    ident = sub_idx == lane_idx
    tgt_row = jnp.sum(jnp.where(ident, tgt_col, 0.0), axis=1, keepdims=True)  # (bb, 1, M)

    # --- pred side: class axis stays on sublanes; all reductions are axis=1 (VPU).
    p_max = jnp.max(p, axis=1, keepdims=True)                                 # (bb, 1, M)
    lse = jnp.log(jnp.sum(jnp.exp(p - p_max), axis=1, keepdims=True))         # (bb, 1, M)
    pred_row = jnp.min(jnp.where(p == p_max, sub_f, float(N)), axis=1,
                       keepdims=True)                                         # (bb, 1, M)

    # picked[b, j] = pred[b, tgt[b, j], j] via one-hot compare + sublane sum.
    onehot = sub_f == tgt_row                                                 # (bb, N, M)
    picked = jnp.sum(jnp.where(onehot, p, 0.0), axis=1, keepdims=True)        # (bb, 1, M)

    # Lane-dense per-(batch, j) outputs; final reductions happen in the wrapper.
    loss_ref[0] = (p_max + lse - picked)[:, 0, :]                             # (bb, M)
    match_ref[0] = (pred_row == tgt_row).astype(jnp.float32)[:, 0, :]         # (bb, M)


def _choose_block_and_vmem(B, N, M, io_itemsize):
    """Pick the per-step batch block size and the scoped-VMEM limit."""
    try:
        vmem_cap = int(pltpu.get_tpu_info().vmem_capacity_bytes)
    except Exception:
        vmem_cap = 64 << 20                      # conservative fallback (v7x-sized VMEM)
    budget = (vmem_cap // 4) * 3                 # ~48 MiB on v7x, ~96 MiB on v5e/v6e

    # Rough per-batch-element VMEM: both inputs double-buffered plus ~8 full-tile
    # f32/i32 temporaries (iotas, exp, one-hots, ...), plus small row outputs.
    per_b = N * M * (2 * io_itemsize + 8 * 4) + 4 * M * 4
    bb_max = max(1, min(B, 64, (budget - (2 << 20)) // per_b))
    # TODO(synk): for N*M so large that even bb_max == 1 overflows the budget,
    # tile the class dim with an online (flash-style) max / sum-exp / argmax.

    # Keep several grid steps for large B so the "parallel" batch axis can be
    # sharded across v7x's two TensorCores (a no-op on single-core v5e/v6e).
    min_blocks = min(4, pl.cdiv(B, 8)) if B >= 16 else 1
    nblocks = max(pl.cdiv(B, bb_max), min_blocks)
    bb = pl.cdiv(B, nblocks)
    return bb, budget


@functools.partial(jax.jit, static_argnames=("block_batches",))
def weight_binding_loss(pred, target, block_batches=None):
    """Pallas TPU implementation of WeightBindingLoss.forward -> (crossLoss, acc)."""
    B, N, M = pred.shape
    assert target.shape == (B, N, M)
    assert N == M, "WeightBindingLoss requires N == M (implied by the PyTorch code)"

    io_itemsize = pred.dtype.itemsize + target.dtype.itemsize
    bb_auto, budget = _choose_block_and_vmem(B, N, M, io_itemsize)
    bb = bb_auto if block_batches is None else max(1, min(int(block_batches), B))

    nblocks = pl.cdiv(B, bb)
    b_pad = nblocks * bb
    if b_pad != B:
        pad = ((0, b_pad - B), (0, 0), (0, 0))
        pred_in = jnp.pad(pred, pad)
        target_in = jnp.pad(target, pad)
    else:
        pred_in, target_in = pred, target

    loss_rows, match_rows = pl.pallas_call(
        _wbl_kernel,
        out_shape=(jax.ShapeDtypeStruct((nblocks, bb, M), jnp.float32),
                   jax.ShapeDtypeStruct((nblocks, bb, M), jnp.float32)),
        grid_spec=pltpu.PrefetchScalarGridSpec(
            num_scalar_prefetch=0,
            grid=(nblocks,),
            in_specs=[pl.BlockSpec((bb, N, M), lambda i: (i, 0, 0)),
                      pl.BlockSpec((bb, N, M), lambda i: (i, 0, 0))],
            out_specs=[pl.BlockSpec((1, bb, M), lambda i: (i, 0, 0)),
                       pl.BlockSpec((1, bb, M), lambda i: (i, 0, 0))],
        ),
        compiler_params=pltpu.CompilerParams(
            dimension_semantics=("parallel",),
            vmem_limit_bytes=budget),
    )(pred_in, target_in)

    # Drop padded batches, then do the (tiny) final reductions in plain JAX.
    loss_rows = loss_rows.reshape(b_pad, M)[:B]
    match_rows = match_rows.reshape(b_pad, M)[:B]
    denom = jnp.float32(B * M)
    loss = jnp.sum(loss_rows) / denom
    acc = jnp.sum(match_rows) / denom
    return loss, acc


def weight_binding_loss_ref(pred, target):
    """Pure-JAX reference mirroring the PyTorch module."""
    B, N, M = pred.shape
    tgt_idx = jnp.argmax(target, axis=2)                                   # (B, M)
    logsm = jax.nn.log_softmax(pred.astype(jnp.float32), axis=1)           # (B, N, M)
    picked = jnp.take_along_axis(logsm, tgt_idx[:, None, :], axis=1)[:, 0, :]
    loss = -jnp.mean(picked)
    pred_idx = jnp.argmax(pred, axis=1)                                    # (B, M)
    acc = jnp.sum(pred_idx == tgt_idx).astype(jnp.float32) / (B * M)
    return loss, acc


if __name__ == "__main__":
    key = jax.random.PRNGKey(0)
    k1, k2 = jax.random.split(key)
    # Small but lane/sublane-aligned shapes: batch=8, classes=spatial=128 (N == M).
    B, N, M = 8, 128, 128
    pred = jax.random.normal(k1, (B, N, M), dtype=jnp.float32)
    target = jax.random.uniform(k2, (B, N, M), dtype=jnp.float32)

    loss_ref, acc_ref = weight_binding_loss_ref(pred, target)

    # Default (auto-chosen) batch block.
    loss, acc = weight_binding_loss(pred, target)
    jax.block_until_ready((loss, acc))
    assert jnp.allclose(loss, loss_ref, atol=1e-4, rtol=1e-4), (loss, loss_ref)
    assert jnp.allclose(acc, acc_ref, atol=1e-6), (acc, acc_ref)

    # Also exercise the multi-step grid + batch-padding path.
    loss2, acc2 = weight_binding_loss(pred, target, block_batches=3)
    jax.block_until_ready((loss2, acc2))
    assert jnp.allclose(loss2, loss_ref, atol=1e-4, rtol=1e-4), (loss2, loss_ref)
    assert jnp.allclose(acc2, acc_ref, atol=1e-6), (acc2, acc_ref)

    print("KERNEL_OK")
</pallas_src>

<mosaic_0001>
module attributes {stable_mosaic.version = 11 : i64} {
  func.func @_wbl_kernel(%arg0: i32, %arg1: memref<8x128x128xf32, #tpu.memory_space<vmem>>, %arg2: memref<8x128x128xf32, #tpu.memory_space<vmem>>, %arg3: memref<1x8x128xf32, #tpu.memory_space<vmem>>, %arg4: memref<1x8x128xf32, #tpu.memory_space<vmem>>) attributes {dimension_semantics = [#tpu.dimension_semantics<parallel>], iteration_bounds = array<i64: 1>, scalar_prefetch = 0 : i64, scratch_operands = 0 : i64, tpu.core_type = #tpu.core_type<tc>, window_params = [{transform_indices = @transform_0, window_bounds = array<i64: 8, 128, 128>}, {transform_indices = @transform_1, window_bounds = array<i64: 8, 128, 128>}, {transform_indices = @transform_2, window_bounds = array<i64: 1, 8, 128>}, {transform_indices = @transform_3, window_bounds = array<i64: 1, 8, 128>}]} {
    %c0 = arith.constant 0 : index
    %c0_0 = arith.constant 0 : index
    %c0_1 = arith.constant 0 : index
    %0 = vector.load %arg1[%c0, %c0_0, %c0_1] : memref<8x128x128xf32, #tpu.memory_space<vmem>>, vector<8x128x128xf32>
    %c0_2 = arith.constant 0 : index
    %c0_3 = arith.constant 0 : index
    %c0_4 = arith.constant 0 : index
    %1 = vector.load %arg2[%c0_2, %c0_3, %c0_4] : memref<8x128x128xf32, #tpu.memory_space<vmem>>, vector<8x128x128xf32>
    %2 = tpu.iota {dimensions = array<i32: 2>} : vector<8x128x128xi32>
    %3 = tpu.iota {dimensions = array<i32: 1>} : vector<8x128x128xi32>
    %4 = arith.sitofp %3 : vector<8x128x128xi32> to vector<8x128x128xf32>
    %cst = arith.constant dense<0xFF800000> : vector<8x128xf32>
    %5 = vector.multi_reduction <maximumf>, %1, %cst [2] : vector<8x128x128xf32> to vector<8x128xf32>
    %6 = vector.shape_cast %5 : vector<8x128xf32> to vector<8x128x1xf32>
    %7 = vector.broadcast %6 : vector<8x128x1xf32> to vector<8x128x128xf32>
    %8 = arith.cmpf oeq, %1, %7 : vector<8x128x128xf32>
    %c128_i32 = arith.constant 128 : i32
    %9 = vector.broadcast %c128_i32 : i32 to vector<8x128x128xi32>
    %10 = arith.select %8, %2, %9 : vector<8x128x128xi1>, vector<8x128x128xi32>
    %cst_5 = arith.constant dense<2147483647> : vector<8x128xi32>
    %11 = vector.multi_reduction <minsi>, %10, %cst_5 [2] : vector<8x128x128xi32> to vector<8x128xi32>
    %12 = vector.shape_cast %11 : vector<8x128xi32> to vector<8x128x1xi32>
    %13 = arith.sitofp %12 : vector<8x128x1xi32> to vector<8x128x1xf32>
    %14 = arith.cmpi eq, %3, %2 : vector<8x128x128xi32>
    %cst_6 = arith.constant 0.000000e+00 : f32
    %15 = vector.shape_cast %13 : vector<8x128x1xf32> to vector<8x128x1xf32>
    %16 = vector.broadcast %15 : vector<8x128x1xf32> to vector<8x128x128xf32>
    %17 = vector.broadcast %cst_6 : f32 to vector<8x128x128xf32>
    %18 = arith.select %14, %16, %17 : vector<8x128x128xi1>, vector<8x128x128xf32>
    %cst_7 = arith.constant dense<0.000000e+00> : vector<8x128xf32>
    %19 = vector.multi_reduction <add>, %18, %cst_7 [1] : vector<8x128x128xf32> to vector<8x128xf32>
    %20 = vector.shape_cast %19 : vector<8x128xf32> to vector<8x1x128xf32>
    %cst_8 = arith.constant dense<0xFF800000> : vector<8x128xf32>
    %21 = vector.multi_reduction <maximumf>, %0, %cst_8 [1] : vector<8x128x128xf32> to vector<8x128xf32>
    %22 = vector.shape_cast %21 : vector<8x128xf32> to vector<8x1x128xf32>
    %23 = vector.broadcast %22 : vector<8x1x128xf32> to vector<8x128x128xf32>
    %24 = arith.subf %0, %23 : vector<8x128x128xf32>
    %25 = math.exp %24 : vector<8x128x128xf32>
    %cst_9 = arith.constant dense<0.000000e+00> : vector<8x128xf32>
    %26 = vector.multi_reduction <add>, %25, %cst_9 [1] : vector<8x128x128xf32> to vector<8x128xf32>
    %27 = vector.shape_cast %26 : vector<8x128xf32> to vector<8x1x128xf32>
    %28 = math.log %27 : vector<8x1x128xf32>
    %29 = vector.broadcast %22 : vector<8x1x128xf32> to vector<8x128x128xf32>
    %30 = arith.cmpf oeq, %0, %29 : vector<8x128x128xf32>
    %cst_10 = arith.constant 1.280000e+02 : f32
    %31 = vector.broadcast %cst_10 : f32 to vector<8x128x128xf32>
    %32 = arith.select %30, %4, %31 : vector<8x128x128xi1>, vector<8x128x128xf32>
    %cst_11 = arith.constant dense<0x7F800000> : vector<8x128xf32>
    %33 = vector.multi_reduction <minimumf>, %32, %cst_11 [1] : vector<8x128x128xf32> to vector<8x128xf32>
    %34 = vector.shape_cast %33 : vector<8x128xf32> to vector<8x1x128xf32>
    %35 = vector.broadcast %20 : vector<8x1x128xf32> to vector<8x128x128xf32>
    %36 = arith.cmpf oeq, %4, %35 : vector<8x128x128xf32>
    %cst_12 = arith.constant 0.000000e+00 : f32
    %37 = vector.broadcast %cst_12 : f32 to vector<8x128x128xf32>
    %38 = arith.select %36, %0, %37 : vector<8x128x128xi1>, vector<8x128x128xf32>
    %cst_13 = arith.constant dense<0.000000e+00> : vector<8x128xf32>
    %39 = vector.multi_reduction <add>, %38, %cst_13 [1] : vector<8x128x128xf32> to vector<8x128xf32>
    %40 = vector.shape_cast %39 : vector<8x128xf32> to vector<8x1x128xf32>
    %41 = arith.addf %22, %28 : vector<8x1x128xf32>
    %42 = arith.subf %41, %40 : vector<8x1x128xf32>
    %43 = vector.shape_cast %42 : vector<8x1x128xf32> to vector<8x128xf32>
    %c0_14 = arith.constant 0 : index
    %c0_15 = arith.constant 0 : index
    %c0_16 = arith.constant 0 : index
    %44 = vector.load %arg3[%c0_14, %c0_15, %c0_16] : memref<1x8x128xf32, #tpu.memory_space<vmem>>, vector<1x8x128xf32>
    %45 = vector.shape_cast %44 : vector<1x8x128xf32> to vector<8x128xf32>
    %46 = vector.shape_cast %43 : vector<8x128xf32> to vector<1x8x128xf32>
    tpu.vector_store %arg3[%c0_14, %c0_15, %c0_16], %46 {strides = array<i32>} : memref<1x8x128xf32, #tpu.memory_space<vmem>>, vector<1x8x128xf32>,
    %47 = arith.cmpf oeq, %34, %20 : vector<8x1x128xf32>
    %48 = arith.extui %47 : vector<8x1x128xi1> to vector<8x1x128xi32>
    %49 = arith.sitofp %48 : vector<8x1x128xi32> to vector<8x1x128xf32>
    %50 = vector.shape_cast %49 : vector<8x1x128xf32> to vector<8x128xf32>
    %c0_17 = arith.constant 0 : index
    %c0_18 = arith.constant 0 : index
    %c0_19 = arith.constant 0 : index
    %51 = vector.load %arg4[%c0_17, %c0_18, %c0_19] : memref<1x8x128xf32, #tpu.memory_space<vmem>>, vector<1x8x128xf32>
    %52 = vector.shape_cast %51 : vector<1x8x128xf32> to vector<8x128xf32>
    %53 = vector.shape_cast %50 : vector<8x128xf32> to vector<1x8x128xf32>
    tpu.vector_store %arg4[%c0_17, %c0_18, %c0_19], %53 {strides = array<i32>} : memref<1x8x128xf32, #tpu.memory_space<vmem>>, vector<1x8x128xf32>,
    return
  }
  func.func @transform_0(%arg0: i32) -> (i32, i32, i32) {
    %c0_i32 = arith.constant 0 : i32
    %c0_i32_0 = arith.constant 0 : i32
    %c0_i32_1 = arith.constant 0 : i32
    return %arg0, %c0_i32, %c0_i32_0 : i32, i32, i32
  }
  func.func @transform_1(%arg0: i32) -> (i32, i32, i32) {
    %c0_i32 = arith.constant 0 : i32
    %c0_i32_0 = arith.constant 0 : i32
    %c0_i32_1 = arith.constant 0 : i32
    return %arg0, %c0_i32, %c0_i32_0 : i32, i32, i32
  }
  func.func @transform_2(%arg0: i32) -> (i32, i32, i32) {
    %c0_i32 = arith.constant 0 : i32
    %c0_i32_0 = arith.constant 0 : i32
    %c0_i32_1 = arith.constant 0 : i32
    return %arg0, %c0_i32, %c0_i32_0 : i32, i32, i32
  }
  func.func @transform_3(%arg0: i32) -> (i32, i32, i32) {
    %c0_i32 = arith.constant 0 : i32
    %c0_i32_0 = arith.constant 0 : i32
    %c0_i32_1 = arith.constant 0 : i32
    return %arg0, %c0_i32, %c0_i32_0 : i32, i32, i32
  }
}

</mosaic_0001>

<llo_original>
// kernel: weight_binding_loss.1
$region0: #{weight_binding_loss.1}
  #allocation0 [shape = 'u32[]', space=smem, size = 0x4, offset = 0x4, fixed_abs, tag = 'smem constant byte address 0x4 - core index']
  #allocation1 [shape = 'u32[72,128]{1,0:T(1,128)}', space=vmem, size = 0x9000, scoped, tag = 'internal scratch']
  %s0 = inlined_call_operand.hbm [shape: f32[8,128,128], index: 0, kind: input, shape index: {}]
  %s1 = inlined_call_operand.hbm [shape: f32[8,128,128], index: 1, kind: input, shape index: {}]
  %s2 = inlined_call_operand.vmem [shape: f32[1,8,128], index: 2, kind: output, shape index: {0}]
  %s3 = inlined_call_operand.vmem [shape: f32[1,8,128], index: 3, kind: output, shape index: {1}]
  %4 = xla_tuple %s2, %s3
  %s5 = sld [smem:[#allocation0]]
  $region34: #{weight_binding_loss.1} parent=0
    _
  %s7 = ssub.s32 1, %s5
  %s8 = scalar_select 0, %s7, %s5
  $region1: #{weight_binding_loss.1} parent=0
    #allocation2 [shape = 'u8[524288]{0}', space=vmem, size = 0x80000, scoped, tag = 'input window, operand 0, single buffered']
    #allocation3 [shape = 's32[1]{0}', space=sflag, size = 0x4, scoped, tag = 'scoped memory for weight_binding_loss.1']
    #allocation4 [shape = 'u8[524288]{0}', space=vmem, size = 0x80000, scoped, tag = 'input window, operand 1, single buffered']
    #allocation5 [shape = 's32[1]{0}', space=sflag, size = 0x4, scoped, tag = 'scoped memory for weight_binding_loss.1']
    %9 = vsyncpa [#allocation3], 0
    %10 = vsyncpa [#allocation5], 0
    // Predicated region
    $region2: #{weight_binding_loss.1} parent=1 // pred_check
      _
    $region3: #{weight_binding_loss.1} parent=1 // pred_check_branch
      %12 = sbr.rel (0) target = $region5
    $region4: #{weight_binding_loss.1} parent=1 // pred_region
      %14 = vsyncadd [#allocation3], 0
      %s15 = sshll.u32 %s0, 4
      %s16 = int_to_ptr.hbm [resolvable:$true] %s15
      %s17 = sshll.u32 [#allocation2], 4
      %s18 = int_to_ptr.vmem [resolvable:$true] %s17
      %23 = dma.hbm_to_vmem [thread:$0]  %s16, 16384, %s18, [#allocation3], 128, 128, 8
    $region5: #{weight_binding_loss.1} parent=1 // pred_fallthru
      _
    // Predicated region
    $region6: #{weight_binding_loss.1} parent=1 // pred_check
      _
    $region7: #{weight_binding_loss.1} parent=1 // pred_check_branch
      %25 = sbr.rel (0) target = $region9
    $region8: #{weight_binding_loss.1} parent=1 // pred_region
      %27 = vsyncadd [#allocation5], 0
      %s28 = sshll.u32 %s1, 4
      %s29 = int_to_ptr.hbm [resolvable:$true] %s28
      %s30 = sshll.u32 [#allocation4], 4
      %s31 = int_to_ptr.vmem [resolvable:$true] %s30
      %36 = dma.hbm_to_vmem [thread:$0]  %s29, 16384, %s31, [#allocation5], 128, 128, 8
    $region9: #{weight_binding_loss.1} parent=1 // pred_fallthru
      _
    // Predicated region
    $region10: #{weight_binding_loss.1} parent=1 // pred_check
      _
    $region11: #{weight_binding_loss.1} parent=1 // pred_check_branch
      %38 = sbr.rel (0) target = $region13
    $region12: #{weight_binding_loss.1} parent=1 // pred_region
      %40 = dma.done [#allocation3], 16384
    $region13: #{weight_binding_loss.1} parent=1 // pred_fallthru
      _
    // Predicated region
    $region14: #{weight_binding_loss.1} parent=1 // pred_check
      _
    $region15: #{weight_binding_loss.1} parent=1 // pred_check_branch
      %42 = sbr.rel (0) target = $region17
    $region16: #{weight_binding_loss.1} parent=1 // pred_region
      %44 = dma.done [#allocation5], 16384
    $region17: #{weight_binding_loss.1} parent=1 // pred_fallthru
      _
    %v45 = vld [vmem:[#allocation2] sm:$0xff]
    %v46 = vld [vmem:[#allocation2 + $0x8] sm:$0xff]
    %v47 = vld [vmem:[#allocation2 + $0x10] sm:$0xff]
    %v48 = vld [vmem:[#allocation2 + $0x18] sm:$0xff]
    %v49 = vld [vmem:[#allocation2 + $0x20] sm:$0xff]
    %v50 = vld [vmem:[#allocation2 + $0x28] sm:$0xff]
    %v51 = vld [vmem:[#allocation2 + $0x30] sm:$0xff]
    %v52 = vld [vmem:[#allocation2 + $0x38] sm:$0xff]
    %v53 = vld [vmem:[#allocation2 + $0x40] sm:$0xff]
    %v54 = vld [vmem:[#allocation2 + $0x48] sm:$0xff]
    %v55 = vld [vmem:[#allocation2 + $0x50] sm:$0xff]
    %v56 = vld [vmem:[#allocation2 + $0x58] sm:$0xff]
    %v57 = vld [vmem:[#allocation2 + $0x60] sm:$0xff]
    %v58 = vld [vmem:[#allocation2 + $0x68] sm:$0xff]
    %v59 = vld [vmem:[#allocation2 + $0x70] sm:$0xff]
    %v60 = vld [vmem:[#allocation2 + $0x78] sm:$0xff]
    %v61 = vld [vmem:[#allocation2 + $0x80] sm:$0xff]
    %v62 = vld [vmem:[#allocation2 + $0x88] sm:$0xff]
    %v63 = vld [vmem:[#allocation2 + $0x90] sm:$0xff]
    %v64 = vld [vmem:[#allocation2 + $0x98] sm:$0xff]
    %v65 = vld [vmem:[#allocation2 + $0xa0] sm:$0xff]
    %v66 = vld [vmem:[#allocation2 + $0xa8] sm:$0xff]
    %v67 = vld [vmem:[#allocation2 + $0xb0] sm:$0xff]
    %v68 = vld [vmem:[#allocation2 + $0xb8] sm:$0xff]
    %v69 = vld [vmem:[#allocation2 + $0xc0] sm:$0xff]
    %v70 = vld [vmem:[#allocation2 + $0xc8] sm:$0xff]
    %v71 = vld [vmem:[#allocation2 + $0xd0] sm:$0xff]
    %v72 = vld [vmem:[#allocation2 + $0xd8] sm:$0xff]
    %v73 = vld [vmem:[#allocation2 + $0xe0] sm:$0xff]
    %v74 = vld [vmem:[#allocation2 + $0xe8] sm:$0xff]
    %v75 = vld [vmem:[#allocation2 + $0xf0] sm:$0xff]
    %v76 = vld [vmem:[#allocation2 + $0xf8] sm:$0xff]
    %v77 = vld [vmem:[#allocation2 + $0x100] sm:$0xff]
    %v78 = vld [vmem:[#allocation2 + $0x108] sm:$0xff]
    %v79 = vld [vmem:[#allocation2 + $0x110] sm:$0xff]
    %v80 = vld [vmem:[#allocation2 + $0x118] sm:$0xff]
    %v81 = vld [vmem:[#allocation2 + $0x120] sm:$0xff]
    %v82 = vld [vmem:[#allocation2 + $0x128] sm:$0xff]
    %v83 = vld [vmem:[#allocation2 + $0x130] sm:$0xff]
    %v84 = vld [vmem:[#allocation2 + $0x138] sm:$0xff]
    %v85 = vld [vmem:[#allocation2 + $0x140] sm:$0xff]
    %v86 = vld [vmem:[#allocation2 + $0x148] sm:$0xff]
    %v87 = vld [vmem:[#allocation2 + $0x150] sm:$0xff]
    %v88 = vld [vmem:[#allocation2 + $0x158] sm:$0xff]
    %v89 = vld [vmem:[#allocation2 + $0x160] sm:$0xff]
    %v90 = vld [vmem:[#allocation2 + $0x168] sm:$0xff]
    %v91 = vld [vmem:[#allocation2 + $0x170] sm:$0xff]
    %v92 = vld [vmem:[#allocation2 + $0x178] sm:$0xff]
    %v93 = vld [vmem:[#allocation2 + $0x180] sm:$0xff]
    %v94 = vld [vmem:[#allocation2 + $0x188] sm:$0xff]
    %v95 = vld [vmem:[#allocation2 + $0x190] sm:$0xff]
    %v96 = vld [vmem:[#allocation2 + $0x198] sm:$0xff]
    %v97 = vld [vmem:[#allocation2 + $0x1a0] sm:$0xff]
    %v98 = vld [vmem:[#allocation2 + $0x1a8] sm:$0xff]
    %v99 = vld [vmem:[#allocation2 + $0x1b0] sm:$0xff]
    %v100 = vld [vmem:[#allocation2 + $0x1b8] sm:$0xff]
    %v101 = vld [vmem:[#allocation2 + $0x1c0] sm:$0xff]
    %v102 = vld [vmem:[#allocation2 + $0x1c8] sm:$0xff]
    %v103 = vld [vmem:[#allocation2 + $0x1d0] sm:$0xff]
    %v104 = vld [vmem:[#allocation2 + $0x1d8] sm:$0xff]
    %v105 = vld [vmem:[#allocation2 + $0x1e0] sm:$0xff]
    %v106 = vld [vmem:[#allocation2 + $0x1e8] sm:$0xff]
    %v107 = vld [vmem:[#allocation2 + $0x1f0] sm:$0xff]
    %v108 = vld [vmem:[#allocation2 + $0x1f8] sm:$0xff]
    %v109 = vld [vmem:[#allocation2 + $0x200] sm:$0xff]
    %v110 = vld [vmem:[#allocation2 + $0x208] sm:$0xff]
    %v111 = vld [vmem:[#allocation2 + $0x210] sm:$0xff]
    %v112 = vld [vmem:[#allocation2 + $0x218] sm:$0xff]
    %v113 = vld [vmem:[#allocation2 + $0x220] sm:$0xff]
    %v114 = vld [vmem:[#allocation2 + $0x228] sm:$0xff]
    %v115 = vld [vmem:[#allocation2 + $0x230] sm:$0xff]
    %v116 = vld [vmem:[#allocation2 + $0x238] sm:$0xff]
    %v117 = vld [vmem:[#allocation2 + $0x240] sm:$0xff]
    %v118 = vld [vmem:[#allocation2 + $0x248] sm:$0xff]
    %v119 = vld [vmem:[#allocation2 + $0x250] sm:$0xff]
    %v120 = vld [vmem:[#allocation2 + $0x258] sm:$0xff]
    %v121 = vld [vmem:[#allocation2 + $0x260] sm:$0xff]
    %v122 = vld [vmem:[#allocation2 + $0x268] sm:$0xff]
    %v123 = vld [vmem:[#allocation2 + $0x270] sm:$0xff]
    %v124 = vld [vmem:[#allocation2 + $0x278] sm:$0xff]
    %v125 = vld [vmem:[#allocation2 + $0x280] sm:$0xff]
    %v126 = vld [vmem:[#allocation2 + $0x288] sm:$0xff]
    %v127 = vld [vmem:[#allocation2 + $0x290] sm:$0xff]
    %v128 = vld [vmem:[#allocation2 + $0x298] sm:$0xff]
    %v129 = vld [vmem:[#allocation2 + $0x2a0] sm:$0xff]
    %v130 = vld [vmem:[#allocation2 + $0x2a8] sm:$0xff]
    %v131 = vld [vmem:[#allocation2 + $0x2b0] sm:$0xff]
    %v132 = vld [vmem:[#allocation2 + $0x2b8] sm:$0xff]
    %v133 = vld [vmem:[#allocation2 + $0x2c0] sm:$0xff]
    %v134 = vld [vmem:[#allocation2 + $0x2c8] sm:$0xff]
    %v135 = vld [vmem:[#allocation2 + $0x2d0] sm:$0xff]
    %v136 = vld [vmem:[#allocation2 + $0x2d8] sm:$0xff]
    %v137 = vld [vmem:[#allocation2 + $0x2e0] sm:$0xff]
    %v138 = vld [vmem:[#allocation2 + $0x2e8] sm:$0xff]
    %v139 = vld [vmem:[#allocation2 + $0x2f0] sm:$0xff]
    %v140 = vld [vmem:[#allocation2 + $0x2f8] sm:$0xff]
    %v141 = vld [vmem:[#allocation2 + $0x300] sm:$0xff]
    %v142 = vld [vmem:[#allocation2 + $0x308] sm:$0xff]
    %v143 = vld [vmem:[#allocation2 + $0x310] sm:$0xff]
    %v144 = vld [vmem:[#allocation2 + $0x318] sm:$0xff]
    %v145 = vld [vmem:[#allocation2 + $0x320] sm:$0xff]
    %v146 = vld [vmem:[#allocation2 + $0x328] sm:$0xff]
    %v147 = vld [vmem:[#allocation2 + $0x330] sm:$0xff]
    %v148 = vld [vmem:[#allocation2 + $0x338] sm:$0xff]
    %v149 = vld [vmem:[#allocation2 + $0x340] sm:$0xff]
    %v150 = vld [vmem:[#allocation2 + $0x348] sm:$0xff]
    %v151 = vld [vmem:[#allocation2 + $0x350] sm:$0xff]
    %v152 = vld [vmem:[#allocation2 + $0x358] sm:$0xff]
    %v153 = vld [vmem:[#allocation2 + $0x360] sm:$0xff]
    %v154 = vld [vmem:[#allocation2 + $0x368] sm:$0xff]
    %v155 = vld [vmem:[#allocation2 + $0x370] sm:$0xff]
    %v156 = vld [vmem:[#allocation2 + $0x378] sm:$0xff]
    %v157 = vld [vmem:[#allocation2 + $0x380] sm:$0xff]
    %v158 = vld [vmem:[#allocation2 + $0x388] sm:$0xff]
    %v159 = vld [vmem:[#allocation2 + $0x390] sm:$0xff]
    %v160 = vld [vmem:[#allocation2 + $0x398] sm:$0xff]
    %v161 = vld [vmem:[#allocation2 + $0x3a0] sm:$0xff]
    %v162 = vld [vmem:[#allocation2 + $0x3a8] sm:$0xff]
    %v163 = vld [vmem:[#allocation2 + $0x3b0] sm:$0xff]
    %v164 = vld [vmem:[#allocation2 + $0x3b8] sm:$0xff]
    %v165 = vld [vmem:[#allocation2 + $0x3c0] sm:$0xff]
    %v166 = vld [vmem:[#allocation2 + $0x3c8] sm:$0xff]
    %v167 = vld [vmem:[#allocation2 + $0x3d0] sm:$0xff]
    %v168 = vld [vmem:[#allocation2 + $0x3d8] sm:$0xff]
    %v169 = vld [vmem:[#allocation2 + $0x3e0] sm:$0xff]
    %v170 = vld [vmem:[#allocation2 + $0x3e8] sm:$0xff]
    %v171 = vld [vmem:[#allocation2 + $0x3f0] sm:$0xff]
    %v172 = vld [vmem:[#allocation2 + $0x3f8] sm:$0xff]
    %v173 = vld [vmem:[#allocation4] sm:$0xff]
    %v174 = vld [vmem:[#allocation4 + $0x8] sm:$0xff]
    %v175 = vld [vmem:[#allocation4 + $0x10] sm:$0xff]
    %v176 = vld [vmem:[#allocation4 + $0x18] sm:$0xff]
    %v177 = vld [vmem:[#allocation4 + $0x20] sm:$0xff]
    %v178 = vld [vmem:[#allocation4 + $0x28] sm:$0xff]
    %v179 = vld [vmem:[#allocation4 + $0x30] sm:$0xff]
    %v180 = vld [vmem:[#allocation4 + $0x38] sm:$0xff]
    %v181 = vld [vmem:[#allocation4 + $0x40] sm:$0xff]
    %v182 = vld [vmem:[#allocation4 + $0x48] sm:$0xff]
    %v183 = vld [vmem:[#allocation4 + $0x50] sm:$0xff]
    %v184 = vld [vmem:[#allocation4 + $0x58] sm:$0xff]
    %v185 = vld [vmem:[#allocation4 + $0x60] sm:$0xff]
    %v186 = vld [vmem:[#allocation4 + $0x68] sm:$0xff]
    %v187 = vld [vmem:[#allocation4 + $0x70] sm:$0xff]
    %v188 = vld [vmem:[#allocation4 + $0x78] sm:$0xff]
    %v189 = vld [vmem:[#allocation4 + $0x80] sm:$0xff]
    %v190 = vld [vmem:[#allocation4 + $0x88] sm:$0xff]
    %v191 = vld [vmem:[#allocation4 + $0x90] sm:$0xff]
    %v192 = vld [vmem:[#allocation4 + $0x98] sm:$0xff]
    %v193 = vld [vmem:[#allocation4 + $0xa0] sm:$0xff]
    %v194 = vld [vmem:[#allocation4 + $0xa8] sm:$0xff]
    %v195 = vld [vmem:[#allocation4 + $0xb0] sm:$0xff]
    %v196 = vld [vmem:[#allocation4 + $0xb8] sm:$0xff]
    %v197 = vld [vmem:[#allocation4 + $0xc0] sm:$0xff]
    %v198 = vld [vmem:[#allocation4 + $0xc8] sm:$0xff]
    %v199 = vld [vmem:[#allocation4 + $0xd0] sm:$0xff]
    %v200 = vld [vmem:[#allocation4 + $0xd8] sm:$0xff]
    %v201 = vld [vmem:[#allocation4 + $0xe0] sm:$0xff]
    %v202 = vld [vmem:[#allocation4 + $0xe8] sm:$0xff]
    %v203 = vld [vmem:[#allocation4 + $0xf0] sm:$0xff]
    %v204 = vld [vmem:[#allocation4 + $0xf8] sm:$0xff]
    %v205 = vld [vmem:[#allocation4 + $0x100] sm:$0xff]
    %v206 = vld [vmem:[#allocation4 + $0x108] sm:$0xff]
    %v207 = vld [vmem:[#allocation4 + $0x110] sm:$0xff]
    %v208 = vld [vmem:[#allocation4 + $0x118] sm:$0xff]
    %v209 = vld [vmem:[#allocation4 + $0x120] sm:$0xff]
    %v210 = vld [vmem:[#allocation4 + $0x128] sm:$0xff]
    %v211 = vld [vmem:[#allocation4 + $0x130] sm:$0xff]
    %v212 = vld [vmem:[#allocation4 + $0x138] sm:$0xff]
    %v213 = vld [vmem:[#allocation4 + $0x140] sm:$0xff]
    %v214 = vld [vmem:[#allocation4 + $0x148] sm:$0xff]
    %v215 = vld [vmem:[#allocation4 + $0x150] sm:$0xff]
    %v216 = vld [vmem:[#allocation4 + $0x158] sm:$0xff]
    %v217 = vld [vmem:[#allocation4 + $0x160] sm:$0xff]
    %v218 = vld [vmem:[#allocation4 + $0x168] sm:$0xff]
    %v219 = vld [vmem:[#allocation4 + $0x170] sm:$0xff]
    %v220 = vld [vmem:[#allocation4 + $0x178] sm:$0xff]
    %v221 = vld [vmem:[#allocation4 + $0x180] sm:$0xff]
    %v222 = vld [vmem:[#allocation4 + $0x188] sm:$0xff]
    %v223 = vld [vmem:[#allocation4 + $0x190] sm:$0xff]
    %v224 = vld [vmem:[#allocation4 + $0x198] sm:$0xff]
    %v225 = vld [vmem:[#allocation4 + $0x1a0] sm:$0xff]
    %v226 = vld [vmem:[#allocation4 + $0x1a8] sm:$0xff]
    %v227 = vld [vmem:[#allocation4 + $0x1b0] sm:$0xff]
    %v228 = vld [vmem:[#allocation4 + $0x1b8] sm:$0xff]
    %v229 = vld [vmem:[#allocation4 + $0x1c0] sm:$0xff]
    %v230 = vld [vmem:[#allocation4 + $0x1c8] sm:$0xff]
    %v231 = vld [vmem:[#allocation4 + $0x1d0] sm:$0xff]
    %v232 = vld [vmem:[#allocation4 + $0x1d8] sm:$0xff]
    %v233 = vld [vmem:[#allocation4 + $0x1e0] sm:$0xff]
    %v234 = vld [vmem:[#allocation4 + $0x1e8] sm:$0xff]
    %v235 = vld [vmem:[#allocation4 + $0x1f0] sm:$0xff]
    %v236 = vld [vmem:[#allocation4 + $0x1f8] sm:$0xff]
    %v237 = vld [vmem:[#allocation4 + $0x200] sm:$0xff]
    %v238 = vld [vmem:[#allocation4 + $0x208] sm:$0xff]
    %v239 = vld [vmem:[#allocation4 + $0x210] sm:$0xff]
    %v240 = vld [vmem:[#allocation4 + $0x218] sm:$0xff]
    %v241 = vld [vmem:[#allocation4 + $0x220] sm:$0xff]
    %v242 = vld [vmem:[#allocation4 + $0x228] sm:$0xff]
    %v243 = vld [vmem:[#allocation4 + $0x230] sm:$0xff]
    %v244 = vld [vmem:[#allocation4 + $0x238] sm:$0xff]
    %v245 = vld [vmem:[#allocation4 + $0x240] sm:$0xff]
    %v246 = vld [vmem:[#allocation4 + $0x248] sm:$0xff]
    %v247 = vld [vmem:[#allocation4 + $0x250] sm:$0xff]
    %v248 = vld [vmem:[#allocation4 + $0x258] sm:$0xff]
    %v249 = vld [vmem:[#allocation4 + $0x260] sm:$0xff]
    %v250 = vld [vmem:[#allocation4 + $0x268] sm:$0xff]
    %v251 = vld [vmem:[#allocation4 + $0x270] sm:$0xff]
    %v252 = vld [vmem:[#allocation4 + $0x278] sm:$0xff]
    %v253 = vld [vmem:[#allocation4 + $0x280] sm:$0xff]
    %v254 = vld [vmem:[#allocation4 + $0x288] sm:$0xff]
    %v255 = vld [vmem:[#allocation4 + $0x290] sm:$0xff]
    %v256 = vld [vmem:[#allocation4 + $0x298] sm:$0xff]
    %v257 = vld [vmem:[#allocation4 + $0x2a0] sm:$0xff]
    %v258 = vld [vmem:[#allocation4 + $0x2a8] sm:$0xff]
    %v259 = vld [vmem:[#allocation4 + $0x2b0] sm:$0xff]
    %v260 = vld [vmem:[#allocation4 + $0x2b8] sm:$0xff]
    %v261 = vld [vmem:[#allocation4 + $0x2c0] sm:$0xff]
    %v262 = vld [vmem:[#allocation4 + $0x2c8] sm:$0xff]
    %v263 = vld [vmem:[#allocation4 + $0x2d0] sm:$0xff]
    %v264 = vld [vmem:[#allocation4 + $0x2d8] sm:$0xff]
    %v265 = vld [vmem:[#allocation4 + $0x2e0] sm:$0xff]
    %v266 = vld [vmem:[#allocation4 + $0x2e8] sm:$0xff]
    %v267 = vld [vmem:[#allocation4 + $0x2f0] sm:$0xff]
    %v268 = vld [vmem:[#allocation4 + $0x2f8] sm:$0xff]
    %v269 = vld [vmem:[#allocation4 + $0x300] sm:$0xff]
    %v270 = vld [vmem:[#allocation4 + $0x308] sm:$0xff]
    %v271 = vld [vmem:[#allocation4 + $0x310] sm:$0xff]
    %v272 = vld [vmem:[#allocation4 + $0x318] sm:$0xff]
    %v273 = vld [vmem:[#allocation4 + $0x320] sm:$0xff]
    %v274 = vld [vmem:[#allocation4 + $0x328] sm:$0xff]
    %v275 = vld [vmem:[#allocation4 + $0x330] sm:$0xff]
    %v276 = vld [vmem:[#allocation4 + $0x338] sm:$0xff]
    %v277 = vld [vmem:[#allocation4 + $0x340] sm:$0xff]
    %v278 = vld [vmem:[#allocation4 + $0x348] sm:$0xff]
    %v279 = vld [vmem:[#allocation4 + $0x350] sm:$0xff]
    %v280 = vld [vmem:[#allocation4 + $0x358] sm:$0xff]
    %v281 = vld [vmem:[#allocation4 + $0x360] sm:$0xff]
    %v282 = vld [vmem:[#allocation4 + $0x368] sm:$0xff]
    %v283 = vld [vmem:[#allocation4 + $0x370] sm:$0xff]
    %v284 = vld [vmem:[#allocation4 + $0x378] sm:$0xff]
    %v285 = vld [vmem:[#allocation4 + $0x380] sm:$0xff]
    %v286 = vld [vmem:[#allocation4 + $0x388] sm:$0xff]
    %v287 = vld [vmem:[#allocation4 + $0x390] sm:$0xff]
    %v288 = vld [vmem:[#allocation4 + $0x398] sm:$0xff]
    %v289 = vld [vmem:[#allocation4 + $0x3a0] sm:$0xff]
    %v290 = vld [vmem:[#allocation4 + $0x3a8] sm:$0xff]
    %v291 = vld [vmem:[#allocation4 + $0x3b0] sm:$0xff]
    %v292 = vld [vmem:[#allocation4 + $0x3b8] sm:$0xff]
    %v293 = vld [vmem:[#allocation4 + $0x3c0] sm:$0xff]
    %v294 = vld [vmem:[#allocation4 + $0x3c8] sm:$0xff]
    %v295 = vld [vmem:[#allocation4 + $0x3d0] sm:$0xff]
    %v296 = vld [vmem:[#allocation4 + $0x3d8] sm:$0xff]
    %v297 = vld [vmem:[#allocation4 + $0x3e0] sm:$0xff]
    %v298 = vld [vmem:[#allocation4 + $0x3e8] sm:$0xff]
    %v299 = vld [vmem:[#allocation4 + $0x3f0] sm:$0xff]
    %v300 = vld [vmem:[#allocation4 + $0x3f8] sm:$0xff]
    %v301 = vlaneseq
    %v302 = vand.u32 %v301, 127
    %v303 = vlaneseq
    %v304 = vshrl.u32 %v303, 7
    %v305 = vadd.s32 %v304, 8
    %v306 = vadd.s32 %v304, 16
    %v307 = vadd.s32 %v304, 24
    %v308 = vadd.s32 %v304, 32
    %v309 = vadd.s32 %v304, 40
    %v310 = vadd.s32 %v304, 48
    %v311 = vadd.s32 %v304, 56
    %v312 = vadd.s32 %v304, 64
    %v313 = vadd.s32 %v304, 72
    %v314 = vadd.s32 %v304, 80
    %v315 = vadd.s32 %v304, 88
    %v316 = vadd.s32 %v304, 96
    %v317 = vadd.s32 %v304, 104
    %v318 = vadd.s32 %v304, 112
    %v319 = vadd.s32 %v304, 120
    %v320 = vcvt.s32.f32 %v304
    %v321 = vcvt.s32.f32 %v305
    %v322 = vcvt.s32.f32 %v306
    %v323 = vcvt.s32.f32 %v307
    %v324 = vcvt.s32.f32 %v308
    %v325 = vcvt.s32.f32 %v309
    %v326 = vcvt.s32.f32 %v310
    %v327 = vcvt.s32.f32 %v311
    %v328 = vcvt.s32.f32 %v312
    %v329 = vcvt.s32.f32 %v313
    %v330 = vcvt.s32.f32 %v314
    %v331 = vcvt.s32.f32 %v315
    %v332 = vcvt.s32.f32 %v316
    %v333 = vcvt.s32.f32 %v317
    %v334 = vcvt.s32.f32 %v318
    %v335 = vcvt.s32.f32 %v319
    %336 = vmax.xlane.f32.xlu0 %v173
    %v337 = vpop.xlane.xlu0 %336
    %338 = vmax.xlane.f32.xlu0 %v174
    %v339 = vpop.xlane.xlu0 %338
    %340 = vmax.xlane.f32.xlu0 %v175
    %v341 = vpop.xlane.xlu0 %340
    %342 = vmax.xlane.f32.xlu0 %v176
    %v343 = vpop.xlane.xlu0 %342
    %344 = vmax.xlane.f32.xlu0 %v177
    %v345 = vpop.xlane.xlu0 %344
    %346 = vmax.xlane.f32.xlu0 %v178
    %v347 = vpop.xlane.xlu0 %346
    %348 = vmax.xlane.f32.xlu0 %v179
    %v349 = vpop.xlane.xlu0 %348
    %350 = vmax.xlane.f32.xlu0 %v180
    %v351 = vpop.xlane.xlu0 %350
    %352 = vmax.xlane.f32.xlu0 %v181
    %v353 = vpop.xlane.xlu0 %352
    %354 = vmax.xlane.f32.xlu0 %v182
    %v355 = vpop.xlane.xlu0 %354
    %356 = vmax.xlane.f32.xlu0 %v183
    %v357 = vpop.xlane.xlu0 %356
    %358 = vmax.xlane.f32.xlu0 %v184
    %v359 = vpop.xlane.xlu0 %358
    %360 = vmax.xlane.f32.xlu0 %v185
    %v361 = vpop.xlane.xlu0 %360
    %362 = vmax.xlane.f32.xlu0 %v186
    %v363 = vpop.xlane.xlu0 %362
    %364 = vmax.xlane.f32.xlu0 %v187
    %v365 = vpop.xlane.xlu0 %364
    %366 = vmax.xlane.f32.xlu0 %v188
    %v367 = vpop.xlane.xlu0 %366
    %368 = vmax.xlane.f32.xlu0 %v189
    %v369 = vpop.xlane.xlu0 %368
    %370 = vmax.xlane.f32.xlu0 %v190
    %v371 = vpop.xlane.xlu0 %370
    %372 = vmax.xlane.f32.xlu0 %v191
    %v373 = vpop.xlane.xlu0 %372
    %374 = vmax.xlane.f32.xlu0 %v192
    %v375 = vpop.xlane.xlu0 %374
    %376 = vmax.xlane.f32.xlu0 %v193
    %v377 = vpop.xlane.xlu0 %376
    %378 = vmax.xlane.f32.xlu0 %v194
    %v379 = vpop.xlane.xlu0 %378
    %380 = vmax.xlane.f32.xlu0 %v195
    %v381 = vpop.xlane.xlu0 %380
    %382 = vmax.xlane.f32.xlu0 %v196
    %v383 = vpop.xlane.xlu0 %382
    %384 = vmax.xlane.f32.xlu0 %v197
    %v385 = vpop.xlane.xlu0 %384
    %386 = vmax.xlane.f32.xlu0 %v198
    %v387 = vpop.xlane.xlu0 %386
    %388 = vmax.xlane.f32.xlu0 %v199
    %v389 = vpop.xlane.xlu0 %388
    %390 = vmax.xlane.f32.xlu0 %v200
    %v391 = vpop.xlane.xlu0 %390
    %392 = vmax.xlane.f32.xlu0 %v201
    %v393 = vpop.xlane.xlu0 %392
    %394 = vmax.xlane.f32.xlu0 %v202
    %v395 = vpop.xlane.xlu0 %394
    %396 = vmax.xlane.f32.xlu0 %v203
    %v397 = vpop.xlane.xlu0 %396
    %398 = vmax.xlane.f32.xlu0 %v204
    %v399 = vpop.xlane.xlu0 %398
    %400 = vmax.xlane.f32.xlu0 %v205
    %v401 = vpop.xlane.xlu0 %400
    %402 = vmax.xlane.f32.xlu0 %v206
    %v403 = vpop.xlane.xlu0 %402
    %404 = vmax.xlane.f32.xlu0 %v207
    %v405 = vpop.xlane.xlu0 %404
    %406 = vmax.xlane.f32.xlu0 %v208
    %v407 = vpop.xlane.xlu0 %406
    %408 = vmax.xlane.f32.xlu0 %v209
    %v409 = vpop.xlane.xlu0 %408
    %410 = vmax.xlane.f32.xlu0 %v210
    %v411 = vpop.xlane.xlu0 %410
    %412 = vmax.xlane.f32.xlu0 %v211
    %v413 = vpop.xlane.xlu0 %412
    %414 = vmax.xlane.f32.xlu0 %v212
    %v415 = vpop.xlane.xlu0 %414
    %416 = vmax.xlane.f32.xlu0 %v213
    %v417 = vpop.xlane.xlu0 %416
    %418 = vmax.xlane.f32.xlu0 %v214
    %v419 = vpop.xlane.xlu0 %418
    %420 = vmax.xlane.f32.xlu0 %v215
    %v421 = vpop.xlane.xlu0 %420
    %422 = vmax.xlane.f32.xlu0 %v216
    %v423 = vpop.xlane.xlu0 %422
    %424 = vmax.xlane.f32.xlu0 %v217
    %v425 = vpop.xlane.xlu0 %424
    %426 = vmax.xlane.f32.xlu0 %v218
    %v427 = vpop.xlane.xlu0 %426
    %428 = vmax.xlane.f32.xlu0 %v219
    %v429 = vpop.xlane.xlu0 %428
    %430 = vmax.xlane.f32.xlu0 %v220
    %v431 = vpop.xlane.xlu0 %430
    %432 = vmax.xlane.f32.xlu0 %v221
    %v433 = vpop.xlane.xlu0 %432
    %434 = vmax.xlane.f32.xlu0 %v222
    %v435 = vpop.xlane.xlu0 %434
    %436 = vmax.xlane.f32.xlu0 %v223
    %v437 = vpop.xlane.xlu0 %436
    %438 = vmax.xlane.f32.xlu0 %v224
    %v439 = vpop.xlane.xlu0 %438
    %440 = vmax.xlane.f32.xlu0 %v225
    %v441 = vpop.xlane.xlu0 %440
    %442 = vmax.xlane.f32.xlu0 %v226
    %v443 = vpop.xlane.xlu0 %442
    %444 = vmax.xlane.f32.xlu0 %v227
    %v445 = vpop.xlane.xlu0 %444
    %446 = vmax.xlane.f32.xlu0 %v228
    %v447 = vpop.xlane.xlu0 %446
    %448 = vmax.xlane.f32.xlu0 %v229
    %v449 = vpop.xlane.xlu0 %448
    %450 = vmax.xlane.f32.xlu0 %v230
    %v451 = vpop.xlane.xlu0 %450
    %452 = vmax.xlane.f32.xlu0 %v231
    %v453 = vpop.xlane.xlu0 %452
    %454 = vmax.xlane.f32.xlu0 %v232
    %v455 = vpop.xlane.xlu0 %454
    %456 = vmax.xlane.f32.xlu0 %v233
    %v457 = vpop.xlane.xlu0 %456
    %458 = vmax.xlane.f32.xlu0 %v234
    %v459 = vpop.xlane.xlu0 %458
    %460 = vmax.xlane.f32.xlu0 %v235
    %v461 = vpop.xlane.xlu0 %460
    %462 = vmax.xlane.f32.xlu0 %v236
    %v463 = vpop.xlane.xlu0 %462
    %464 = vmax.xlane.f32.xlu0 %v237
    %v465 = vpop.xlane.xlu0 %464
    %466 = vmax.xlane.f32.xlu0 %v238
    %v467 = vpop.xlane.xlu0 %466
    %468 = vmax.xlane.f32.xlu0 %v239
    %v469 = vpop.xlane.xlu0 %468
    %470 = vmax.xlane.f32.xlu0 %v240
    %v471 = vpop.xlane.xlu0 %470
    %472 = vmax.xlane.f32.xlu0 %v241
    %v473 = vpop.xlane.xlu0 %472
    %474 = vmax.xlane.f32.xlu0 %v242
    %v475 = vpop.xlane.xlu0 %474
    %476 = vmax.xlane.f32.xlu0 %v243
    %v477 = vpop.xlane.xlu0 %476
    %478 = vmax.xlane.f32.xlu0 %v244
    %v479 = vpop.xlane.xlu0 %478
    %480 = vmax.xlane.f32.xlu0 %v245
    %v481 = vpop.xlane.xlu0 %480
    %482 = vmax.xlane.f32.xlu0 %v246
    %v483 = vpop.xlane.xlu0 %482
    %484 = vmax.xlane.f32.xlu0 %v247
    %v485 = vpop.xlane.xlu0 %484
    %486 = vmax.xlane.f32.xlu0 %v248
    %v487 = vpop.xlane.xlu0 %486
    %488 = vmax.xlane.f32.xlu0 %v249
    %v489 = vpop.xlane.xlu0 %488
    %490 = vmax.xlane.f32.xlu0 %v250
    %v491 = vpop.xlane.xlu0 %490
    %492 = vmax.xlane.f32.xlu0 %v251
    %v493 = vpop.xlane.xlu0 %492
    %494 = vmax.xlane.f32.xlu0 %v252
    %v495 = vpop.xlane.xlu0 %494
    %496 = vmax.xlane.f32.xlu0 %v253
    %v497 = vpop.xlane.xlu0 %496
    %498 = vmax.xlane.f32.xlu0 %v254
    %v499 = vpop.xlane.xlu0 %498
    %500 = vmax.xlane.f32.xlu0 %v255
    %v501 = vpop.xlane.xlu0 %500
    %502 = vmax.xlane.f32.xlu0 %v256
    %v503 = vpop.xlane.xlu0 %502
    %504 = vmax.xlane.f32.xlu0 %v257
    %v505 = vpop.xlane.xlu0 %504
    %506 = vmax.xlane.f32.xlu0 %v258
    %v507 = vpop.xlane.xlu0 %506
    %508 = vmax.xlane.f32.xlu0 %v259
    %v509 = vpop.xlane.xlu0 %508
    %510 = vmax.xlane.f32.xlu0 %v260
    %v511 = vpop.xlane.xlu0 %510
    %512 = vmax.xlane.f32.xlu0 %v261
    %v513 = vpop.xlane.xlu0 %512
    %514 = vmax.xlane.f32.xlu0 %v262
    %v515 = vpop.xlane.xlu0 %514
    %516 = vmax.xlane.f32.xlu0 %v263
    %v517 = vpop.xlane.xlu0 %516
    %518 = vmax.xlane.f32.xlu0 %v264
    %v519 = vpop.xlane.xlu0 %518
    %520 = vmax.xlane.f32.xlu0 %v265
    %v521 = vpop.xlane.xlu0 %520
    %522 = vmax.xlane.f32.xlu0 %v266
    %v523 = vpop.xlane.xlu0 %522
    %524 = vmax.xlane.f32.xlu0 %v267
    %v525 = vpop.xlane.xlu0 %524
    %526 = vmax.xlane.f32.xlu0 %v268
    %v527 = vpop.xlane.xlu0 %526
    %528 = vmax.xlane.f32.xlu0 %v269
    %v529 = vpop.xlane.xlu0 %528
    %530 = vmax.xlane.f32.xlu0 %v270
    %v531 = vpop.xlane.xlu0 %530
    %532 = vmax.xlane.f32.xlu0 %v271
    %v533 = vpop.xlane.xlu0 %532
    %534 = vmax.xlane.f32.xlu0 %v272
    %v535 = vpop.xlane.xlu0 %534
    %536 = vmax.xlane.f32.xlu0 %v273
    %v537 = vpop.xlane.xlu0 %536
    %538 = vmax.xlane.f32.xlu0 %v274
    %v539 = vpop.xlane.xlu0 %538
    %540 = vmax.xlane.f32.xlu0 %v275
    %v541 = vpop.xlane.xlu0 %540
    %542 = vmax.xlane.f32.xlu0 %v276
    %v543 = vpop.xlane.xlu0 %542
    %544 = vmax.xlane.f32.xlu0 %v277
    %v545 = vpop.xlane.xlu0 %544
    %546 = vmax.xlane.f32.xlu0 %v278
    %v547 = vpop.xlane.xlu0 %546
    %548 = vmax.xlane.f32.xlu0 %v279
    %v549 = vpop.xlane.xlu0 %548
    %550 = vmax.xlane.f32.xlu0 %v280
    %v551 = vpop.xlane.xlu0 %550
    %552 = vmax.xlane.f32.xlu0 %v281
    %v553 = vpop.xlane.xlu0 %552
    %554 = vmax.xlane.f32.xlu0 %v282
    %v555 = vpop.xlane.xlu0 %554
    %556 = vmax.xlane.f32.xlu0 %v283
    %v557 = vpop.xlane.xlu0 %556
    %558 = vmax.xlane.f32.xlu0 %v284
    %v559 = vpop.xlane.xlu0 %558
    %560 = vmax.xlane.f32.xlu0 %v285
    %v561 = vpop.xlane.xlu0 %560
    %562 = vmax.xlane.f32.xlu0 %v286
    %v563 = vpop.xlane.xlu0 %562
    %564 = vmax.xlane.f32.xlu0 %v287
    %v565 = vpop.xlane.xlu0 %564
    %566 = vmax.xlane.f32.xlu0 %v288
    %v567 = vpop.xlane.xlu0 %566
    %568 = vmax.xlane.f32.xlu0 %v289
    %v569 = vpop.xlane.xlu0 %568
    %570 = vmax.xlane.f32.xlu0 %v290
    %v571 = vpop.xlane.xlu0 %570
    %572 = vmax.xlane.f32.xlu0 %v291
    %v573 = vpop.xlane.xlu0 %572
    %574 = vmax.xlane.f32.xlu0 %v292
    %v575 = vpop.xlane.xlu0 %574
    %576 = vmax.xlane.f32.xlu0 %v293
    %v577 = vpop.xlane.xlu0 %576
    %578 = vmax.xlane.f32.xlu0 %v294
    %v579 = vpop.xlane.xlu0 %578
    %580 = vmax.xlane.f32.xlu0 %v295
    %v581 = vpop.xlane.xlu0 %580
    %582 = vmax.xlane.f32.xlu0 %v296
    %v583 = vpop.xlane.xlu0 %582
    %584 = vmax.xlane.f32.xlu0 %v297
    %v585 = vpop.xlane.xlu0 %584
    %586 = vmax.xlane.f32.xlu0 %v298
    %v587 = vpop.xlane.xlu0 %586
    %588 = vmax.xlane.f32.xlu0 %v299
    %v589 = vpop.xlane.xlu0 %588
    %590 = vmax.xlane.f32.xlu0 %v300
    %v591 = vpop.xlane.xlu0 %590
    %vm592 = vcmp.eq.f32.partialorder %v173, %v337
    %vm593 = vcmp.eq.f32.partialorder %v174, %v339
    %vm594 = vcmp.eq.f32.partialorder %v175, %v341
    %vm595 = vcmp.eq.f32.partialorder %v176, %v343
    %vm596 = vcmp.eq.f32.partialorder %v177, %v345
    %vm597 = vcmp.eq.f32.partialorder %v178, %v347
    %vm598 = vcmp.eq.f32.partialorder %v179, %v349
    %vm599 = vcmp.eq.f32.partialorder %v180, %v351
    %vm600 = vcmp.eq.f32.partialorder %v181, %v353
    %vm601 = vcmp.eq.f32.partialorder %v182, %v355
    %vm602 = vcmp.eq.f32.partialorder %v183, %v357
    %vm603 = vcmp.eq.f32.partialorder %v184, %v359
    %vm604 = vcmp.eq.f32.partialorder %v185, %v361
    %vm605 = vcmp.eq.f32.partialorder %v186, %v363
    %vm606 = vcmp.eq.f32.partialorder %v187, %v365
    %vm607 = vcmp.eq.f32.partialorder %v188, %v367
    %vm608 = vcmp.eq.f32.partialorder %v189, %v369
    %vm609 = vcmp.eq.f32.partialorder %v190, %v371
    %vm610 = vcmp.eq.f32.partialorder %v191, %v373
    %vm611 = vcmp.eq.f32.partialorder %v192, %v375
    %vm612 = vcmp.eq.f32.partialorder %v193, %v377
    %vm613 = vcmp.eq.f32.partialorder %v194, %v379
    %vm614 = vcmp.eq.f32.partialorder %v195, %v381
    %vm615 = vcmp.eq.f32.partialorder %v196, %v383
    %vm616 = vcmp.eq.f32.partialorder %v197, %v385
    %vm617 = vcmp.eq.f32.partialorder %v198, %v387
    %vm618 = vcmp.eq.f32.partialorder %v199, %v389
    %vm619 = vcmp.eq.f32.partialorder %v200, %v391
    %vm620 = vcmp.eq.f32.partialorder %v201, %v393
    %vm621 = vcmp.eq.f32.partialorder %v202, %v395
    %vm622 = vcmp.eq.f32.partialorder %v203, %v397
    %vm623 = vcmp.eq.f32.partialorder %v204, %v399
    %vm624 = vcmp.eq.f32.partialorder %v205, %v401
    %vm625 = vcmp.eq.f32.partialorder %v206, %v403
    %vm626 = vcmp.eq.f32.partialorder %v207, %v405
    %vm627 = vcmp.eq.f32.partialorder %v208, %v407
    %vm628 = vcmp.eq.f32.partialorder %v209, %v409
    %vm629 = vcmp.eq.f32.partialorder %v210, %v411
    %vm630 = vcmp.eq.f32.partialorder %v211, %v413
    %vm631 = vcmp.eq.f32.partialorder %v212, %v415
    %vm632 = vcmp.eq.f32.partialorder %v213, %v417
    %vm633 = vcmp.eq.f32.partialorder %v214, %v419
    %vm634 = vcmp.eq.f32.partialorder %v215, %v421
    %vm635 = vcmp.eq.f32.partialorder %v216, %v423
    %vm636 = vcmp.eq.f32.partialorder %v217, %v425
    %vm637 = vcmp.eq.f32.partialorder %v218, %v427
    %vm638 = vcmp.eq.f32.partialorder %v219, %v429
    %vm639 = vcmp.eq.f32.partialorder %v220, %v431
    %vm640 = vcmp.eq.f32.partialorder %v221, %v433
    %vm641 = vcmp.eq.f32.partialorder %v222, %v435
    %vm642 = vcmp.eq.f32.partialorder %v223, %v437
    %vm643 = vcmp.eq.f32.partialorder %v224, %v439
    %vm644 = vcmp.eq.f32.partialorder %v225, %v441
    %vm645 = vcmp.eq.f32.partialorder %v226, %v443
    %vm646 = vcmp.eq.f32.partialorder %v227, %v445
    %vm647 = vcmp.eq.f32.partialorder %v228, %v447
    %vm648 = vcmp.eq.f32.partialorder %v229, %v449
    %vm649 = vcmp.eq.f32.partialorder %v230, %v451
    %vm650 = vcmp.eq.f32.partialorder %v231, %v453
    %vm651 = vcmp.eq.f32.partialorder %v232, %v455
    %vm652 = vcmp.eq.f32.partialorder %v233, %v457
    %vm653 = vcmp.eq.f32.partialorder %v234, %v459
    %vm654 = vcmp.eq.f32.partialorder %v235, %v461
    %vm655 = vcmp.eq.f32.partialorder %v236, %v463
    %vm656 = vcmp.eq.f32.partialorder %v237, %v465
    %vm657 = vcmp.eq.f32.partialorder %v238, %v467
    %vm658 = vcmp.eq.f32.partialorder %v239, %v469
    %vm659 = vcmp.eq.f32.partialorder %v240, %v471
    %vm660 = vcmp.eq.f32.partialorder %v241, %v473
    %vm661 = vcmp.eq.f32.partialorder %v242, %v475
    %vm662 = vcmp.eq.f32.partialorder %v243, %v477
    %vm663 = vcmp.eq.f32.partialorder %v244, %v479
    %vm664 = vcmp.eq.f32.partialorder %v245, %v481
    %vm665 = vcmp.eq.f32.partialorder %v246, %v483
    %vm666 = vcmp.eq.f32.partialorder %v247, %v485
    %vm667 = vcmp.eq.f32.partialorder %v248, %v487
    %vm668 = vcmp.eq.f32.partialorder %v249, %v489
    %vm669 = vcmp.eq.f32.partialorder %v250, %v491
    %vm670 = vcmp.eq.f32.partialorder %v251, %v493
    %vm671 = vcmp.eq.f32.partialorder %v252, %v495
    %vm672 = vcmp.eq.f32.partialorder %v253, %v497
    %vm673 = vcmp.eq.f32.partialorder %v254, %v499
    %vm674 = vcmp.eq.f32.partialorder %v255, %v501
    %vm675 = vcmp.eq.f32.partialorder %v256, %v503
    %vm676 = vcmp.eq.f32.partialorder %v257, %v505
    %vm677 = vcmp.eq.f32.partialorder %v258, %v507
    %vm678 = vcmp.eq.f32.partialorder %v259, %v509
    %vm679 = vcmp.eq.f32.partialorder %v260, %v511
    %vm680 = vcmp.eq.f32.partialorder %v261, %v513
    %vm681 = vcmp.eq.f32.partialorder %v262, %v515
    %vm682 = vcmp.eq.f32.partialorder %v263, %v517
    %vm683 = vcmp.eq.f32.partialorder %v264, %v519
    %vm684 = vcmp.eq.f32.partialorder %v265, %v521
    %vm685 = vcmp.eq.f32.partialorder %v266, %v523
    %vm686 = vcmp.eq.f32.partialorder %v267, %v525
    %vm687 = vcmp.eq.f32.partialorder %v268, %v527
    %vm688 = vcmp.eq.f32.partialorder %v269, %v529
    %vm689 = vcmp.eq.f32.partialorder %v270, %v531
    %vm690 = vcmp.eq.f32.partialorder %v271, %v533
    %vm691 = vcmp.eq.f32.partialorder %v272, %v535
    %vm692 = vcmp.eq.f32.partialorder %v273, %v537
    %vm693 = vcmp.eq.f32.partialorder %v274, %v539
    %vm694 = vcmp.eq.f32.partialorder %v275, %v541
    %vm695 = vcmp.eq.f32.partialorder %v276, %v543
    %vm696 = vcmp.eq.f32.partialorder %v277, %v545
    %vm697 = vcmp.eq.f32.partialorder %v278, %v547
    %vm698 = vcmp.eq.f32.partialorder %v279, %v549
    %vm699 = vcmp.eq.f32.partialorder %v280, %v551
    %vm700 = vcmp.eq.f32.partialorder %v281, %v553
    %vm701 = vcmp.eq.f32.partialorder %v282, %v555
    %vm702 = vcmp.eq.f32.partialorder %v283, %v557
    %vm703 = vcmp.eq.f32.partialorder %v284, %v559
    %vm704 = vcmp.eq.f32.partialorder %v285, %v561
    %vm705 = vcmp.eq.f32.partialorder %v286, %v563
    %vm706 = vcmp.eq.f32.partialorder %v287, %v565
    %vm707 = vcmp.eq.f32.partialorder %v288, %v567
    %vm708 = vcmp.eq.f32.partialorder %v289, %v569
    %vm709 = vcmp.eq.f32.partialorder %v290, %v571
    %vm710 = vcmp.eq.f32.partialorder %v291, %v573
    %vm711 = vcmp.eq.f32.partialorder %v292, %v575
    %vm712 = vcmp.eq.f32.partialorder %v293, %v577
    %vm713 = vcmp.eq.f32.partialorder %v294, %v579
    %vm714 = vcmp.eq.f32.partialorder %v295, %v581
    %vm715 = vcmp.eq.f32.partialorder %v296, %v583
    %vm716 = vcmp.eq.f32.partialorder %v297, %v585
    %vm717 = vcmp.eq.f32.partialorder %v298, %v587
    %vm718 = vcmp.eq.f32.partialorder %v299, %v589
    %vm719 = vcmp.eq.f32.partialorder %v300, %v591
    %v720 = vsel %vm592, %v302, 128
    %v721 = vsel %vm593, %v302, 128
    %v722 = vsel %vm594, %v302, 128
    %v723 = vsel %vm595, %v302, 128
    %v724 = vsel %vm596, %v302, 128
    %v725 = vsel %vm597, %v302, 128
    %v726 = vsel %vm598, %v302, 128
    %v727 = vsel %vm599, %v302, 128
    %v728 = vsel %vm600, %v302, 128
    %v729 = vsel %vm601, %v302, 128
    %v730 = vsel %vm602, %v302, 128
    %v731 = vsel %vm603, %v302, 128
    %v732 = vsel %vm604, %v302, 128
    %v733 = vsel %vm605, %v302, 128
    %v734 = vsel %vm606, %v302, 128
    %v735 = vsel %vm607, %v302, 128
    %v736 = vsel %vm608, %v302, 128
    %v737 = vsel %vm609, %v302, 128
    %v738 = vsel %vm610, %v302, 128
    %v739 = vsel %vm611, %v302, 128
    %v740 = vsel %vm612, %v302, 128
    %v741 = vsel %vm613, %v302, 128
    %v742 = vsel %vm614, %v302, 128
    %v743 = vsel %vm615, %v302, 128
    %v744 = vsel %vm616, %v302, 128
    %v745 = vsel %vm617, %v302, 128
    %v746 = vsel %vm618, %v302, 128
    %v747 = vsel %vm619, %v302, 128
    %v748 = vsel %vm620, %v302, 128
    %v749 = vsel %vm621, %v302, 128
    %v750 = vsel %vm622, %v302, 128
    %v751 = vsel %vm623, %v302, 128
    %v752 = vsel %vm624, %v302, 128
    %v753 = vsel %vm625, %v302, 128
    %v754 = vsel %vm626, %v302, 128
    %v755 = vsel %vm627, %v302, 128
    %v756 = vsel %vm628, %v302, 128
    %v757 = vsel %vm629, %v302, 128
    %v758 = vsel %vm630, %v302, 128
    %v759 = vsel %vm631, %v302, 128
    %v760 = vsel %vm632, %v302, 128
    %v761 = vsel %vm633, %v302, 128
    %v762 = vsel %vm634, %v302, 128
    %v763 = vsel %vm635, %v302, 128
    %v764 = vsel %vm636, %v302, 128
    %v765 = vsel %vm637, %v302, 128
    %v766 = vsel %vm638, %v302, 128
    %v767 = vsel %vm639, %v302, 128
    %v768 = vsel %vm640, %v302, 128
    %v769 = vsel %vm641, %v302, 128
    %v770 = vsel %vm642, %v302, 128
    %v771 = vsel %vm643, %v302, 128
    %v772 = vsel %vm644, %v302, 128
    %v773 = vsel %vm645, %v302, 128
    %v774 = vsel %vm646, %v302, 128
    %v775 = vsel %vm647, %v302, 128
    %v776 = vsel %vm648, %v302, 128
    %v777 = vsel %vm649, %v302, 128
    %v778 = vsel %vm650, %v302, 128
    %v779 = vsel %vm651, %v302, 128
    %v780 = vsel %vm652, %v302, 128
    %v781 = vsel %vm653, %v302, 128
    %v782 = vsel %vm654, %v302, 128
    %v783 = vsel %vm655, %v302, 128
    %v784 = vsel %vm656, %v302, 128
    %v785 = vsel %vm657, %v302, 128
    %v786 = vsel %vm658, %v302, 128
    %v787 = vsel %vm659, %v302, 128
    %v788 = vsel %vm660, %v302, 128
    %v789 = vsel %vm661, %v302, 128
    %v790 = vsel %vm662, %v302, 128
    %v791 = vsel %vm663, %v302, 128
    %v792 = vsel %vm664, %v302, 128
    %v793 = vsel %vm665, %v302, 128
    %v794 = vsel %vm666, %v302, 128
    %v795 = vsel %vm667, %v302, 128
    %v796 = vsel %vm668, %v302, 128
    %v797 = vsel %vm669, %v302, 128
    %v798 = vsel %vm670, %v302, 128
    %v799 = vsel %vm671, %v302, 128
    %v800 = vsel %vm672, %v302, 128
    %v801 = vsel %vm673, %v302, 128
    %v802 = vsel %vm674, %v302, 128
    %v803 = vsel %vm675, %v302, 128
    %v804 = vsel %vm676, %v302, 128
    %v805 = vsel %vm677, %v302, 128
    %v806 = vsel %vm678, %v302, 128
    %v807 = vsel %vm679, %v302, 128
    %v808 = vsel %vm680, %v302, 128
    %v809 = vsel %vm681, %v302, 128
    %v810 = vsel %vm682, %v302, 128
    %v811 = vsel %vm683, %v302, 128
    %v812 = vsel %vm684, %v302, 128
    %v813 = vsel %vm685, %v302, 128
    %v814 = vsel %vm686, %v302, 128
    %v815 = vsel %vm687, %v302, 128
    %v816 = vsel %vm688, %v302, 128
    %v817 = vsel %vm689, %v302, 128
    %v818 = vsel %vm690, %v302, 128
    %v819 = vsel %vm691, %v302, 128
    %v820 = vsel %vm692, %v302, 128
    %v821 = vsel %vm693, %v302, 128
    %v822 = vsel %vm694, %v302, 128
    %v823 = vsel %vm695, %v302, 128
    %v824 = vsel %vm696, %v302, 128
    %v825 = vsel %vm697, %v302, 128
    %v826 = vsel %vm698, %v302, 128
    %v827 = vsel %vm699, %v302, 128
    %v828 = vsel %vm700, %v302, 128
    %v829 = vsel %vm701, %v302, 128
    %v830 = vsel %vm702, %v302, 128
    %v831 = vsel %vm703, %v302, 128
    %v832 = vsel %vm704, %v302, 128
    %v833 = vsel %vm705, %v302, 128
    %v834 = vsel %vm706, %v302, 128
    %v835 = vsel %vm707, %v302, 128
    %v836 = vsel %vm708, %v302, 128
    %v837 = vsel %vm709, %v302, 128
    %v838 = vsel %vm710, %v302, 128
    %v839 = vsel %vm711, %v302, 128
    %v840 = vsel %vm712, %v302, 128
    %v841 = vsel %vm713, %v302, 128
    %v842 = vsel %vm714, %v302, 128
    %v843 = vsel %vm715, %v302, 128
    %v844 = vsel %vm716, %v302, 128
    %v845 = vsel %vm717, %v302, 128
    %v846 = vsel %vm718, %v302, 128
    %v847 = vsel %vm719, %v302, 128
    %v848 = vand.u32 %v720, 65535
    %v849 = vshra.s32 %v720, 16
    %v850 = vcvt.s32.f32 %v848
    %v851 = vcvt.s32.f32 %v849
    %852 = vmin.xlane.f32.xlu0 %v851
    %v853 = vpop.xlane.xlu0 %852
    %vm854 = vcmp.eq.f32.partialorder %v851, %v853
    %v855 = vsel %vm854, %v850, inf
    %856 = vmin.xlane.f32.xlu0 %v855
    %v857 = vpop.xlane.xlu0 %856
    %v858 = vcvt.f32.s32 %v857
    %v859 = vcvt.f32.s32 %v853
    %v860 = vshll.u32 %v859, 16
    %v861 = vadd.s32 %v860, %v858
    %v862 = vand.u32 %v721, 65535
    %v863 = vshra.s32 %v721, 16
    %v864 = vcvt.s32.f32 %v862
    %v865 = vcvt.s32.f32 %v863
    %866 = vmin.xlane.f32.xlu0 %v865
    %v867 = vpop.xlane.xlu0 %866
    %vm868 = vcmp.eq.f32.partialorder %v865, %v867
    %v869 = vsel %vm868, %v864, inf
    %870 = vmin.xlane.f32.xlu0 %v869
    %v871 = vpop.xlane.xlu0 %870
    %v872 = vcvt.f32.s32 %v871
    %v873 = vcvt.f32.s32 %v867
    %v874 = vshll.u32 %v873, 16
    %v875 = vadd.s32 %v874, %v872
    %v876 = vand.u32 %v722, 65535
    %v877 = vshra.s32 %v722, 16
    %v878 = vcvt.s32.f32 %v876
    %v879 = vcvt.s32.f32 %v877
    %880 = vmin.xlane.f32.xlu0 %v879
    %v881 = vpop.xlane.xlu0 %880
    %vm882 = vcmp.eq.f32.partialorder %v879, %v881
    %v883 = vsel %vm882, %v878, inf
    %884 = vmin.xlane.f32.xlu0 %v883
    %v885 = vpop.xlane.xlu0 %884
    %v886 = vcvt.f32.s32 %v885
    %v887 = vcvt.f32.s32 %v881
    %v888 = vshll.u32 %v887, 16
    %v889 = vadd.s32 %v888, %v886
    %v890 = vand.u32 %v723, 65535
    %v891 = vshra.s32 %v723, 16
    %v892 = vcvt.s32.f32 %v890
    %v893 = vcvt.s32.f32 %v891
    %894 = vmin.xlane.f32.xlu0 %v893
    %v895 = vpop.xlane.xlu0 %894
    %vm896 = vcmp.eq.f32.partialorder %v893, %v895
    %v897 = vsel %vm896, %v892, inf
    %898 = vmin.xlane.f32.xlu0 %v897
    %v899 = vpop.xlane.xlu0 %898
    %v900 = vcvt.f32.s32 %v899
    %v901 = vcvt.f32.s32 %v895
    %v902 = vshll.u32 %v901, 16
    %v903 = vadd.s32 %v902, %v900
    %v904 = vand.u32 %v724, 65535
    %v905 = vshra.s32 %v724, 16
    %v906 = vcvt.s32.f32 %v904
    %v907 = vcvt.s32.f32 %v905
    %908 = vmin.xlane.f32.xlu0 %v907
    %v909 = vpop.xlane.xlu0 %908
    %vm910 = vcmp.eq.f32.partialorder %v907, %v909
    %v911 = vsel %vm910, %v906, inf
    %912 = vmin.xlane.f32.xlu0 %v911
    %v913 = vpop.xlane.xlu0 %912
    %v914 = vcvt.f32.s32 %v913
    %v915 = vcvt.f32.s32 %v909
    %v916 = vshll.u32 %v915, 16
    %v917 = vadd.s32 %v916, %v914
    %v918 = vand.u32 %v725, 65535
    %v919 = vshra.s32 %v725, 16
    %v920 = vcvt.s32.f32 %v918
    %v921 = vcvt.s32.f32 %v919
    %922 = vmin.xlane.f32.xlu0 %v921
    %v923 = vpop.xlane.xlu0 %922
    %vm924 = vcmp.eq.f32.partialorder %v921, %v923
    %v925 = vsel %vm924, %v920, inf
    %926 = vmin.xlane.f32.xlu0 %v925
    %v927 = vpop.xlane.xlu0 %926
    %v928 = vcvt.f32.s32 %v927
    %v929 = vcvt.f32.s32 %v923
    %v930 = vshll.u32 %v929, 16
    %v931 = vadd.s32 %v930, %v928
    %v932 = vand.u32 %v726, 65535
    %v933 = vshra.s32 %v726, 16
    %v934 = vcvt.s32.f32 %v932
    %v935 = vcvt.s32.f32 %v933
    %936 = vmin.xlane.f32.xlu0 %v935
    %v937 = vpop.xlane.xlu0 %936
    %vm938 = vcmp.eq.f32.partialorder %v935, %v937
    %v939 = vsel %vm938, %v934, inf
    %940 = vmin.xlane.f32.xlu0 %v939
    %v941 = vpop.xlane.xlu0 %940
    %v942 = vcvt.f32.s32 %v941
    %v943 = vcvt.f32.s32 %v937
    %v944 = vshll.u32 %v943, 16
    %v945 = vadd.s32 %v944, %v942
    %v946 = vand.u32 %v727, 65535
    %v947 = vshra.s32 %v727, 16
    %v948 = vcvt.s32.f32 %v946
    %v949 = vcvt.s32.f32 %v947
    %950 = vmin.xlane.f32.xlu0 %v949
    %v951 = vpop.xlane.xlu0 %950
    %vm952 = vcmp.eq.f32.partialorder %v949, %v951
    %v953 = vsel %vm952, %v948, inf
    %954 = vmin.xlane.f32.xlu0 %v953
    %v955 = vpop.xlane.xlu0 %954
    %v956 = vcvt.f32.s32 %v955
    %v957 = vcvt.f32.s32 %v951
    %v958 = vshll.u32 %v957, 16
    %v959 = vadd.s32 %v958, %v956
    %v960 = vand.u32 %v728, 65535
    %v961 = vshra.s32 %v728, 16
    %v962 = vcvt.s32.f32 %v960
    %v963 = vcvt.s32.f32 %v961
    %964 = vmin.xlane.f32.xlu0 %v963
    %v965 = vpop.xlane.xlu0 %964
    %vm966 = vcmp.eq.f32.partialorder %v963, %v965
    %v967 = vsel %vm966, %v962, inf
    %968 = vmin.xlane.f32.xlu0 %v967
    %v969 = vpop.xlane.xlu0 %968
    %v970 = vcvt.f32.s32 %v969
    %v971 = vcvt.f32.s32 %v965
    %v972 = vshll.u32 %v971, 16
    %v973 = vadd.s32 %v972, %v970
    %v974 = vand.u32 %v729, 65535
    %v975 = vshra.s32 %v729, 16
    %v976 = vcvt.s32.f32 %v974
    %v977 = vcvt.s32.f32 %v975
    %978 = vmin.xlane.f32.xlu0 %v977
    %v979 = vpop.xlane.xlu0 %978
    %vm980 = vcmp.eq.f32.partialorder %v977, %v979
    %v981 = vsel %vm980, %v976, inf
    %982 = vmin.xlane.f32.xlu0 %v981
    %v983 = vpop.xlane.xlu0 %982
    %v984 = vcvt.f32.s32 %v983
    %v985 = vcvt.f32.s32 %v979
    %v986 = vshll.u32 %v985, 16
    %v987 = vadd.s32 %v986, %v984
    %v988 = vand.u32 %v730, 65535
    %v989 = vshra.s32 %v730, 16
    %v990 = vcvt.s32.f32 %v988
    %v991 = vcvt.s32.f32 %v989
    %992 = vmin.xlane.f32.xlu0 %v991
    %v993 = vpop.xlane.xlu0 %992
    %vm994 = vcmp.eq.f32.partialorder %v991, %v993
    %v995 = vsel %vm994, %v990, inf
    %996 = vmin.xlane.f32.xlu0 %v995
    %v997 = vpop.xlane.xlu0 %996
    %v998 = vcvt.f32.s32 %v997
    %v999 = vcvt.f32.s32 %v993
    %v1000 = vshll.u32 %v999, 16
    %v1001 = vadd.s32 %v1000, %v998
    %v1002 = vand.u32 %v731, 65535
    %v1003 = vshra.s32 %v731, 16
    %v1004 = vcvt.s32.f32 %v1002
    %v1005 = vcvt.s32.f32 %v1003
    %1006 = vmin.xlane.f32.xlu0 %v1005
    %v1007 = vpop.xlane.xlu0 %1006
    %vm1008 = vcmp.eq.f32.partialorder %v1005, %v1007
    %v1009 = vsel %vm1008, %v1004, inf
    %1010 = vmin.xlane.f32.xlu0 %v1009
    %v1011 = vpop.xlane.xlu0 %1010
    %v1012 = vcvt.f32.s32 %v1011
    %v1013 = vcvt.f32.s32 %v1007
    %v1014 = vshll.u32 %v1013, 16
    %v1015 = vadd.s32 %v1014, %v1012
    %v1016 = vand.u32 %v732, 65535
    %v1017 = vshra.s32 %v732, 16
    %v1018 = vcvt.s32.f32 %v1016
    %v1019 = vcvt.s32.f32 %v1017
    %1020 = vmin.xlane.f32.xlu0 %v1019
    %v1021 = vpop.xlane.xlu0 %1020
    %vm1022 = vcmp.eq.f32.partialorder %v1019, %v1021
    %v1023 = vsel %vm1022, %v1018, inf
    %1024 = vmin.xlane.f32.xlu0 %v1023
    %v1025 = vpop.xlane.xlu0 %1024
    %v1026 = vcvt.f32.s32 %v1025
    %v1027 = vcvt.f32.s32 %v1021
    %v1028 = vshll.u32 %v1027, 16
    %v1029 = vadd.s32 %v1028, %v1026
    %v1030 = vand.u32 %v733, 65535
    %v1031 = vshra.s32 %v733, 16
    %v1032 = vcvt.s32.f32 %v1030
    %v1033 = vcvt.s32.f32 %v1031
    %1034 = vmin.xlane.f32.xlu0 %v1033
    %v1035 = vpop.xlane.xlu0 %1034
    %vm1036 = vcmp.eq.f32.partialorder %v1033, %v1035
    %v1037 = vsel %vm1036, %v1032, inf
    %1038 = vmin.xlane.f32.xlu0 %v1037
    %v1039 = vpop.xlane.xlu0 %1038
    %v1040 = vcvt.f32.s32 %v1039
    %v1041 = vcvt.f32.s32 %v1035
    %v1042 = vshll.u32 %v1041, 16
    %v1043 = vadd.s32 %v1042, %v1040
    %v1044 = vand.u32 %v734, 65535
    %v1045 = vshra.s32 %v734, 16
    %v1046 = vcvt.s32.f32 %v1044
    %v1047 = vcvt.s32.f32 %v1045
    %1048 = vmin.xlane.f32.xlu0 %v1047
    %v1049 = vpop.xlane.xlu0 %1048
    %vm1050 = vcmp.eq.f32.partialorder %v1047, %v1049
    %v1051 = vsel %vm1050, %v1046, inf
    %1052 = vmin.xlane.f32.xlu0 %v1051
    %v1053 = vpop.xlane.xlu0 %1052
    %v1054 = vcvt.f32.s32 %v1053
    %v1055 = vcvt.f32.s32 %v1049
    %v1056 = vshll.u32 %v1055, 16
    %v1057 = vadd.s32 %v1056, %v1054
    %v1058 = vand.u32 %v735, 65535
    %v1059 = vshra.s32 %v735, 16
    %v1060 = vcvt.s32.f32 %v1058
    %v1061 = vcvt.s32.f32 %v1059
    %1062 = vmin.xlane.f32.xlu0 %v1061
    %v1063 = vpop.xlane.xlu0 %1062
    %vm1064 = vcmp.eq.f32.partialorder %v1061, %v1063
    %v1065 = vsel %vm1064, %v1060, inf
    %1066 = vmin.xlane.f32.xlu0 %v1065
    %v1067 = vpop.xlane.xlu0 %1066
    %v1068 = vcvt.f32.s32 %v1067
    %v1069 = vcvt.f32.s32 %v1063
    %v1070 = vshll.u32 %v1069, 16
    %v1071 = vadd.s32 %v1070, %v1068
    %v1072 = vand.u32 %v736, 65535
    %v1073 = vshra.s32 %v736, 16
    %v1074 = vcvt.s32.f32 %v1072
    %v1075 = vcvt.s32.f32 %v1073
    %1076 = vmin.xlane.f32.xlu0 %v1075
    %v1077 = vpop.xlane.xlu0 %1076
    %vm1078 = vcmp.eq.f32.partialorder %v1075, %v1077
    %v1079 = vsel %vm1078, %v1074, inf
    %1080 = vmin.xlane.f32.xlu0 %v1079
    %v1081 = vpop.xlane.xlu0 %1080
    %v1082 = vcvt.f32.s32 %v1081
    %v1083 = vcvt.f32.s32 %v1077
    %v1084 = vshll.u32 %v1083, 16
    %v1085 = vadd.s32 %v1084, %v1082
    %v1086 = vand.u32 %v737, 65535
    %v1087 = vshra.s32 %v737, 16
    %v1088 = vcvt.s32.f32 %v1086
    %v1089 = vcvt.s32.f32 %v1087
    %1090 = vmin.xlane.f32.xlu0 %v1089
    %v1091 = vpop.xlane.xlu0 %1090
    %vm1092 = vcmp.eq.f32.partialorder %v1089, %v1091
    %v1093 = vsel %vm1092, %v1088, inf
    %1094 = vmin.xlane.f32.xlu0 %v1093
    %v1095 = vpop.xlane.xlu0 %1094
    %v1096 = vcvt.f32.s32 %v1095
    %v1097 = vcvt.f32.s32 %v1091
    %v1098 = vshll.u32 %v1097, 16
    %v1099 = vadd.s32 %v1098, %v1096
    %v1100 = vand.u32 %v738, 65535
    %v1101 = vshra.s32 %v738, 16
    %v1102 = vcvt.s32.f32 %v1100
    %v1103 = vcvt.s32.f32 %v1101
    %1104 = vmin.xlane.f32.xlu0 %v1103
    %v1105 = vpop.xlane.xlu0 %1104
    %vm1106 = vcmp.eq.f32.partialorder %v1103, %v1105
    %v1107 = vsel %vm1106, %v1102, inf
    %1108 = vmin.xlane.f32.xlu0 %v1107
    %v1109 = vpop.xlane.xlu0 %1108
    %v1110 = vcvt.f32.s32 %v1109
    %v1111 = vcvt.f32.s32 %v1105
    %v1112 = vshll.u32 %v1111, 16
    %v1113 = vadd.s32 %v1112, %v1110
    %v1114 = vand.u32 %v739, 65535
    %v1115 = vshra.s32 %v739, 16
    %v1116 = vcvt.s32.f32 %v1114
    %v1117 = vcvt.s32.f32 %v1115
    %1118 = vmin.xlane.f32.xlu0 %v1117
    %v1119 = vpop.xlane.xlu0 %1118
    %vm1120 = vcmp.eq.f32.partialorder %v1117, %v1119
    %v1121 = vsel %vm1120, %v1116, inf
    %1122 = vmin.xlane.f32.xlu0 %v1121
    %v1123 = vpop.xlane.xlu0 %1122
    %v1124 = vcvt.f32.s32 %v1123
    %v1125 = vcvt.f32.s32 %v1119
    %v1126 = vshll.u32 %v1125, 16
    %v1127 = vadd.s32 %v1126, %v1124
    %v1128 = vand.u32 %v740, 65535
    %v1129 = vshra.s32 %v740, 16
    %v1130 = vcvt.s32.f32 %v1128
    %v1131 = vcvt.s32.f32 %v1129
    %1132 = vmin.xlane.f32.xlu0 %v1131
    %v1133 = vpop.xlane.xlu0 %1132
    %vm1134 = vcmp.eq.f32.partialorder %v1131, %v1133
    %v1135 = vsel %vm1134, %v1130, inf
    %1136 = vmin.xlane.f32.xlu0 %v1135
    %v1137 = vpop.xlane.xlu0 %1136
    %v1138 = vcvt.f32.s32 %v1137
    %v1139 = vcvt.f32.s32 %v1133
    %v1140 = vshll.u32 %v1139, 16
    %v1141 = vadd.s32 %v1140, %v1138
    %v1142 = vand.u32 %v741, 65535
    %v1143 = vshra.s32 %v741, 16
    %v1144 = vcvt.s32.f32 %v1142
    %v1145 = vcvt.s32.f32 %v1143
    %1146 = vmin.xlane.f32.xlu0 %v1145
    %v1147 = vpop.xlane.xlu0 %1146
    %vm1148 = vcmp.eq.f32.partialorder %v1145, %v1147
    %v1149 = vsel %vm1148, %v1144, inf
    %1150 = vmin.xlane.f32.xlu0 %v1149
    %v1151 = vpop.xlane.xlu0 %1150
    %v1152 = vcvt.f32.s32 %v1151
    %v1153 = vcvt.f32.s32 %v1147
    %v1154 = vshll.u32 %v1153, 16
    %v1155 = vadd.s32 %v1154, %v1152
    %v1156 = vand.u32 %v742, 65535
    %v1157 = vshra.s32 %v742, 16
    %v1158 = vcvt.s32.f32 %v1156
    %v1159 = vcvt.s32.f32 %v1157
    %1160 = vmin.xlane.f32.xlu0 %v1159
    %v1161 = vpop.xlane.xlu0 %1160
    %vm1162 = vcmp.eq.f32.partialorder %v1159, %v1161
    %v1163 = vsel %vm1162, %v1158, inf
    %1164 = vmin.xlane.f32.xlu0 %v1163
    %v1165 = vpop.xlane.xlu0 %1164
    %v1166 = vcvt.f32.s32 %v1165
    %v1167 = vcvt.f32.s32 %v1161
    %v1168 = vshll.u32 %v1167, 16
    %v1169 = vadd.s32 %v1168, %v1166
    %v1170 = vand.u32 %v743, 65535
    %v1171 = vshra.s32 %v743, 16
    %v1172 = vcvt.s32.f32 %v1170
    %v1173 = vcvt.s32.f32 %v1171
    %1174 = vmin.xlane.f32.xlu0 %v1173
    %v1175 = vpop.xlane.xlu0 %1174
    %vm1176 = vcmp.eq.f32.partialorder %v1173, %v1175
    %v1177 = vsel %vm1176, %v1172, inf
    %1178 = vmin.xlane.f32.xlu0 %v1177
    %v1179 = vpop.xlane.xlu0 %1178
    %v1180 = vcvt.f32.s32 %v1179
    %v1181 = vcvt.f32.s32 %v1175
    %v1182 = vshll.u32 %v1181, 16
    %v1183 = vadd.s32 %v1182, %v1180
    %v1184 = vand.u32 %v744, 65535
    %v1185 = vshra.s32 %v744, 16
    %v1186 = vcvt.s32.f32 %v1184
    %v1187 = vcvt.s32.f32 %v1185
    %1188 = vmin.xlane.f32.xlu0 %v1187
    %v1189 = vpop.xlane.xlu0 %1188
    %vm1190 = vcmp.eq.f32.partialorder %v1187, %v1189
    %v1191 = vsel %vm1190, %v1186, inf
    %1192 = vmin.xlane.f32.xlu0 %v1191
    %v1193 = vpop.xlane.xlu0 %1192
    %v1194 = vcvt.f32.s32 %v1193
    %v1195 = vcvt.f32.s32 %v1189
    %v1196 = vshll.u32 %v1195, 16
    %v1197 = vadd.s32 %v1196, %v1194
    %v1198 = vand.u32 %v745, 65535
    %v1199 = vshra.s32 %v745, 16
    %v1200 = vcvt.s32.f32 %v1198
    %v1201 = vcvt.s32.f32 %v1199
    %1202 = vmin.xlane.f32.xlu0 %v1201
    %v1203 = vpop.xlane.xlu0 %1202
    %vm1204 = vcmp.eq.f32.partialorder %v1201, %v1203
    %v1205 = vsel %vm1204, %v1200, inf
    %1206 = vmin.xlane.f32.xlu0 %v1205
    %v1207 = vpop.xlane.xlu0 %1206
    %v1208 = vcvt.f32.s32 %v1207
    %v1209 = vcvt.f32.s32 %v1203
    %v1210 = vshll.u32 %v1209, 16
    %v1211 = vadd.s32 %v1210, %v1208
    %v1212 = vand.u32 %v746, 65535
    %v1213 = vshra.s32 %v746, 16
    %v1214 = vcvt.s32.f32 %v1212
    %v1215 = vcvt.s32.f32 %v1213
    %1216 = vmin.xlane.f32.xlu0 %v1215
    %v1217 = vpop.xlane.xlu0 %1216
    %vm1218 = vcmp.eq.f32.partialorder %v1215, %v1217
    %v1219 = vsel %vm1218, %v1214, inf
    %1220 = vmin.xlane.f32.xlu0 %v1219
    %v1221 = vpop.xlane.xlu0 %1220
    %v1222 = vcvt.f32.s32 %v1221
    %v1223 = vcvt.f32.s32 %v1217
    %v1224 = vshll.u32 %v1223, 16
    %v1225 = vadd.s32 %v1224, %v1222
    %v1226 = vand.u32 %v747, 65535
    %v1227 = vshra.s32 %v747, 16
    %v1228 = vcvt.s32.f32 %v1226
    %v1229 = vcvt.s32.f32 %v1227
    %1230 = vmin.xlane.f32.xlu0 %v1229
    %v1231 = vpop.xlane.xlu0 %1230
    %vm1232 = vcmp.eq.f32.partialorder %v1229, %v1231
    %v1233 = vsel %vm1232, %v1228, inf
    %1234 = vmin.xlane.f32.xlu0 %v1233
    %v1235 = vpop.xlane.xlu0 %1234
    %v1236 = vcvt.f32.s32 %v1235
    %v1237 = vcvt.f32.s32 %v1231
    %v1238 = vshll.u32 %v1237, 16
    %v1239 = vadd.s32 %v1238, %v1236
    %v1240 = vand.u32 %v748, 65535
    %v1241 = vshra.s32 %v748, 16
    %v1242 = vcvt.s32.f32 %v1240
    %v1243 = vcvt.s32.f32 %v1241
    %1244 = vmin.xlane.f32.xlu0 %v1243
    %v1245 = vpop.xlane.xlu0 %1244
    %vm1246 = vcmp.eq.f32.partialorder %v1243, %v1245
    %v1247 = vsel %vm1246, %v1242, inf
    %1248 = vmin.xlane.f32.xlu0 %v1247
    %v1249 = vpop.xlane.xlu0 %1248
    %v1250 = vcvt.f32.s32 %v1249
    %v1251 = vcvt.f32.s32 %v1245
    %v1252 = vshll.u32 %v1251, 16
    %v1253 = vadd.s32 %v1252, %v1250
    %v1254 = vand.u32 %v749, 65535
    %v1255 = vshra.s32 %v749, 16
    %v1256 = vcvt.s32.f32 %v1254
    %v1257 = vcvt.s32.f32 %v1255
    %1258 = vmin.xlane.f32.xlu0 %v1257
    %v1259 = vpop.xlane.xlu0 %1258
    %vm1260 = vcmp.eq.f32.partialorder %v1257, %v1259
    %v1261 = vsel %vm1260, %v1256, inf
    %1262 = vmin.xlane.f32.xlu0 %v1261
    %v1263 = vpop.xlane.xlu0 %1262
    %v1264 = vcvt.f32.s32 %v1263
    %v1265 = vcvt.f32.s32 %v1259
    %v1266 = vshll.u32 %v1265, 16
    %v1267 = vadd.s32 %v1266, %v1264
    %v1268 = vand.u32 %v750, 65535
    %v1269 = vshra.s32 %v750, 16
    %v1270 = vcvt.s32.f32 %v1268
    %v1271 = vcvt.s32.f32 %v1269
    %1272 = vmin.xlane.f32.xlu0 %v1271
    %v1273 = vpop.xlane.xlu0 %1272
    %vm1274 = vcmp.eq.f32.partialorder %v1271, %v1273
    %v1275 = vsel %vm1274, %v1270, inf
    %1276 = vmin.xlane.f32.xlu0 %v1275
    %v1277 = vpop.xlane.xlu0 %1276
    %v1278 = vcvt.f32.s32 %v1277
    %v1279 = vcvt.f32.s32 %v1273
    %v1280 = vshll.u32 %v1279, 16
    %v1281 = vadd.s32 %v1280, %v1278
    %v1282 = vand.u32 %v751, 65535
    %v1283 = vshra.s32 %v751, 16
    %v1284 = vcvt.s32.f32 %v1282
    %v1285 = vcvt.s32.f32 %v1283
    %1286 = vmin.xlane.f32.xlu0 %v1285
    %v1287 = vpop.xlane.xlu0 %1286
    %vm1288 = vcmp.eq.f32.partialorder %v1285, %v1287
    %v1289 = vsel %vm1288, %v1284, inf
    %1290 = vmin.xlane.f32.xlu0 %v1289
    %v1291 = vpop.xlane.xlu0 %1290
    %v1292 = vcvt.f32.s32 %v1291
    %v1293 = vcvt.f32.s32 %v1287
    %v1294 = vshll.u32 %v1293, 16
    %v1295 = vadd.s32 %v1294, %v1292
    %v1296 = vand.u32 %v752, 65535
    %v1297 = vshra.s32 %v752, 16
    %v1298 = vcvt.s32.f32 %v1296
    %v1299 = vcvt.s32.f32 %v1297
    %1300 = vmin.xlane.f32.xlu0 %v1299
    %v1301 = vpop.xlane.xlu0 %1300
    %vm1302 = vcmp.eq.f32.partialorder %v1299, %v1301
    %v1303 = vsel %vm1302, %v1298, inf
    %1304 = vmin.xlane.f32.xlu0 %v1303
    %v1305 = vpop.xlane.xlu0 %1304
    %v1306 = vcvt.f32.s32 %v1305
    %v1307 = vcvt.f32.s32 %v1301
    %v1308 = vshll.u32 %v1307, 16
    %v1309 = vadd.s32 %v1308, %v1306
    %v1310 = vand.u32 %v753, 65535
    %v1311 = vshra.s32 %v753, 16
    %v1312 = vcvt.s32.f32 %v1310
    %v1313 = vcvt.s32.f32 %v1311
    %1314 = vmin.xlane.f32.xlu0 %v1313
    %v1315 = vpop.xlane.xlu0 %1314
    %vm1316 = vcmp.eq.f32.partialorder %v1313, %v1315
    %v1317 = vsel %vm1316, %v1312, inf
    %1318 = vmin.xlane.f32.xlu0 %v1317
    %v1319 = vpop.xlane.xlu0 %1318
    %v1320 = vcvt.f32.s32 %v1319
    %v1321 = vcvt.f32.s32 %v1315
    %v1322 = vshll.u32 %v1321, 16
    %v1323 = vadd.s32 %v1322, %v1320
    %v1324 = vand.u32 %v754, 65535
    %v1325 = vshra.s32 %v754, 16
    %v1326 = vcvt.s32.f32 %v1324
    %v1327 = vcvt.s32.f32 %v1325
    %1328 = vmin.xlane.f32.xlu0 %v1327
    %v1329 = vpop.xlane.xlu0 %1328
    %vm1330 = vcmp.eq.f32.partialorder %v1327, %v1329
    %v1331 = vsel %vm1330, %v1326, inf
    %1332 = vmin.xlane.f32.xlu0 %v1331
    %v1333 = vpop.xlane.xlu0 %1332
    %v1334 = vcvt.f32.s32 %v1333
    %v1335 = vcvt.f32.s32 %v1329
    %v1336 = vshll.u32 %v1335, 16
    %v1337 = vadd.s32 %v1336, %v1334
    %v1338 = vand.u32 %v755, 65535
    %v1339 = vshra.s32 %v755, 16
    %v1340 = vcvt.s32.f32 %v1338
    %v1341 = vcvt.s32.f32 %v1339
    %1342 = vmin.xlane.f32.xlu0 %v1341
    %v1343 = vpop.xlane.xlu0 %1342
    %vm1344 = vcmp.eq.f32.partialorder %v1341, %v1343
    %v1345 = vsel %vm1344, %v1340, inf
    %1346 = vmin.xlane.f32.xlu0 %v1345
    %v1347 = vpop.xlane.xlu0 %1346
    %v1348 = vcvt.f32.s32 %v1347
    %v1349 = vcvt.f32.s32 %v1343
    %v1350 = vshll.u32 %v1349, 16
    %v1351 = vadd.s32 %v1350, %v1348
    %v1352 = vand.u32 %v756, 65535
    %v1353 = vshra.s32 %v756, 16
    %v1354 = vcvt.s32.f32 %v1352
    %v1355 = vcvt.s32.f32 %v1353
    %1356 = vmin.xlane.f32.xlu0 %v1355
    %v1357 = vpop.xlane.xlu0 %1356
    %vm1358 = vcmp.eq.f32.partialorder %v1355, %v1357
    %v1359 = vsel %vm1358, %v1354, inf
    %1360 = vmin.xlane.f32.xlu0 %v1359
    %v1361 = vpop.xlane.xlu0 %1360
    %v1362 = vcvt.f32.s32 %v1361
    %v1363 = vcvt.f32.s32 %v1357
    %v1364 = vshll.u32 %v1363, 16
    %v1365 = vadd.s32 %v1364, %v1362
    %v1366 = vand.u32 %v757, 65535
    %v1367 = vshra.s32 %v757, 16
    %v1368 = vcvt.s32.f32 %v1366
    %v1369 = vcvt.s32.f32 %v1367
    %1370 = vmin.xlane.f32.xlu0 %v1369
    %v1371 = vpop.xlane.xlu0 %1370
    %vm1372 = vcmp.eq.f32.partialorder %v1369, %v1371
    %v1373 = vsel %vm1372, %v1368, inf
    %1374 = vmin.xlane.f32.xlu0 %v1373
    %v1375 = vpop.xlane.xlu0 %1374
    %v1376 = vcvt.f32.s32 %v1375
    %v1377 = vcvt.f32.s32 %v1371
    %v1378 = vshll.u32 %v1377, 16
    %v1379 = vadd.s32 %v1378, %v1376
    %v1380 = vand.u32 %v758, 65535
    %v1381 = vshra.s32 %v758, 16
    %v1382 = vcvt.s32.f32 %v1380
    %v1383 = vcvt.s32.f32 %v1381
    %1384 = vmin.xlane.f32.xlu0 %v1383
    %v1385 = vpop.xlane.xlu0 %1384
    %vm1386 = vcmp.eq.f32.partialorder %v1383, %v1385
    %v1387 = vsel %vm1386, %v1382, inf
    %1388 = vmin.xlane.f32.xlu0 %v1387
    %v1389 = vpop.xlane.xlu0 %1388
    %v1390 = vcvt.f32.s32 %v1389
    %v1391 = vcvt.f32.s32 %v1385
    %v1392 = vshll.u32 %v1391, 16
    %v1393 = vadd.s32 %v1392, %v1390
    %v1394 = vand.u32 %v759, 65535
    %v1395 = vshra.s32 %v759, 16
    %v1396 = vcvt.s32.f32 %v1394
    %v1397 = vcvt.s32.f32 %v1395
    %1398 = vmin.xlane.f32.xlu0 %v1397
    %v1399 = vpop.xlane.xlu0 %1398
    %vm1400 = vcmp.eq.f32.partialorder %v1397, %v1399
    %v1401 = vsel %vm1400, %v1396, inf
    %1402 = vmin.xlane.f32.xlu0 %v1401
    %v1403 = vpop.xlane.xlu0 %1402
    %v1404 = vcvt.f32.s32 %v1403
    %v1405 = vcvt.f32.s32 %v1399
    %v1406 = vshll.u32 %v1405, 16
    %v1407 = vadd.s32 %v1406, %v1404
    %v1408 = vand.u32 %v760, 65535
    %v1409 = vshra.s32 %v760, 16
    %v1410 = vcvt.s32.f32 %v1408
    %v1411 = vcvt.s32.f32 %v1409
    %1412 = vmin.xlane.f32.xlu0 %v1411
    %v1413 = vpop.xlane.xlu0 %1412
    %vm1414 = vcmp.eq.f32.partialorder %v1411, %v1413
    %v1415 = vsel %vm1414, %v1410, inf
    %1416 = vmin.xlane.f32.xlu0 %v1415
    %v1417 = vpop.xlane.xlu0 %1416
    %v1418 = vcvt.f32.s32 %v1417
    %v1419 = vcvt.f32.s32 %v1413
    %v1420 = vshll.u32 %v1419, 16
    %v1421 = vadd.s32 %v1420, %v1418
    %v1422 = vand.u32 %v761, 65535
    %v1423 = vshra.s32 %v761, 16
    %v1424 = vcvt.s32.f32 %v1422
    %v1425 = vcvt.s32.f32 %v1423
    %1426 = vmin.xlane.f32.xlu0 %v1425
    %v1427 = vpop.xlane.xlu0 %1426
    %vm1428 = vcmp.eq.f32.partialorder %v1425, %v1427
    %v1429 = vsel %vm1428, %v1424, inf
    %1430 = vmin.xlane.f32.xlu0 %v1429
    %v1431 = vpop.xlane.xlu0 %1430
    %v1432 = vcvt.f32.s32 %v1431
    %v1433 = vcvt.f32.s32 %v1427
    %v1434 = vshll.u32 %v1433, 16
    %v1435 = vadd.s32 %v1434, %v1432
    %v1436 = vand.u32 %v762, 65535
    %v1437 = vshra.s32 %v762, 16
    %v1438 = vcvt.s32.f32 %v1436
    %v1439 = vcvt.s32.f32 %v1437
    %1440 = vmin.xlane.f32.xlu0 %v1439
    %v1441 = vpop.xlane.xlu0 %1440
    %vm1442 = vcmp.eq.f32.partialorder %v1439, %v1441
    %v1443 = vsel %vm1442, %v1438, inf
    %1444 = vmin.xlane.f32.xlu0 %v1443
    %v1445 = vpop.xlane.xlu0 %1444
    %v1446 = vcvt.f32.s32 %v1445
    %v1447 = vcvt.f32.s32 %v1441
    %v1448 = vshll.u32 %v1447, 16
    %v1449 = vadd.s32 %v1448, %v1446
    %v1450 = vand.u32 %v763, 65535
    %v1451 = vshra.s32 %v763, 16
    %v1452 = vcvt.s32.f32 %v1450
    %v1453 = vcvt.s32.f32 %v1451
    %1454 = vmin.xlane.f32.xlu0 %v1453
    %v1455 = vpop.xlane.xlu0 %1454
    %vm1456 = vcmp.eq.f32.partialorder %v1453, %v1455
    %v1457 = vsel %vm1456, %v1452, inf
    %1458 = vmin.xlane.f32.xlu0 %v1457
    %v1459 = vpop.xlane.xlu0 %1458
    %v1460 = vcvt.f32.s32 %v1459
    %v1461 = vcvt.f32.s32 %v1455
    %v1462 = vshll.u32 %v1461, 16
    %v1463 = vadd.s32 %v1462, %v1460
    %v1464 = vand.u32 %v764, 65535
    %v1465 = vshra.s32 %v764, 16
    %v1466 = vcvt.s32.f32 %v1464
    %v1467 = vcvt.s32.f32 %v1465
    %1468 = vmin.xlane.f32.xlu0 %v1467
    %v1469 = vpop.xlane.xlu0 %1468
    %vm1470 = vcmp.eq.f32.partialorder %v1467, %v1469
    %v1471 = vsel %vm1470, %v1466, inf
    %1472 = vmin.xlane.f32.xlu0 %v1471
    %v1473 = vpop.xlane.xlu0 %1472
    %v1474 = vcvt.f32.s32 %v1473
    %v1475 = vcvt.f32.s32 %v1469
    %v1476 = vshll.u32 %v1475, 16
    %v1477 = vadd.s32 %v1476, %v1474
    %v1478 = vand.u32 %v765, 65535
    %v1479 = vshra.s32 %v765, 16
    %v1480 = vcvt.s32.f32 %v1478
    %v1481 = vcvt.s32.f32 %v1479
    %1482 = vmin.xlane.f32.xlu0 %v1481
    %v1483 = vpop.xlane.xlu0 %1482
    %vm1484 = vcmp.eq.f32.partialorder %v1481, %v1483
    %v1485 = vsel %vm1484, %v1480, inf
    %1486 = vmin.xlane.f32.xlu0 %v1485
    %v1487 = vpop.xlane.xlu0 %1486
    %v1488 = vcvt.f32.s32 %v1487
    %v1489 = vcvt.f32.s32 %v1483
    %v1490 = vshll.u32 %v1489, 16
    %v1491 = vadd.s32 %v1490, %v1488
    %v1492 = vand.u32 %v766, 65535
    %v1493 = vshra.s32 %v766, 16
    %v1494 = vcvt.s32.f32 %v1492
    %v1495 = vcvt.s32.f32 %v1493
    %1496 = vmin.xlane.f32.xlu0 %v1495
    %v1497 = vpop.xlane.xlu0 %1496
    %vm1498 = vcmp.eq.f32.partialorder %v1495, %v1497
    %v1499 = vsel %vm1498, %v1494, inf
    %1500 = vmin.xlane.f32.xlu0 %v1499
    %v1501 = vpop.xlane.xlu0 %1500
    %v1502 = vcvt.f32.s32 %v1501
    %v1503 = vcvt.f32.s32 %v1497
    %v1504 = vshll.u32 %v1503, 16
    %v1505 = vadd.s32 %v1504, %v1502
    %v1506 = vand.u32 %v767, 65535
    %v1507 = vshra.s32 %v767, 16
    %v1508 = vcvt.s32.f32 %v1506
    %v1509 = vcvt.s32.f32 %v1507
    %1510 = vmin.xlane.f32.xlu0 %v1509
    %v1511 = vpop.xlane.xlu0 %1510
    %vm1512 = vcmp.eq.f32.partialorder %v1509, %v1511
    %v1513 = vsel %vm1512, %v1508, inf
    %1514 = vmin.xlane.f32.xlu0 %v1513
    %v1515 = vpop.xlane.xlu0 %1514
    %v1516 = vcvt.f32.s32 %v1515
    %v1517 = vcvt.f32.s32 %v1511
    %v1518 = vshll.u32 %v1517, 16
    %v1519 = vadd.s32 %v1518, %v1516
    %v1520 = vand.u32 %v768, 65535
    %v1521 = vshra.s32 %v768, 16
    %v1522 = vcvt.s32.f32 %v1520
    %v1523 = vcvt.s32.f32 %v1521
    %1524 = vmin.xlane.f32.xlu0 %v1523
    %v1525 = vpop.xlane.xlu0 %1524
    %vm1526 = vcmp.eq.f32.partialorder %v1523, %v1525
    %v1527 = vsel %vm1526, %v1522, inf
    %1528 = vmin.xlane.f32.xlu0 %v1527
    %v1529 = vpop.xlane.xlu0 %1528
    %v1530 = vcvt.f32.s32 %v1529
    %v1531 = vcvt.f32.s32 %v1525
    %v1532 = vshll.u32 %v1531, 16
    %v1533 = vadd.s32 %v1532, %v1530
    %v1534 = vand.u32 %v769, 65535
    %v1535 = vshra.s32 %v769, 16
    %v1536 = vcvt.s32.f32 %v1534
    %v1537 = vcvt.s32.f32 %v1535
    %1538 = vmin.xlane.f32.xlu0 %v1537
    %v1539 = vpop.xlane.xlu0 %1538
    %vm1540 = vcmp.eq.f32.partialorder %v1537, %v1539
    %v1541 = vsel %vm1540, %v1536, inf
    %1542 = vmin.xlane.f32.xlu0 %v1541
    %v1543 = vpop.xlane.xlu0 %1542
    %v1544 = vcvt.f32.s32 %v1543
    %v1545 = vcvt.f32.s32 %v1539
    %v1546 = vshll.u32 %v1545, 16
    %v1547 = vadd.s32 %v1546, %v1544
    %v1548 = vand.u32 %v770, 65535
    %v1549 = vshra.s32 %v770, 16
    %v1550 = vcvt.s32.f32 %v1548
    %v1551 = vcvt.s32.f32 %v1549
    %1552 = vmin.xlane.f32.xlu0 %v1551
    %v1553 = vpop.xlane.xlu0 %1552
    %vm1554 = vcmp.eq.f32.partialorder %v1551, %v1553
    %v1555 = vsel %vm1554, %v1550, inf
    %1556 = vmin.xlane.f32.xlu0 %v1555
    %v1557 = vpop.xlane.xlu0 %1556
    %v1558 = vcvt.f32.s32 %v1557
    %v1559 = vcvt.f32.s32 %v1553
    %v1560 = vshll.u32 %v1559, 16
    %v1561 = vadd.s32 %v1560, %v1558
    %v1562 = vand.u32 %v771, 65535
    %v1563 = vshra.s32 %v771, 16
    %v1564 = vcvt.s32.f32 %v1562
    %v1565 = vcvt.s32.f32 %v1563
    %1566 = vmin.xlane.f32.xlu0 %v1565
    %v1567 = vpop.xlane.xlu0 %1566
    %vm1568 = vcmp.eq.f32.partialorder %v1565, %v1567
    %v1569 = vsel %vm1568, %v1564, inf
    %1570 = vmin.xlane.f32.xlu0 %v1569
    %v1571 = vpop.xlane.xlu0 %1570
    %v1572 = vcvt.f32.s32 %v1571
    %v1573 = vcvt.f32.s32 %v1567
    %v1574 = vshll.u32 %v1573, 16
    %v1575 = vadd.s32 %v1574, %v1572
    %v1576 = vand.u32 %v772, 65535
    %v1577 = vshra.s32 %v772, 16
    %v1578 = vcvt.s32.f32 %v1576
    %v1579 = vcvt.s32.f32 %v1577
    %1580 = vmin.xlane.f32.xlu0 %v1579
    %v1581 = vpop.xlane.xlu0 %1580
    %vm1582 = vcmp.eq.f32.partialorder %v1579, %v1581
    %v1583 = vsel %vm1582, %v1578, inf
    %1584 = vmin.xlane.f32.xlu0 %v1583
    %v1585 = vpop.xlane.xlu0 %1584
    %v1586 = vcvt.f32.s32 %v1585
    %v1587 = vcvt.f32.s32 %v1581
    %v1588 = vshll.u32 %v1587, 16
    %v1589 = vadd.s32 %v1588, %v1586
    %v1590 = vand.u32 %v773, 65535
    %v1591 = vshra.s32 %v773, 16
    %v1592 = vcvt.s32.f32 %v1590
    %v1593 = vcvt.s32.f32 %v1591
    %1594 = vmin.xlane.f32.xlu0 %v1593
    %v1595 = vpop.xlane.xlu0 %1594
    %vm1596 = vcmp.eq.f32.partialorder %v1593, %v1595
    %v1597 = vsel %vm1596, %v1592, inf
    %1598 = vmin.xlane.f32.xlu0 %v1597
    %v1599 = vpop.xlane.xlu0 %1598
    %v1600 = vcvt.f32.s32 %v1599
    %v1601 = vcvt.f32.s32 %v1595
    %v1602 = vshll.u32 %v1601, 16
    %v1603 = vadd.s32 %v1602, %v1600
    %v1604 = vand.u32 %v774, 65535
    %v1605 = vshra.s32 %v774, 16
    %v1606 = vcvt.s32.f32 %v1604
    %v1607 = vcvt.s32.f32 %v1605
    %1608 = vmin.xlane.f32.xlu0 %v1607
    %v1609 = vpop.xlane.xlu0 %1608
    %vm1610 = vcmp.eq.f32.partialorder %v1607, %v1609
    %v1611 = vsel %vm1610, %v1606, inf
    %1612 = vmin.xlane.f32.xlu0 %v1611
    %v1613 = vpop.xlane.xlu0 %1612
    %v1614 = vcvt.f32.s32 %v1613
    %v1615 = vcvt.f32.s32 %v1609
    %v1616 = vshll.u32 %v1615, 16
    %v1617 = vadd.s32 %v1616, %v1614
    %v1618 = vand.u32 %v775, 65535
    %v1619 = vshra.s32 %v775, 16
    %v1620 = vcvt.s32.f32 %v1618
    %v1621 = vcvt.s32.f32 %v1619
    %1622 = vmin.xlane.f32.xlu0 %v1621
    %v1623 = vpop.xlane.xlu0 %1622
    %vm1624 = vcmp.eq.f32.partialorder %v1621, %v1623
    %v1625 = vsel %vm1624, %v1620, inf
    %1626 = vmin.xlane.f32.xlu0 %v1625
    %v1627 = vpop.xlane.xlu0 %1626
    %v1628 = vcvt.f32.s32 %v1627
    %v1629 = vcvt.f32.s32 %v1623
    %v1630 = vshll.u32 %v1629, 16
    %v1631 = vadd.s32 %v1630, %v1628
    %v1632 = vand.u32 %v776, 65535
    %v1633 = vshra.s32 %v776, 16
    %v1634 = vcvt.s32.f32 %v1632
    %v1635 = vcvt.s32.f32 %v1633
    %1636 = vmin.xlane.f32.xlu0 %v1635
    %v1637 = vpop.xlane.xlu0 %1636
    %vm1638 = vcmp.eq.f32.partialorder %v1635, %v1637
    %v1639 = vsel %vm1638, %v1634, inf
    %1640 = vmin.xlane.f32.xlu0 %v1639
    %v1641 = vpop.xlane.xlu0 %1640
    %v1642 = vcvt.f32.s32 %v1641
    %v1643 = vcvt.f32.s32 %v1637
    %v1644 = vshll.u32 %v1643, 16
    %v1645 = vadd.s32 %v1644, %v1642
    %v1646 = vand.u32 %v777, 65535
    %v1647 = vshra.s32 %v777, 16
    %v1648 = vcvt.s32.f32 %v1646
    %v1649 = vcvt.s32.f32 %v1647
    %1650 = vmin.xlane.f32.xlu0 %v1649
    %v1651 = vpop.xlane.xlu0 %1650
    %vm1652 = vcmp.eq.f32.partialorder %v1649, %v1651
    %v1653 = vsel %vm1652, %v1648, inf
    %1654 = vmin.xlane.f32.xlu0 %v1653
    %v1655 = vpop.xlane.xlu0 %1654
    %v1656 = vcvt.f32.s32 %v1655
    %v1657 = vcvt.f32.s32 %v1651
    %v1658 = vshll.u32 %v1657, 16
    %v1659 = vadd.s32 %v1658, %v1656
    %v1660 = vand.u32 %v778, 65535
    %v1661 = vshra.s32 %v778, 16
    %v1662 = vcvt.s32.f32 %v1660
    %v1663 = vcvt.s32.f32 %v1661
    %1664 = vmin.xlane.f32.xlu0 %v1663
    %v1665 = vpop.xlane.xlu0 %1664
    %vm1666 = vcmp.eq.f32.partialorder %v1663, %v1665
    %v1667 = vsel %vm1666, %v1662, inf
    %1668 = vmin.xlane.f32.xlu0 %v1667
    %v1669 = vpop.xlane.xlu0 %1668
    %v1670 = vcvt.f32.s32 %v1669
    %v1671 = vcvt.f32.s32 %v1665
    %v1672 = vshll.u32 %v1671, 16
    %v1673 = vadd.s32 %v1672, %v1670
    %v1674 = vand.u32 %v779, 65535
    %v1675 = vshra.s32 %v779, 16
    %v1676 = vcvt.s32.f32 %v1674
    %v1677 = vcvt.s32.f32 %v1675
    %1678 = vmin.xlane.f32.xlu0 %v1677
    %v1679 = vpop.xlane.xlu0 %1678
    %vm1680 = vcmp.eq.f32.partialorder %v1677, %v1679
    %v1681 = vsel %vm1680, %v1676, inf
    %1682 = vmin.xlane.f32.xlu0 %v1681
    %v1683 = vpop.xlane.xlu0 %1682
    %v1684 = vcvt.f32.s32 %v1683
    %v1685 = vcvt.f32.s32 %v1679
    %v1686 = vshll.u32 %v1685, 16
    %v1687 = vadd.s32 %v1686, %v1684
    %v1688 = vand.u32 %v780, 65535
    %v1689 = vshra.s32 %v780, 16
    %v1690 = vcvt.s32.f32 %v1688
    %v1691 = vcvt.s32.f32 %v1689
    %1692 = vmin.xlane.f32.xlu0 %v1691
    %v1693 = vpop.xlane.xlu0 %1692
    %vm1694 = vcmp.eq.f32.partialorder %v1691, %v1693
    %v1695 = vsel %vm1694, %v1690, inf
    %1696 = vmin.xlane.f32.xlu0 %v1695
    %v1697 = vpop.xlane.xlu0 %1696
    %v1698 = vcvt.f32.s32 %v1697
    %v1699 = vcvt.f32.s32 %v1693
    %v1700 = vshll.u32 %v1699, 16
    %v1701 = vadd.s32 %v1700, %v1698
    %v1702 = vand.u32 %v781, 65535
    %v1703 = vshra.s32 %v781, 16
    %v1704 = vcvt.s32.f32 %v1702
    %v1705 = vcvt.s32.f32 %v1703
    %1706 = vmin.xlane.f32.xlu0 %v1705
    %v1707 = vpop.xlane.xlu0 %1706
    %vm1708 = vcmp.eq.f32.partialorder %v1705, %v1707
    %v1709 = vsel %vm1708, %v1704, inf
    %1710 = vmin.xlane.f32.xlu0 %v1709
    %v1711 = vpop.xlane.xlu0 %1710
    %v1712 = vcvt.f32.s32 %v1711
    %v1713 = vcvt.f32.s32 %v1707
    %v1714 = vshll.u32 %v1713, 16
    %v1715 = vadd.s32 %v1714, %v1712
    %v1716 = vand.u32 %v782, 65535
    %v1717 = vshra.s32 %v782, 16
    %v1718 = vcvt.s32.f32 %v1716
    %v1719 = vcvt.s32.f32 %v1717
    %1720 = vmin.xlane.f32.xlu0 %v1719
    %v1721 = vpop.xlane.xlu0 %1720
    %vm1722 = vcmp.eq.f32.partialorder %v1719, %v1721
    %v1723 = vsel %vm1722, %v1718, inf
    %1724 = vmin.xlane.f32.xlu0 %v1723
    %v1725 = vpop.xlane.xlu0 %1724
    %v1726 = vcvt.f32.s32 %v1725
    %v1727 = vcvt.f32.s32 %v1721
    %v1728 = vshll.u32 %v1727, 16
    %v1729 = vadd.s32 %v1728, %v1726
    %v1730 = vand.u32 %v783, 65535
    %v1731 = vshra.s32 %v783, 16
    %v1732 = vcvt.s32.f32 %v1730
    %v1733 = vcvt.s32.f32 %v1731
    %1734 = vmin.xlane.f32.xlu0 %v1733
    %v1735 = vpop.xlane.xlu0 %1734
    %vm1736 = vcmp.eq.f32.partialorder %v1733, %v1735
    %v1737 = vsel %vm1736, %v1732, inf
    %1738 = vmin.xlane.f32.xlu0 %v1737
    %v1739 = vpop.xlane.xlu0 %1738
    %v1740 = vcvt.f32.s32 %v1739
    %v1741 = vcvt.f32.s32 %v1735
    %v1742 = vshll.u32 %v1741, 16
    %v1743 = vadd.s32 %v1742, %v1740
    %v1744 = vand.u32 %v784, 65535
    %v1745 = vshra.s32 %v784, 16
    %v1746 = vcvt.s32.f32 %v1744
    %v1747 = vcvt.s32.f32 %v1745
    %1748 = vmin.xlane.f32.xlu0 %v1747
    %v1749 = vpop.xlane.xlu0 %1748
    %vm1750 = vcmp.eq.f32.partialorder %v1747, %v1749
    %v1751 = vsel %vm1750, %v1746, inf
    %1752 = vmin.xlane.f32.xlu0 %v1751
    %v1753 = vpop.xlane.xlu0 %1752
    %v1754 = vcvt.f32.s32 %v1753
    %v1755 = vcvt.f32.s32 %v1749
    %v1756 = vshll.u32 %v1755, 16
    %v1757 = vadd.s32 %v1756, %v1754
    %v1758 = vand.u32 %v785, 65535
    %v1759 = vshra.s32 %v785, 16
    %v1760 = vcvt.s32.f32 %v1758
    %v1761 = vcvt.s32.f32 %v1759
    %1762 = vmin.xlane.f32.xlu0 %v1761
    %v1763 = vpop.xlane.xlu0 %1762
    %vm1764 = vcmp.eq.f32.partialorder %v1761, %v1763
    %v1765 = vsel %vm1764, %v1760, inf
    %1766 = vmin.xlane.f32.xlu0 %v1765
    %v1767 = vpop.xlane.xlu0 %1766
    %v1768 = vcvt.f32.s32 %v1767
    %v1769 = vcvt.f32.s32 %v1763
    %v1770 = vshll.u32 %v1769, 16
    %v1771 = vadd.s32 %v1770, %v1768
    %v1772 = vand.u32 %v786, 65535
    %v1773 = vshra.s32 %v786, 16
    %v1774 = vcvt.s32.f32 %v1772
    %v1775 = vcvt.s32.f32 %v1773
    %1776 = vmin.xlane.f32.xlu0 %v1775
    %v1777 = vpop.xlane.xlu0 %1776
    %vm1778 = vcmp.eq.f32.partialorder %v1775, %v1777
    %v1779 = vsel %vm1778, %v1774, inf
    %1780 = vmin.xlane.f32.xlu0 %v1779
    %v1781 = vpop.xlane.xlu0 %1780
    %v1782 = vcvt.f32.s32 %v1781
    %v1783 = vcvt.f32.s32 %v1777
    %v1784 = vshll.u32 %v1783, 16
    %v1785 = vadd.s32 %v1784, %v1782
    %v1786 = vand.u32 %v787, 65535
    %v1787 = vshra.s32 %v787, 16
    %v1788 = vcvt.s32.f32 %v1786
    %v1789 = vcvt.s32.f32 %v1787
    %1790 = vmin.xlane.f32.xlu0 %v1789
    %v1791 = vpop.xlane.xlu0 %1790
    %vm1792 = vcmp.eq.f32.partialorder %v1789, %v1791
    %v1793 = vsel %vm1792, %v1788, inf
    %1794 = vmin.xlane.f32.xlu0 %v1793
    %v1795 = vpop.xlane.xlu0 %1794
    %v1796 = vcvt.f32.s32 %v1795
    %v1797 = vcvt.f32.s32 %v1791
    %v1798 = vshll.u32 %v1797, 16
    %v1799 = vadd.s32 %v1798, %v1796
    %v1800 = vand.u32 %v788, 65535
    %v1801 = vshra.s32 %v788, 16
    %v1802 = vcvt.s32.f32 %v1800
    %v1803 = vcvt.s32.f32 %v1801
    %1804 = vmin.xlane.f32.xlu0 %v1803
    %v1805 = vpop.xlane.xlu0 %1804
    %vm1806 = vcmp.eq.f32.partialorder %v1803, %v1805
    %v1807 = vsel %vm1806, %v1802, inf
    %1808 = vmin.xlane.f32.xlu0 %v1807
    %v1809 = vpop.xlane.xlu0 %1808
    %v1810 = vcvt.f32.s32 %v1809
    %v1811 = vcvt.f32.s32 %v1805
    %v1812 = vshll.u32 %v1811, 16
    %v1813 = vadd.s32 %v1812, %v1810
    %v1814 = vand.u32 %v789, 65535
    %v1815 = vshra.s32 %v789, 16
    %v1816 = vcvt.s32.f32 %v1814
    %v1817 = vcvt.s32.f32 %v1815
    %1818 = vmin.xlane.f32.xlu0 %v1817
    %v1819 = vpop.xlane.xlu0 %1818
    %vm1820 = vcmp.eq.f32.partialorder %v1817, %v1819
    %v1821 = vsel %vm1820, %v1816, inf
    %1822 = vmin.xlane.f32.xlu0 %v1821
    %v1823 = vpop.xlane.xlu0 %1822
    %v1824 = vcvt.f32.s32 %v1823
    %v1825 = vcvt.f32.s32 %v1819
    %v1826 = vshll.u32 %v1825, 16
    %v1827 = vadd.s32 %v1826, %v1824
    %v1828 = vand.u32 %v790, 65535
    %v1829 = vshra.s32 %v790, 16
    %v1830 = vcvt.s32.f32 %v1828
    %v1831 = vcvt.s32.f32 %v1829
    %1832 = vmin.xlane.f32.xlu0 %v1831
    %v1833 = vpop.xlane.xlu0 %1832
    %vm1834 = vcmp.eq.f32.partialorder %v1831, %v1833
    %v1835 = vsel %vm1834, %v1830, inf
    %1836 = vmin.xlane.f32.xlu0 %v1835
    %v1837 = vpop.xlane.xlu0 %1836
    %v1838 = vcvt.f32.s32 %v1837
    %v1839 = vcvt.f32.s32 %v1833
    %v1840 = vshll.u32 %v1839, 16
    %v1841 = vadd.s32 %v1840, %v1838
    %v1842 = vand.u32 %v791, 65535
    %v1843 = vshra.s32 %v791, 16
    %v1844 = vcvt.s32.f32 %v1842
    %v1845 = vcvt.s32.f32 %v1843
    %1846 = vmin.xlane.f32.xlu0 %v1845
    %v1847 = vpop.xlane.xlu0 %1846
    %vm1848 = vcmp.eq.f32.partialorder %v1845, %v1847
    %v1849 = vsel %vm1848, %v1844, inf
    %1850 = vmin.xlane.f32.xlu0 %v1849
    %v1851 = vpop.xlane.xlu0 %1850
    %v1852 = vcvt.f32.s32 %v1851
    %v1853 = vcvt.f32.s32 %v1847
    %v1854 = vshll.u32 %v1853, 16
    %v1855 = vadd.s32 %v1854, %v1852
    %v1856 = vand.u32 %v792, 65535
    %v1857 = vshra.s32 %v792, 16
    %v1858 = vcvt.s32.f32 %v1856
    %v1859 = vcvt.s32.f32 %v1857
    %1860 = vmin.xlane.f32.xlu0 %v1859
    %v1861 = vpop.xlane.xlu0 %1860
    %vm1862 = vcmp.eq.f32.partialorder %v1859, %v1861
    %v1863 = vsel %vm1862, %v1858, inf
    %1864 = vmin.xlane.f32.xlu0 %v1863
    %v1865 = vpop.xlane.xlu0 %1864
    %v1866 = vcvt.f32.s32 %v1865
    %v1867 = vcvt.f32.s32 %v1861
    %v1868 = vshll.u32 %v1867, 16
    %v1869 = vadd.s32 %v1868, %v1866
    %v1870 = vand.u32 %v793, 65535
    %v1871 = vshra.s32 %v793, 16
    %v1872 = vcvt.s32.f32 %v1870
    %v1873 = vcvt.s32.f32 %v1871
    %1874 = vmin.xlane.f32.xlu0 %v1873
    %v1875 = vpop.xlane.xlu0 %1874
    %vm1876 = vcmp.eq.f32.partialorder %v1873, %v1875
    %v1877 = vsel %vm1876, %v1872, inf
    %1878 = vmin.xlane.f32.xlu0 %v1877
    %v1879 = vpop.xlane.xlu0 %1878
    %v1880 = vcvt.f32.s32 %v1879
    %v1881 = vcvt.f32.s32 %v1875
    %v1882 = vshll.u32 %v1881, 16
    %v1883 = vadd.s32 %v1882, %v1880
    %v1884 = vand.u32 %v794, 65535
    %v1885 = vshra.s32 %v794, 16
    %v1886 = vcvt.s32.f32 %v1884
    %v1887 = vcvt.s32.f32 %v1885
    %1888 = vmin.xlane.f32.xlu0 %v1887
    %v1889 = vpop.xlane.xlu0 %1888
    %vm1890 = vcmp.eq.f32.partialorder %v1887, %v1889
    %v1891 = vsel %vm1890, %v1886, inf
    %1892 = vmin.xlane.f32.xlu0 %v1891
    %v1893 = vpop.xlane.xlu0 %1892
    %v1894 = vcvt.f32.s32 %v1893
    %v1895 = vcvt.f32.s32 %v1889
    %v1896 = vshll.u32 %v1895, 16
    %v1897 = vadd.s32 %v1896, %v1894
    %v1898 = vand.u32 %v795, 65535
    %v1899 = vshra.s32 %v795, 16
    %v1900 = vcvt.s32.f32 %v1898
    %v1901 = vcvt.s32.f32 %v1899
    %1902 = vmin.xlane.f32.xlu0 %v1901
    %v1903 = vpop.xlane.xlu0 %1902
    %vm1904 = vcmp.eq.f32.partialorder %v1901, %v1903
    %v1905 = vsel %vm1904, %v1900, inf
    %1906 = vmin.xlane.f32.xlu0 %v1905
    %v1907 = vpop.xlane.xlu0 %1906
    %v1908 = vcvt.f32.s32 %v1907
    %v1909 = vcvt.f32.s32 %v1903
    %v1910 = vshll.u32 %v1909, 16
    %v1911 = vadd.s32 %v1910, %v1908
    %v1912 = vand.u32 %v796, 65535
    %v1913 = vshra.s32 %v796, 16
    %v1914 = vcvt.s32.f32 %v1912
    %v1915 = vcvt.s32.f32 %v1913
    %1916 = vmin.xlane.f32.xlu0 %v1915
    %v1917 = vpop.xlane.xlu0 %1916
    %vm1918 = vcmp.eq.f32.partialorder %v1915, %v1917
    %v1919 = vsel %vm1918, %v1914, inf
    %1920 = vmin.xlane.f32.xlu0 %v1919
    %v1921 = vpop.xlane.xlu0 %1920
    %v1922 = vcvt.f32.s32 %v1921
    %v1923 = vcvt.f32.s32 %v1917
    %v1924 = vshll.u32 %v1923, 16
    %v1925 = vadd.s32 %v1924, %v1922
    %v1926 = vand.u32 %v797, 65535
    %v1927 = vshra.s32 %v797, 16
    %v1928 = vcvt.s32.f32 %v1926
    %v1929 = vcvt.s32.f32 %v1927
    %1930 = vmin.xlane.f32.xlu0 %v1929
    %v1931 = vpop.xlane.xlu0 %1930
    %vm1932 = vcmp.eq.f32.partialorder %v1929, %v1931
    %v1933 = vsel %vm1932, %v1928, inf
    %1934 = vmin.xlane.f32.xlu0 %v1933
    %v1935 = vpop.xlane.xlu0 %1934
    %v1936 = vcvt.f32.s32 %v1935
    %v1937 = vcvt.f32.s32 %v1931
    %v1938 = vshll.u32 %v1937, 16
    %v1939 = vadd.s32 %v1938, %v1936
    %v1940 = vand.u32 %v798, 65535
    %v1941 = vshra.s32 %v798, 16
    %v1942 = vcvt.s32.f32 %v1940
    %v1943 = vcvt.s32.f32 %v1941
    %1944 = vmin.xlane.f32.xlu0 %v1943
    %v1945 = vpop.xlane.xlu0 %1944
    %vm1946 = vcmp.eq.f32.partialorder %v1943, %v1945
    %v1947 = vsel %vm1946, %v1942, inf
    %1948 = vmin.xlane.f32.xlu0 %v1947
    %v1949 = vpop.xlane.xlu0 %1948
    %v1950 = vcvt.f32.s32 %v1949
    %v1951 = vcvt.f32.s32 %v1945
    %v1952 = vshll.u32 %v1951, 16
    %v1953 = vadd.s32 %v1952, %v1950
    %v1954 = vand.u32 %v799, 65535
    %v1955 = vshra.s32 %v799, 16
    %v1956 = vcvt.s32.f32 %v1954
    %v1957 = vcvt.s32.f32 %v1955
    %1958 = vmin.xlane.f32.xlu0 %v1957
    %v1959 = vpop.xlane.xlu0 %1958
    %vm1960 = vcmp.eq.f32.partialorder %v1957, %v1959
    %v1961 = vsel %vm1960, %v1956, inf
    %1962 = vmin.xlane.f32.xlu0 %v1961
    %v1963 = vpop.xlane.xlu0 %1962
    %v1964 = vcvt.f32.s32 %v1963
    %v1965 = vcvt.f32.s32 %v1959
    %v1966 = vshll.u32 %v1965, 16
    %v1967 = vadd.s32 %v1966, %v1964
    %v1968 = vand.u32 %v800, 65535
    %v1969 = vshra.s32 %v800, 16
    %v1970 = vcvt.s32.f32 %v1968
    %v1971 = vcvt.s32.f32 %v1969
    %1972 = vmin.xlane.f32.xlu0 %v1971
    %v1973 = vpop.xlane.xlu0 %1972
    %vm1974 = vcmp.eq.f32.partialorder %v1971, %v1973
    %v1975 = vsel %vm1974, %v1970, inf
    %1976 = vmin.xlane.f32.xlu0 %v1975
    %v1977 = vpop.xlane.xlu0 %1976
    %v1978 = vcvt.f32.s32 %v1977
    %v1979 = vcvt.f32.s32 %v1973
    %v1980 = vshll.u32 %v1979, 16
    %v1981 = vadd.s32 %v1980, %v1978
    %v1982 = vand.u32 %v801, 65535
    %v1983 = vshra.s32 %v801, 16
    %v1984 = vcvt.s32.f32 %v1982
    %v1985 = vcvt.s32.f32 %v1983
    %1986 = vmin.xlane.f32.xlu0 %v1985
    %v1987 = vpop.xlane.xlu0 %1986
    %vm1988 = vcmp.eq.f32.partialorder %v1985, %v1987
    %v1989 = vsel %vm1988, %v1984, inf
    %1990 = vmin.xlane.f32.xlu0 %v1989
    %v1991 = vpop.xlane.xlu0 %1990
    %v1992 = vcvt.f32.s32 %v1991
    %v1993 = vcvt.f32.s32 %v1987
    %v1994 = vshll.u32 %v1993, 16
    %v1995 = vadd.s32 %v1994, %v1992
    %v1996 = vand.u32 %v802, 65535
    %v1997 = vshra.s32 %v802, 16
    %v1998 = vcvt.s32.f32 %v1996
    %v1999 = vcvt.s32.f32 %v1997
    %2000 = vmin.xlane.f32.xlu0 %v1999
    %v2001 = vpop.xlane.xlu0 %2000
    %vm2002 = vcmp.eq.f32.partialorder %v1999, %v2001
    %v2003 = vsel %vm2002, %v1998, inf
    %2004 = vmin.xlane.f32.xlu0 %v2003
    %v2005 = vpop.xlane.xlu0 %2004
    %v2006 = vcvt.f32.s32 %v2005
    %v2007 = vcvt.f32.s32 %v2001
    %v2008 = vshll.u32 %v2007, 16
    %v2009 = vadd.s32 %v2008, %v2006
    %v2010 = vand.u32 %v803, 65535
    %v2011 = vshra.s32 %v803, 16
    %v2012 = vcvt.s32.f32 %v2010
    %v2013 = vcvt.s32.f32 %v2011
    %2014 = vmin.xlane.f32.xlu0 %v2013
    %v2015 = vpop.xlane.xlu0 %2014
    %vm2016 = vcmp.eq.f32.partialorder %v2013, %v2015
    %v2017 = vsel %vm2016, %v2012, inf
    %2018 = vmin.xlane.f32.xlu0 %v2017
    %v2019 = vpop.xlane.xlu0 %2018
    %v2020 = vcvt.f32.s32 %v2019
    %v2021 = vcvt.f32.s32 %v2015
    %v2022 = vshll.u32 %v2021, 16
    %v2023 = vadd.s32 %v2022, %v2020
    %v2024 = vand.u32 %v804, 65535
    %v2025 = vshra.s32 %v804, 16
    %v2026 = vcvt.s32.f32 %v2024
    %v2027 = vcvt.s32.f32 %v2025
    %2028 = vmin.xlane.f32.xlu0 %v2027
    %v2029 = vpop.xlane.xlu0 %2028
    %vm2030 = vcmp.eq.f32.partialorder %v2027, %v2029
    %v2031 = vsel %vm2030, %v2026, inf
    %2032 = vmin.xlane.f32.xlu0 %v2031
    %v2033 = vpop.xlane.xlu0 %2032
    %v2034 = vcvt.f32.s32 %v2033
    %v2035 = vcvt.f32.s32 %v2029
    %v2036 = vshll.u32 %v2035, 16
    %v2037 = vadd.s32 %v2036, %v2034
    %v2038 = vand.u32 %v805, 65535
    %v2039 = vshra.s32 %v805, 16
    %v2040 = vcvt.s32.f32 %v2038
    %v2041 = vcvt.s32.f32 %v2039
    %2042 = vmin.xlane.f32.xlu0 %v2041
    %v2043 = vpop.xlane.xlu0 %2042
    %vm2044 = vcmp.eq.f32.partialorder %v2041, %v2043
    %v2045 = vsel %vm2044, %v2040, inf
    %2046 = vmin.xlane.f32.xlu0 %v2045
    %v2047 = vpop.xlane.xlu0 %2046
    %v2048 = vcvt.f32.s32 %v2047
    %v2049 = vcvt.f32.s32 %v2043
    %v2050 = vshll.u32 %v2049, 16
    %v2051 = vadd.s32 %v2050, %v2048
    %v2052 = vand.u32 %v806, 65535
    %v2053 = vshra.s32 %v806, 16
    %v2054 = vcvt.s32.f32 %v2052
    %v2055 = vcvt.s32.f32 %v2053
    %2056 = vmin.xlane.f32.xlu0 %v2055
    %v2057 = vpop.xlane.xlu0 %2056
    %vm2058 = vcmp.eq.f32.partialorder %v2055, %v2057
    %v2059 = vsel %vm2058, %v2054, inf
    %2060 = vmin.xlane.f32.xlu0 %v2059
    %v2061 = vpop.xlane.xlu0 %2060
    %v2062 = vcvt.f32.s32 %v2061
    %v2063 = vcvt.f32.s32 %v2057
    %v2064 = vshll.u32 %v2063, 16
    %v2065 = vadd.s32 %v2064, %v2062
    %v2066 = vand.u32 %v807, 65535
    %v2067 = vshra.s32 %v807, 16
    %v2068 = vcvt.s32.f32 %v2066
    %v2069 = vcvt.s32.f32 %v2067
    %2070 = vmin.xlane.f32.xlu0 %v2069
    %v2071 = vpop.xlane.xlu0 %2070
    %vm2072 = vcmp.eq.f32.partialorder %v2069, %v2071
    %v2073 = vsel %vm2072, %v2068, inf
    %2074 = vmin.xlane.f32.xlu0 %v2073
    %v2075 = vpop.xlane.xlu0 %2074
    %v2076 = vcvt.f32.s32 %v2075
    %v2077 = vcvt.f32.s32 %v2071
    %v2078 = vshll.u32 %v2077, 16
    %v2079 = vadd.s32 %v2078, %v2076
    %v2080 = vand.u32 %v808, 65535
    %v2081 = vshra.s32 %v808, 16
    %v2082 = vcvt.s32.f32 %v2080
    %v2083 = vcvt.s32.f32 %v2081
    %2084 = vmin.xlane.f32.xlu0 %v2083
    %v2085 = vpop.xlane.xlu0 %2084
    %vm2086 = vcmp.eq.f32.partialorder %v2083, %v2085
    %v2087 = vsel %vm2086, %v2082, inf
    %2088 = vmin.xlane.f32.xlu0 %v2087
    %v2089 = vpop.xlane.xlu0 %2088
    %v2090 = vcvt.f32.s32 %v2089
    %v2091 = vcvt.f32.s32 %v2085
    %v2092 = vshll.u32 %v2091, 16
    %v2093 = vadd.s32 %v2092, %v2090
    %v2094 = vand.u32 %v809, 65535
    %v2095 = vshra.s32 %v809, 16
    %v2096 = vcvt.s32.f32 %v2094
    %v2097 = vcvt.s32.f32 %v2095
    %2098 = vmin.xlane.f32.xlu0 %v2097
    %v2099 = vpop.xlane.xlu0 %2098
    %vm2100 = vcmp.eq.f32.partialorder %v2097, %v2099
    %v2101 = vsel %vm2100, %v2096, inf
    %2102 = vmin.xlane.f32.xlu0 %v2101
    %v2103 = vpop.xlane.xlu0 %2102
    %v2104 = vcvt.f32.s32 %v2103
    %v2105 = vcvt.f32.s32 %v2099
    %v2106 = vshll.u32 %v2105, 16
    %v2107 = vadd.s32 %v2106, %v2104
    %v2108 = vand.u32 %v810, 65535
    %v2109 = vshra.s32 %v810, 16
    %v2110 = vcvt.s32.f32 %v2108
    %v2111 = vcvt.s32.f32 %v2109
    %2112 = vmin.xlane.f32.xlu0 %v2111
    %v2113 = vpop.xlane.xlu0 %2112
    %vm2114 = vcmp.eq.f32.partialorder %v2111, %v2113
    %v2115 = vsel %vm2114, %v2110, inf
    %2116 = vmin.xlane.f32.xlu0 %v2115
    %v2117 = vpop.xlane.xlu0 %2116
    %v2118 = vcvt.f32.s32 %v2117
    %v2119 = vcvt.f32.s32 %v2113
    %v2120 = vshll.u32 %v2119, 16
    %v2121 = vadd.s32 %v2120, %v2118
    %v2122 = vand.u32 %v811, 65535
    %v2123 = vshra.s32 %v811, 16
    %v2124 = vcvt.s32.f32 %v2122
    %v2125 = vcvt.s32.f32 %v2123
    %2126 = vmin.xlane.f32.xlu0 %v2125
    %v2127 = vpop.xlane.xlu0 %2126
    %vm2128 = vcmp.eq.f32.partialorder %v2125, %v2127
    %v2129 = vsel %vm2128, %v2124, inf
    %2130 = vmin.xlane.f32.xlu0 %v2129
    %v2131 = vpop.xlane.xlu0 %2130
    %v2132 = vcvt.f32.s32 %v2131
    %v2133 = vcvt.f32.s32 %v2127
    %v2134 = vshll.u32 %v2133, 16
    %v2135 = vadd.s32 %v2134, %v2132
    %v2136 = vand.u32 %v812, 65535
    %v2137 = vshra.s32 %v812, 16
    %v2138 = vcvt.s32.f32 %v2136
    %v2139 = vcvt.s32.f32 %v2137
    %2140 = vmin.xlane.f32.xlu0 %v2139
    %v2141 = vpop.xlane.xlu0 %2140
    %vm2142 = vcmp.eq.f32.partialorder %v2139, %v2141
    %v2143 = vsel %vm2142, %v2138, inf
    %2144 = vmin.xlane.f32.xlu0 %v2143
    %v2145 = vpop.xlane.xlu0 %2144
    %v2146 = vcvt.f32.s32 %v2145
    %v2147 = vcvt.f32.s32 %v2141
    %v2148 = vshll.u32 %v2147, 16
    %v2149 = vadd.s32 %v2148, %v2146
    %v2150 = vand.u32 %v813, 65535
    %v2151 = vshra.s32 %v813, 16
    %v2152 = vcvt.s32.f32 %v2150
    %v2153 = vcvt.s32.f32 %v2151
    %2154 = vmin.xlane.f32.xlu0 %v2153
    %v2155 = vpop.xlane.xlu0 %2154
    %vm2156 = vcmp.eq.f32.partialorder %v2153, %v2155
    %v2157 = vsel %vm2156, %v2152, inf
    %2158 = vmin.xlane.f32.xlu0 %v2157
    %v2159 = vpop.xlane.xlu0 %2158
    %v2160 = vcvt.f32.s32 %v2159
    %v2161 = vcvt.f32.s32 %v2155
    %v2162 = vshll.u32 %v2161, 16
    %v2163 = vadd.s32 %v2162, %v2160
    %v2164 = vand.u32 %v814, 65535
    %v2165 = vshra.s32 %v814, 16
    %v2166 = vcvt.s32.f32 %v2164
    %v2167 = vcvt.s32.f32 %v2165
    %2168 = vmin.xlane.f32.xlu0 %v2167
    %v2169 = vpop.xlane.xlu0 %2168
    %vm2170 = vcmp.eq.f32.partialorder %v2167, %v2169
    %v2171 = vsel %vm2170, %v2166, inf
    %2172 = vmin.xlane.f32.xlu0 %v2171
    %v2173 = vpop.xlane.xlu0 %2172
    %v2174 = vcvt.f32.s32 %v2173
    %v2175 = vcvt.f32.s32 %v2169
    %v2176 = vshll.u32 %v2175, 16
    %v2177 = vadd.s32 %v2176, %v2174
    %v2178 = vand.u32 %v815, 65535
    %v2179 = vshra.s32 %v815, 16
    %v2180 = vcvt.s32.f32 %v2178
    %v2181 = vcvt.s32.f32 %v2179
    %2182 = vmin.xlane.f32.xlu0 %v2181
    %v2183 = vpop.xlane.xlu0 %2182
    %vm2184 = vcmp.eq.f32.partialorder %v2181, %v2183
    %v2185 = vsel %vm2184, %v2180, inf
    %2186 = vmin.xlane.f32.xlu0 %v2185
    %v2187 = vpop.xlane.xlu0 %2186
    %v2188 = vcvt.f32.s32 %v2187
    %v2189 = vcvt.f32.s32 %v2183
    %v2190 = vshll.u32 %v2189, 16
    %v2191 = vadd.s32 %v2190, %v2188
    %v2192 = vand.u32 %v816, 65535
    %v2193 = vshra.s32 %v816, 16
    %v2194 = vcvt.s32.f32 %v2192
    %v2195 = vcvt.s32.f32 %v2193
    %2196 = vmin.xlane.f32.xlu0 %v2195
    %v2197 = vpop.xlane.xlu0 %2196
    %vm2198 = vcmp.eq.f32.partialorder %v2195, %v2197
    %v2199 = vsel %vm2198, %v2194, inf
    %2200 = vmin.xlane.f32.xlu0 %v2199
    %v2201 = vpop.xlane.xlu0 %2200
    %v2202 = vcvt.f32.s32 %v2201
    %v2203 = vcvt.f32.s32 %v2197
    %v2204 = vshll.u32 %v2203, 16
    %v2205 = vadd.s32 %v2204, %v2202
    %v2206 = vand.u32 %v817, 65535
    %v2207 = vshra.s32 %v817, 16
    %v2208 = vcvt.s32.f32 %v2206
    %v2209 = vcvt.s32.f32 %v2207
    %2210 = vmin.xlane.f32.xlu0 %v2209
    %v2211 = vpop.xlane.xlu0 %2210
    %vm2212 = vcmp.eq.f32.partialorder %v2209, %v2211
    %v2213 = vsel %vm2212, %v2208, inf
    %2214 = vmin.xlane.f32.xlu0 %v2213
    %v2215 = vpop.xlane.xlu0 %2214
    %v2216 = vcvt.f32.s32 %v2215
    %v2217 = vcvt.f32.s32 %v2211
    %v2218 = vshll.u32 %v2217, 16
    %v2219 = vadd.s32 %v2218, %v2216
    %v2220 = vand.u32 %v818, 65535
    %v2221 = vshra.s32 %v818, 16
    %v2222 = vcvt.s32.f32 %v2220
    %v2223 = vcvt.s32.f32 %v2221
    %2224 = vmin.xlane.f32.xlu0 %v2223
    %v2225 = vpop.xlane.xlu0 %2224
    %vm2226 = vcmp.eq.f32.partialorder %v2223, %v2225
    %v2227 = vsel %vm2226, %v2222, inf
    %2228 = vmin.xlane.f32.xlu0 %v2227
    %v2229 = vpop.xlane.xlu0 %2228
    %v2230 = vcvt.f32.s32 %v2229
    %v2231 = vcvt.f32.s32 %v2225
    %v2232 = vshll.u32 %v2231, 16
    %v2233 = vadd.s32 %v2232, %v2230
    %v2234 = vand.u32 %v819, 65535
    %v2235 = vshra.s32 %v819, 16
    %v2236 = vcvt.s32.f32 %v2234
    %v2237 = vcvt.s32.f32 %v2235
    %2238 = vmin.xlane.f32.xlu0 %v2237
    %v2239 = vpop.xlane.xlu0 %2238
    %vm2240 = vcmp.eq.f32.partialorder %v2237, %v2239
    %v2241 = vsel %vm2240, %v2236, inf
    %2242 = vmin.xlane.f32.xlu0 %v2241
    %v2243 = vpop.xlane.xlu0 %2242
    %v2244 = vcvt.f32.s32 %v2243
    %v2245 = vcvt.f32.s32 %v2239
    %v2246 = vshll.u32 %v2245, 16
    %v2247 = vadd.s32 %v2246, %v2244
    %v2248 = vand.u32 %v820, 65535
    %v2249 = vshra.s32 %v820, 16
    %v2250 = vcvt.s32.f32 %v2248
    %v2251 = vcvt.s32.f32 %v2249
    %2252 = vmin.xlane.f32.xlu0 %v2251
    %v2253 = vpop.xlane.xlu0 %2252
    %vm2254 = vcmp.eq.f32.partialorder %v2251, %v2253
    %v2255 = vsel %vm2254, %v2250, inf
    %2256 = vmin.xlane.f32.xlu0 %v2255
    %v2257 = vpop.xlane.xlu0 %2256
    %v2258 = vcvt.f32.s32 %v2257
    %v2259 = vcvt.f32.s32 %v2253
    %v2260 = vshll.u32 %v2259, 16
    %v2261 = vadd.s32 %v2260, %v2258
    %v2262 = vand.u32 %v821, 65535
    %v2263 = vshra.s32 %v821, 16
    %v2264 = vcvt.s32.f32 %v2262
    %v2265 = vcvt.s32.f32 %v2263
    %2266 = vmin.xlane.f32.xlu0 %v2265
    %v2267 = vpop.xlane.xlu0 %2266
    %vm2268 = vcmp.eq.f32.partialorder %v2265, %v2267
    %v2269 = vsel %vm2268, %v2264, inf
    %2270 = vmin.xlane.f32.xlu0 %v2269
    %v2271 = vpop.xlane.xlu0 %2270
    %v2272 = vcvt.f32.s32 %v2271
    %v2273 = vcvt.f32.s32 %v2267
    %v2274 = vshll.u32 %v2273, 16
    %v2275 = vadd.s32 %v2274, %v2272
    %v2276 = vand.u32 %v822, 65535
    %v2277 = vshra.s32 %v822, 16
    %v2278 = vcvt.s32.f32 %v2276
    %v2279 = vcvt.s32.f32 %v2277
    %2280 = vmin.xlane.f32.xlu0 %v2279
    %v2281 = vpop.xlane.xlu0 %2280
    %vm2282 = vcmp.eq.f32.partialorder %v2279, %v2281
    %v2283 = vsel %vm2282, %v2278, inf
    %2284 = vmin.xlane.f32.xlu0 %v2283
    %v2285 = vpop.xlane.xlu0 %2284
    %v2286 = vcvt.f32.s32 %v2285
    %v2287 = vcvt.f32.s32 %v2281
    %v2288 = vshll.u32 %v2287, 16
    %v2289 = vadd.s32 %v2288, %v2286
    %v2290 = vand.u32 %v823, 65535
    %v2291 = vshra.s32 %v823, 16
    %v2292 = vcvt.s32.f32 %v2290
    %v2293 = vcvt.s32.f32 %v2291
    %2294 = vmin.xlane.f32.xlu0 %v2293
    %v2295 = vpop.xlane.xlu0 %2294
    %vm2296 = vcmp.eq.f32.partialorder %v2293, %v2295
    %v2297 = vsel %vm2296, %v2292, inf
    %2298 = vmin.xlane.f32.xlu0 %v2297
    %v2299 = vpop.xlane.xlu0 %2298
    %v2300 = vcvt.f32.s32 %v2299
    %v2301 = vcvt.f32.s32 %v2295
    %v2302 = vshll.u32 %v2301, 16
    %v2303 = vadd.s32 %v2302, %v2300
    %v2304 = vand.u32 %v824, 65535
    %v2305 = vshra.s32 %v824, 16
    %v2306 = vcvt.s32.f32 %v2304
    %v2307 = vcvt.s32.f32 %v2305
    %2308 = vmin.xlane.f32.xlu0 %v2307
    %v2309 = vpop.xlane.xlu0 %2308
    %vm2310 = vcmp.eq.f32.partialorder %v2307, %v2309
    %v2311 = vsel %vm2310, %v2306, inf
    %2312 = vmin.xlane.f32.xlu0 %v2311
    %v2313 = vpop.xlane.xlu0 %2312
    %v2314 = vcvt.f32.s32 %v2313
    %v2315 = vcvt.f32.s32 %v2309
    %v2316 = vshll.u32 %v2315, 16
    %v2317 = vadd.s32 %v2316, %v2314
    %v2318 = vand.u32 %v825, 65535
    %v2319 = vshra.s32 %v825, 16
    %v2320 = vcvt.s32.f32 %v2318
    %v2321 = vcvt.s32.f32 %v2319
    %2322 = vmin.xlane.f32.xlu0 %v2321
    %v2323 = vpop.xlane.xlu0 %2322
    %vm2324 = vcmp.eq.f32.partialorder %v2321, %v2323
    %v2325 = vsel %vm2324, %v2320, inf
    %2326 = vmin.xlane.f32.xlu0 %v2325
    %v2327 = vpop.xlane.xlu0 %2326
    %v2328 = vcvt.f32.s32 %v2327
    %v2329 = vcvt.f32.s32 %v2323
    %v2330 = vshll.u32 %v2329, 16
    %v2331 = vadd.s32 %v2330, %v2328
    %v2332 = vand.u32 %v826, 65535
    %v2333 = vshra.s32 %v826, 16
    %v2334 = vcvt.s32.f32 %v2332
    %v2335 = vcvt.s32.f32 %v2333
    %2336 = vmin.xlane.f32.xlu0 %v2335
    %v2337 = vpop.xlane.xlu0 %2336
    %vm2338 = vcmp.eq.f32.partialorder %v2335, %v2337
    %v2339 = vsel %vm2338, %v2334, inf
    %2340 = vmin.xlane.f32.xlu0 %v2339
    %v2341 = vpop.xlane.xlu0 %2340
    %v2342 = vcvt.f32.s32 %v2341
    %v2343 = vcvt.f32.s32 %v2337
    %v2344 = vshll.u32 %v2343, 16
    %v2345 = vadd.s32 %v2344, %v2342
    %v2346 = vand.u32 %v827, 65535
    %v2347 = vshra.s32 %v827, 16
    %v2348 = vcvt.s32.f32 %v2346
    %v2349 = vcvt.s32.f32 %v2347
    %2350 = vmin.xlane.f32.xlu0 %v2349
    %v2351 = vpop.xlane.xlu0 %2350
    %vm2352 = vcmp.eq.f32.partialorder %v2349, %v2351
    %v2353 = vsel %vm2352, %v2348, inf
    %2354 = vmin.xlane.f32.xlu0 %v2353
    %v2355 = vpop.xlane.xlu0 %2354
    %v2356 = vcvt.f32.s32 %v2355
    %v2357 = vcvt.f32.s32 %v2351
    %v2358 = vshll.u32 %v2357, 16
    %v2359 = vadd.s32 %v2358, %v2356
    %v2360 = vand.u32 %v828, 65535
    %v2361 = vshra.s32 %v828, 16
    %v2362 = vcvt.s32.f32 %v2360
    %v2363 = vcvt.s32.f32 %v2361
    %2364 = vmin.xlane.f32.xlu0 %v2363
    %v2365 = vpop.xlane.xlu0 %2364
    %vm2366 = vcmp.eq.f32.partialorder %v2363, %v2365
    %v2367 = vsel %vm2366, %v2362, inf
    %2368 = vmin.xlane.f32.xlu0 %v2367
    %v2369 = vpop.xlane.xlu0 %2368
    %v2370 = vcvt.f32.s32 %v2369
    %v2371 = vcvt.f32.s32 %v2365
    %v2372 = vshll.u32 %v2371, 16
    %v2373 = vadd.s32 %v2372, %v2370
    %v2374 = vand.u32 %v829, 65535
    %v2375 = vshra.s32 %v829, 16
    %v2376 = vcvt.s32.f32 %v2374
    %v2377 = vcvt.s32.f32 %v2375
    %2378 = vmin.xlane.f32.xlu0 %v2377
    %v2379 = vpop.xlane.xlu0 %2378
    %vm2380 = vcmp.eq.f32.partialorder %v2377, %v2379
    %v2381 = vsel %vm2380, %v2376, inf
    %2382 = vmin.xlane.f32.xlu0 %v2381
    %v2383 = vpop.xlane.xlu0 %2382
    %v2384 = vcvt.f32.s32 %v2383
    %v2385 = vcvt.f32.s32 %v2379
    %v2386 = vshll.u32 %v2385, 16
    %v2387 = vadd.s32 %v2386, %v2384
    %v2388 = vand.u32 %v830, 65535
    %v2389 = vshra.s32 %v830, 16
    %v2390 = vcvt.s32.f32 %v2388
    %v2391 = vcvt.s32.f32 %v2389
    %2392 = vmin.xlane.f32.xlu0 %v2391
    %v2393 = vpop.xlane.xlu0 %2392
    %vm2394 = vcmp.eq.f32.partialorder %v2391, %v2393
    %v2395 = vsel %vm2394, %v2390, inf
    %2396 = vmin.xlane.f32.xlu0 %v2395
    %v2397 = vpop.xlane.xlu0 %2396
    %v2398 = vcvt.f32.s32 %v2397
    %v2399 = vcvt.f32.s32 %v2393
    %v2400 = vshll.u32 %v2399, 16
    %v2401 = vadd.s32 %v2400, %v2398
    %v2402 = vand.u32 %v831, 65535
    %v2403 = vshra.s32 %v831, 16
    %v2404 = vcvt.s32.f32 %v2402
    %v2405 = vcvt.s32.f32 %v2403
    %2406 = vmin.xlane.f32.xlu0 %v2405
    %v2407 = vpop.xlane.xlu0 %2406
    %vm2408 = vcmp.eq.f32.partialorder %v2405, %v2407
    %v2409 = vsel %vm2408, %v2404, inf
    %2410 = vmin.xlane.f32.xlu0 %v2409
    %v2411 = vpop.xlane.xlu0 %2410
    %v2412 = vcvt.f32.s32 %v2411
    %v2413 = vcvt.f32.s32 %v2407
    %v2414 = vshll.u32 %v2413, 16
    %v2415 = vadd.s32 %v2414, %v2412
    %v2416 = vand.u32 %v832, 65535
    %v2417 = vshra.s32 %v832, 16
    %v2418 = vcvt.s32.f32 %v2416
    %v2419 = vcvt.s32.f32 %v2417
    %2420 = vmin.xlane.f32.xlu0 %v2419
    %v2421 = vpop.xlane.xlu0 %2420
    %vm2422 = vcmp.eq.f32.partialorder %v2419, %v2421
    %v2423 = vsel %vm2422, %v2418, inf
    %2424 = vmin.xlane.f32.xlu0 %v2423
    %v2425 = vpop.xlane.xlu0 %2424
    %v2426 = vcvt.f32.s32 %v2425
    %v2427 = vcvt.f32.s32 %v2421
    %v2428 = vshll.u32 %v2427, 16
    %v2429 = vadd.s32 %v2428, %v2426
    %v2430 = vand.u32 %v833, 65535
    %v2431 = vshra.s32 %v833, 16
    %v2432 = vcvt.s32.f32 %v2430
    %v2433 = vcvt.s32.f32 %v2431
    %2434 = vmin.xlane.f32.xlu0 %v2433
    %v2435 = vpop.xlane.xlu0 %2434
    %vm2436 = vcmp.eq.f32.partialorder %v2433, %v2435
    %v2437 = vsel %vm2436, %v2432, inf
    %2438 = vmin.xlane.f32.xlu0 %v2437
    %v2439 = vpop.xlane.xlu0 %2438
    %v2440 = vcvt.f32.s32 %v2439
    %v2441 = vcvt.f32.s32 %v2435
    %v2442 = vshll.u32 %v2441, 16
    %v2443 = vadd.s32 %v2442, %v2440
    %v2444 = vand.u32 %v834, 65535
    %v2445 = vshra.s32 %v834, 16
    %v2446 = vcvt.s32.f32 %v2444
    %v2447 = vcvt.s32.f32 %v2445
    %2448 = vmin.xlane.f32.xlu0 %v2447
    %v2449 = vpop.xlane.xlu0 %2448
    %vm2450 = vcmp.eq.f32.partialorder %v2447, %v2449
    %v2451 = vsel %vm2450, %v2446, inf
    %2452 = vmin.xlane.f32.xlu0 %v2451
    %v2453 = vpop.xlane.xlu0 %2452
    %v2454 = vcvt.f32.s32 %v2453
    %v2455 = vcvt.f32.s32 %v2449
    %v2456 = vshll.u32 %v2455, 16
    %v2457 = vadd.s32 %v2456, %v2454
    %v2458 = vand.u32 %v835, 65535
    %v2459 = vshra.s32 %v835, 16
    %v2460 = vcvt.s32.f32 %v2458
    %v2461 = vcvt.s32.f32 %v2459
    %2462 = vmin.xlane.f32.xlu0 %v2461
    %v2463 = vpop.xlane.xlu0 %2462
    %vm2464 = vcmp.eq.f32.partialorder %v2461, %v2463
    %v2465 = vsel %vm2464, %v2460, inf
    %2466 = vmin.xlane.f32.xlu0 %v2465
    %v2467 = vpop.xlane.xlu0 %2466
    %v2468 = vcvt.f32.s32 %v2467
    %v2469 = vcvt.f32.s32 %v2463
    %v2470 = vshll.u32 %v2469, 16
    %v2471 = vadd.s32 %v2470, %v2468
    %v2472 = vand.u32 %v836, 65535
    %v2473 = vshra.s32 %v836, 16
    %v2474 = vcvt.s32.f32 %v2472
    %v2475 = vcvt.s32.f32 %v2473
    %2476 = vmin.xlane.f32.xlu0 %v2475
    %v2477 = vpop.xlane.xlu0 %2476
    %vm2478 = vcmp.eq.f32.partialorder %v2475, %v2477
    %v2479 = vsel %vm2478, %v2474, inf
    %2480 = vmin.xlane.f32.xlu0 %v2479
    %v2481 = vpop.xlane.xlu0 %2480
    %v2482 = vcvt.f32.s32 %v2481
    %v2483 = vcvt.f32.s32 %v2477
    %v2484 = vshll.u32 %v2483, 16
    %v2485 = vadd.s32 %v2484, %v2482
    %v2486 = vand.u32 %v837, 65535
    %v2487 = vshra.s32 %v837, 16
    %v2488 = vcvt.s32.f32 %v2486
    %v2489 = vcvt.s32.f32 %v2487
    %2490 = vmin.xlane.f32.xlu0 %v2489
    %v2491 = vpop.xlane.xlu0 %2490
    %vm2492 = vcmp.eq.f32.partialorder %v2489, %v2491
    %v2493 = vsel %vm2492, %v2488, inf
    %2494 = vmin.xlane.f32.xlu0 %v2493
    %v2495 = vpop.xlane.xlu0 %2494
    %v2496 = vcvt.f32.s32 %v2495
    %v2497 = vcvt.f32.s32 %v2491
    %v2498 = vshll.u32 %v2497, 16
    %v2499 = vadd.s32 %v2498, %v2496
    %v2500 = vand.u32 %v838, 65535
    %v2501 = vshra.s32 %v838, 16
    %v2502 = vcvt.s32.f32 %v2500
    %v2503 = vcvt.s32.f32 %v2501
    %2504 = vmin.xlane.f32.xlu0 %v2503
    %v2505 = vpop.xlane.xlu0 %2504
    %vm2506 = vcmp.eq.f32.partialorder %v2503, %v2505
    %v2507 = vsel %vm2506, %v2502, inf
    %2508 = vmin.xlane.f32.xlu0 %v2507
    %v2509 = vpop.xlane.xlu0 %2508
    %v2510 = vcvt.f32.s32 %v2509
    %v2511 = vcvt.f32.s32 %v2505
    %v2512 = vshll.u32 %v2511, 16
    %v2513 = vadd.s32 %v2512, %v2510
    %v2514 = vand.u32 %v839, 65535
    %v2515 = vshra.s32 %v839, 16
    %v2516 = vcvt.s32.f32 %v2514
    %v2517 = vcvt.s32.f32 %v2515
    %2518 = vmin.xlane.f32.xlu0 %v2517
    %v2519 = vpop.xlane.xlu0 %2518
    %vm2520 = vcmp.eq.f32.partialorder %v2517, %v2519
    %v2521 = vsel %vm2520, %v2516, inf
    %2522 = vmin.xlane.f32.xlu0 %v2521
    %v2523 = vpop.xlane.xlu0 %2522
    %v2524 = vcvt.f32.s32 %v2523
    %v2525 = vcvt.f32.s32 %v2519
    %v2526 = vshll.u32 %v2525, 16
    %v2527 = vadd.s32 %v2526, %v2524
    %v2528 = vand.u32 %v840, 65535
    %v2529 = vshra.s32 %v840, 16
    %v2530 = vcvt.s32.f32 %v2528
    %v2531 = vcvt.s32.f32 %v2529
    %2532 = vmin.xlane.f32.xlu0 %v2531
    %v2533 = vpop.xlane.xlu0 %2532
    %vm2534 = vcmp.eq.f32.partialorder %v2531, %v2533
    %v2535 = vsel %vm2534, %v2530, inf
    %2536 = vmin.xlane.f32.xlu0 %v2535
    %v2537 = vpop.xlane.xlu0 %2536
    %v2538 = vcvt.f32.s32 %v2537
    %v2539 = vcvt.f32.s32 %v2533
    %v2540 = vshll.u32 %v2539, 16
    %v2541 = vadd.s32 %v2540, %v2538
    %v2542 = vand.u32 %v841, 65535
    %v2543 = vshra.s32 %v841, 16
    %v2544 = vcvt.s32.f32 %v2542
    %v2545 = vcvt.s32.f32 %v2543
    %2546 = vmin.xlane.f32.xlu0 %v2545
    %v2547 = vpop.xlane.xlu0 %2546
    %vm2548 = vcmp.eq.f32.partialorder %v2545, %v2547
    %v2549 = vsel %vm2548, %v2544, inf
    %2550 = vmin.xlane.f32.xlu0 %v2549
    %v2551 = vpop.xlane.xlu0 %2550
    %v2552 = vcvt.f32.s32 %v2551
    %v2553 = vcvt.f32.s32 %v2547
    %v2554 = vshll.u32 %v2553, 16
    %v2555 = vadd.s32 %v2554, %v2552
    %v2556 = vand.u32 %v842, 65535
    %v2557 = vshra.s32 %v842, 16
    %v2558 = vcvt.s32.f32 %v2556
    %v2559 = vcvt.s32.f32 %v2557
    %2560 = vmin.xlane.f32.xlu0 %v2559
    %v2561 = vpop.xlane.xlu0 %2560
    %vm2562 = vcmp.eq.f32.partialorder %v2559, %v2561
    %v2563 = vsel %vm2562, %v2558, inf
    %2564 = vmin.xlane.f32.xlu0 %v2563
    %v2565 = vpop.xlane.xlu0 %2564
    %v2566 = vcvt.f32.s32 %v2565
    %v2567 = vcvt.f32.s32 %v2561
    %v2568 = vshll.u32 %v2567, 16
    %v2569 = vadd.s32 %v2568, %v2566
    %v2570 = vand.u32 %v843, 65535
    %v2571 = vshra.s32 %v843, 16
    %v2572 = vcvt.s32.f32 %v2570
    %v2573 = vcvt.s32.f32 %v2571
    %2574 = vmin.xlane.f32.xlu0 %v2573
    %v2575 = vpop.xlane.xlu0 %2574
    %vm2576 = vcmp.eq.f32.partialorder %v2573, %v2575
    %v2577 = vsel %vm2576, %v2572, inf
    %2578 = vmin.xlane.f32.xlu0 %v2577
    %v2579 = vpop.xlane.xlu0 %2578
    %v2580 = vcvt.f32.s32 %v2579
    %v2581 = vcvt.f32.s32 %v2575
    %v2582 = vshll.u32 %v2581, 16
    %v2583 = vadd.s32 %v2582, %v2580
    %v2584 = vand.u32 %v844, 65535
    %v2585 = vshra.s32 %v844, 16
    %v2586 = vcvt.s32.f32 %v2584
    %v2587 = vcvt.s32.f32 %v2585
    %2588 = vmin.xlane.f32.xlu0 %v2587
    %v2589 = vpop.xlane.xlu0 %2588
    %vm2590 = vcmp.eq.f32.partialorder %v2587, %v2589
    %v2591 = vsel %vm2590, %v2586, inf
    %2592 = vmin.xlane.f32.xlu0 %v2591
    %v2593 = vpop.xlane.xlu0 %2592
    %v2594 = vcvt.f32.s32 %v2593
    %v2595 = vcvt.f32.s32 %v2589
    %v2596 = vshll.u32 %v2595, 16
    %v2597 = vadd.s32 %v2596, %v2594
    %v2598 = vand.u32 %v845, 65535
    %v2599 = vshra.s32 %v845, 16
    %v2600 = vcvt.s32.f32 %v2598
    %v2601 = vcvt.s32.f32 %v2599
    %2602 = vmin.xlane.f32.xlu0 %v2601
    %v2603 = vpop.xlane.xlu0 %2602
    %vm2604 = vcmp.eq.f32.partialorder %v2601, %v2603
    %v2605 = vsel %vm2604, %v2600, inf
    %2606 = vmin.xlane.f32.xlu0 %v2605
    %v2607 = vpop.xlane.xlu0 %2606
    %v2608 = vcvt.f32.s32 %v2607
    %v2609 = vcvt.f32.s32 %v2603
    %v2610 = vshll.u32 %v2609, 16
    %v2611 = vadd.s32 %v2610, %v2608
    %v2612 = vand.u32 %v846, 65535
    %v2613 = vshra.s32 %v846, 16
    %v2614 = vcvt.s32.f32 %v2612
    %v2615 = vcvt.s32.f32 %v2613
    %2616 = vmin.xlane.f32.xlu0 %v2615
    %v2617 = vpop.xlane.xlu0 %2616
    %vm2618 = vcmp.eq.f32.partialorder %v2615, %v2617
    %v2619 = vsel %vm2618, %v2614, inf
    %2620 = vmin.xlane.f32.xlu0 %v2619
    %v2621 = vpop.xlane.xlu0 %2620
    %v2622 = vcvt.f32.s32 %v2621
    %v2623 = vcvt.f32.s32 %v2617
    %v2624 = vshll.u32 %v2623, 16
    %v2625 = vadd.s32 %v2624, %v2622
    %v2626 = vand.u32 %v847, 65535
    %v2627 = vshra.s32 %v847, 16
    %v2628 = vcvt.s32.f32 %v2626
    %v2629 = vcvt.s32.f32 %v2627
    %2630 = vmin.xlane.f32.xlu0 %v2629
    %v2631 = vpop.xlane.xlu0 %2630
    %vm2632 = vcmp.eq.f32.partialorder %v2629, %v2631
    %v2633 = vsel %vm2632, %v2628, inf
    %2634 = vmin.xlane.f32.xlu0 %v2633
    %v2635 = vpop.xlane.xlu0 %2634
    %v2636 = vcvt.f32.s32 %v2635
    %v2637 = vcvt.f32.s32 %v2631
    %v2638 = vshll.u32 %v2637, 16
    %v2639 = vadd.s32 %v2638, %v2636
    %v2640 = vcvt.s32.f32 %v861
    %v2641 = vcvt.s32.f32 %v875
    %v2642 = vcvt.s32.f32 %v889
    %v2643 = vcvt.s32.f32 %v903
    %v2644 = vcvt.s32.f32 %v917
    %v2645 = vcvt.s32.f32 %v931
    %v2646 = vcvt.s32.f32 %v945
    %v2647 = vcvt.s32.f32 %v959
    %v2648 = vcvt.s32.f32 %v973
    %v2649 = vcvt.s32.f32 %v987
    %v2650 = vcvt.s32.f32 %v1001
    %v2651 = vcvt.s32.f32 %v1015
    %v2652 = vcvt.s32.f32 %v1029
    %v2653 = vcvt.s32.f32 %v1043
    %v2654 = vcvt.s32.f32 %v1057
    %v2655 = vcvt.s32.f32 %v1071
    %v2656 = vcvt.s32.f32 %v1085
    %v2657 = vcvt.s32.f32 %v1099
    %v2658 = vcvt.s32.f32 %v1113
    %v2659 = vcvt.s32.f32 %v1127
    %v2660 = vcvt.s32.f32 %v1141
    %v2661 = vcvt.s32.f32 %v1155
    %v2662 = vcvt.s32.f32 %v1169
    %v2663 = vcvt.s32.f32 %v1183
    %v2664 = vcvt.s32.f32 %v1197
    %v2665 = vcvt.s32.f32 %v1211
    %v2666 = vcvt.s32.f32 %v1225
    %v2667 = vcvt.s32.f32 %v1239
    %v2668 = vcvt.s32.f32 %v1253
    %v2669 = vcvt.s32.f32 %v1267
    %v2670 = vcvt.s32.f32 %v1281
    %v2671 = vcvt.s32.f32 %v1295
    %v2672 = vcvt.s32.f32 %v1309
    %v2673 = vcvt.s32.f32 %v1323
    %v2674 = vcvt.s32.f32 %v1337
    %v2675 = vcvt.s32.f32 %v1351
    %v2676 = vcvt.s32.f32 %v1365
    %v2677 = vcvt.s32.f32 %v1379
    %v2678 = vcvt.s32.f32 %v1393
    %v2679 = vcvt.s32.f32 %v1407
    %v2680 = vcvt.s32.f32 %v1421
    %v2681 = vcvt.s32.f32 %v1435
    %v2682 = vcvt.s32.f32 %v1449
    %v2683 = vcvt.s32.f32 %v1463
    %v2684 = vcvt.s32.f32 %v1477
    %v2685 = vcvt.s32.f32 %v1491
    %v2686 = vcvt.s32.f32 %v1505
    %v2687 = vcvt.s32.f32 %v1519
    %v2688 = vcvt.s32.f32 %v1533
    %v2689 = vcvt.s32.f32 %v1547
    %v2690 = vcvt.s32.f32 %v1561
    %v2691 = vcvt.s32.f32 %v1575
    %v2692 = vcvt.s32.f32 %v1589
    %v2693 = vcvt.s32.f32 %v1603
    %v2694 = vcvt.s32.f32 %v1617
    %v2695 = vcvt.s32.f32 %v1631
    %v2696 = vcvt.s32.f32 %v1645
    %v2697 = vcvt.s32.f32 %v1659
    %v2698 = vcvt.s32.f32 %v1673
    %v2699 = vcvt.s32.f32 %v1687
    %v2700 = vcvt.s32.f32 %v1701
    %v2701 = vcvt.s32.f32 %v1715
    %v2702 = vcvt.s32.f32 %v1729
    %v2703 = vcvt.s32.f32 %v1743
    %v2704 = vcvt.s32.f32 %v1757
    %v2705 = vcvt.s32.f32 %v1771
    %v2706 = vcvt.s32.f32 %v1785
    %v2707 = vcvt.s32.f32 %v1799
    %v2708 = vcvt.s32.f32 %v1813
    %v2709 = vcvt.s32.f32 %v1827
    %v2710 = vcvt.s32.f32 %v1841
    %v2711 = vcvt.s32.f32 %v1855
    %v2712 = vcvt.s32.f32 %v1869
    %v2713 = vcvt.s32.f32 %v1883
    %v2714 = vcvt.s32.f32 %v1897
    %v2715 = vcvt.s32.f32 %v1911
    %v2716 = vcvt.s32.f32 %v1925
    %v2717 = vcvt.s32.f32 %v1939
    %v2718 = vcvt.s32.f32 %v1953
    %v2719 = vcvt.s32.f32 %v1967
    %v2720 = vcvt.s32.f32 %v1981
    %v2721 = vcvt.s32.f32 %v1995
    %v2722 = vcvt.s32.f32 %v2009
    %v2723 = vcvt.s32.f32 %v2023
    %v2724 = vcvt.s32.f32 %v2037
    %v2725 = vcvt.s32.f32 %v2051
    %v2726 = vcvt.s32.f32 %v2065
    %v2727 = vcvt.s32.f32 %v2079
    %v2728 = vcvt.s32.f32 %v2093
    %v2729 = vcvt.s32.f32 %v2107
    %v2730 = vcvt.s32.f32 %v2121
    %v2731 = vcvt.s32.f32 %v2135
    %v2732 = vcvt.s32.f32 %v2149
    %v2733 = vcvt.s32.f32 %v2163
    %v2734 = vcvt.s32.f32 %v2177
    %v2735 = vcvt.s32.f32 %v2191
    %v2736 = vcvt.s32.f32 %v2205
    %v2737 = vcvt.s32.f32 %v2219
    %v2738 = vcvt.s32.f32 %v2233
    %v2739 = vcvt.s32.f32 %v2247
    %v2740 = vcvt.s32.f32 %v2261
    %v2741 = vcvt.s32.f32 %v2275
    %v2742 = vcvt.s32.f32 %v2289
    %v2743 = vcvt.s32.f32 %v2303
    %v2744 = vcvt.s32.f32 %v2317
    %v2745 = vcvt.s32.f32 %v2331
    %v2746 = vcvt.s32.f32 %v2345
    %v2747 = vcvt.s32.f32 %v2359
    %v2748 = vcvt.s32.f32 %v2373
    %v2749 = vcvt.s32.f32 %v2387
    %v2750 = vcvt.s32.f32 %v2401
    %v2751 = vcvt.s32.f32 %v2415
    %v2752 = vcvt.s32.f32 %v2429
    %v2753 = vcvt.s32.f32 %v2443
    %v2754 = vcvt.s32.f32 %v2457
    %v2755 = vcvt.s32.f32 %v2471
    %v2756 = vcvt.s32.f32 %v2485
    %v2757 = vcvt.s32.f32 %v2499
    %v2758 = vcvt.s32.f32 %v2513
    %v2759 = vcvt.s32.f32 %v2527
    %v2760 = vcvt.s32.f32 %v2541
    %v2761 = vcvt.s32.f32 %v2555
    %v2762 = vcvt.s32.f32 %v2569
    %v2763 = vcvt.s32.f32 %v2583
    %v2764 = vcvt.s32.f32 %v2597
    %v2765 = vcvt.s32.f32 %v2611
    %v2766 = vcvt.s32.f32 %v2625
    %v2767 = vcvt.s32.f32 %v2639
    %vm2768 = vcmp.eq.s32.totalorder %v304, %v302
    %vm2769 = vcmp.eq.s32.totalorder %v305, %v302
    %vm2770 = vcmp.eq.s32.totalorder %v306, %v302
    %vm2771 = vcmp.eq.s32.totalorder %v307, %v302
    %vm2772 = vcmp.eq.s32.totalorder %v308, %v302
    %vm2773 = vcmp.eq.s32.totalorder %v309, %v302
    %vm2774 = vcmp.eq.s32.totalorder %v310, %v302
    %vm2775 = vcmp.eq.s32.totalorder %v311, %v302
    %vm2776 = vcmp.eq.s32.totalorder %v312, %v302
    %vm2777 = vcmp.eq.s32.totalorder %v313, %v302
    %vm2778 = vcmp.eq.s32.totalorder %v314, %v302
    %vm2779 = vcmp.eq.s32.totalorder %v315, %v302
    %vm2780 = vcmp.eq.s32.totalorder %v316, %v302
    %vm2781 = vcmp.eq.s32.totalorder %v317, %v302
    %vm2782 = vcmp.eq.s32.totalorder %v318, %v302
    %vm2783 = vcmp.eq.s32.totalorder %v319, %v302
    %v2784 = vsel %vm2768, %v2640, 0.0
    %v2785 = vsel %vm2769, %v2641, 0.0
    %v2786 = vsel %vm2770, %v2642, 0.0
    %v2787 = vsel %vm2771, %v2643, 0.0
    %v2788 = vsel %vm2772, %v2644, 0.0
    %v2789 = vsel %vm2773, %v2645, 0.0
    %v2790 = vsel %vm2774, %v2646, 0.0
    %v2791 = vsel %vm2775, %v2647, 0.0
    %v2792 = vsel %vm2776, %v2648, 0.0
    %v2793 = vsel %vm2777, %v2649, 0.0
    %v2794 = vsel %vm2778, %v2650, 0.0
    %v2795 = vsel %vm2779, %v2651, 0.0
    %v2796 = vsel %vm2780, %v2652, 0.0
    %v2797 = vsel %vm2781, %v2653, 0.0
    %v2798 = vsel %vm2782, %v2654, 0.0
    %v2799 = vsel %vm2783, %v2655, 0.0
    %v2800 = vsel %vm2768, %v2656, 0.0
    %v2801 = vsel %vm2769, %v2657, 0.0
    %v2802 = vsel %vm2770, %v2658, 0.0
    %v2803 = vsel %vm2771, %v2659, 0.0
    %v2804 = vsel %vm2772, %v2660, 0.0
    %v2805 = vsel %vm2773, %v2661, 0.0
    %v2806 = vsel %vm2774, %v2662, 0.0
    %v2807 = vsel %vm2775, %v2663, 0.0
    %v2808 = vsel %vm2776, %v2664, 0.0
    %v2809 = vsel %vm2777, %v2665, 0.0
    %v2810 = vsel %vm2778, %v2666, 0.0
    %v2811 = vsel %vm2779, %v2667, 0.0
    %v2812 = vsel %vm2780, %v2668, 0.0
    %v2813 = vsel %vm2781, %v2669, 0.0
    %v2814 = vsel %vm2782, %v2670, 0.0
    %v2815 = vsel %vm2783, %v2671, 0.0
    %v2816 = vsel %vm2768, %v2672, 0.0
    %v2817 = vsel %vm2769, %v2673, 0.0
    %v2818 = vsel %vm2770, %v2674, 0.0
    %v2819 = vsel %vm2771, %v2675, 0.0
    %v2820 = vsel %vm2772, %v2676, 0.0
    %v2821 = vsel %vm2773, %v2677, 0.0
    %v2822 = vsel %vm2774, %v2678, 0.0
    %v2823 = vsel %vm2775, %v2679, 0.0
    %v2824 = vsel %vm2776, %v2680, 0.0
    %v2825 = vsel %vm2777, %v2681, 0.0
    %v2826 = vsel %vm2778, %v2682, 0.0
    %v2827 = vsel %vm2779, %v2683, 0.0
    %v2828 = vsel %vm2780, %v2684, 0.0
    %v2829 = vsel %vm2781, %v2685, 0.0
    %v2830 = vsel %vm2782, %v2686, 0.0
    %v2831 = vsel %vm2783, %v2687, 0.0
    %v2832 = vsel %vm2768, %v2688, 0.0
    %v2833 = vsel %vm2769, %v2689, 0.0
    %v2834 = vsel %vm2770, %v2690, 0.0
    %v2835 = vsel %vm2771, %v2691, 0.0
    %v2836 = vsel %vm2772, %v2692, 0.0
    %v2837 = vsel %vm2773, %v2693, 0.0
    %v2838 = vsel %vm2774, %v2694, 0.0
    %v2839 = vsel %vm2775, %v2695, 0.0
    %v2840 = vsel %vm2776, %v2696, 0.0
    %v2841 = vsel %vm2777, %v2697, 0.0
    %v2842 = vsel %vm2778, %v2698, 0.0
    %v2843 = vsel %vm2779, %v2699, 0.0
    %v2844 = vsel %vm2780, %v2700, 0.0
    %v2845 = vsel %vm2781, %v2701, 0.0
    %v2846 = vsel %vm2782, %v2702, 0.0
    %v2847 = vsel %vm2783, %v2703, 0.0
    %v2848 = vsel %vm2768, %v2704, 0.0
    %v2849 = vsel %vm2769, %v2705, 0.0
    %v2850 = vsel %vm2770, %v2706, 0.0
    %v2851 = vsel %vm2771, %v2707, 0.0
    %v2852 = vsel %vm2772, %v2708, 0.0
    %v2853 = vsel %vm2773, %v2709, 0.0
    %v2854 = vsel %vm2774, %v2710, 0.0
    %v2855 = vsel %vm2775, %v2711, 0.0
    %v2856 = vsel %vm2776, %v2712, 0.0
    %v2857 = vsel %vm2777, %v2713, 0.0
    %v2858 = vsel %vm2778, %v2714, 0.0
    %v2859 = vsel %vm2779, %v2715, 0.0
    %v2860 = vsel %vm2780, %v2716, 0.0
    %v2861 = vsel %vm2781, %v2717, 0.0
    %v2862 = vsel %vm2782, %v2718, 0.0
    %v2863 = vsel %vm2783, %v2719, 0.0
    %v2864 = vsel %vm2768, %v2720, 0.0
    %v2865 = vsel %vm2769, %v2721, 0.0
    %v2866 = vsel %vm2770, %v2722, 0.0
    %v2867 = vsel %vm2771, %v2723, 0.0
    %v2868 = vsel %vm2772, %v2724, 0.0
    %v2869 = vsel %vm2773, %v2725, 0.0
    %v2870 = vsel %vm2774, %v2726, 0.0
    %v2871 = vsel %vm2775, %v2727, 0.0
    %v2872 = vsel %vm2776, %v2728, 0.0
    %v2873 = vsel %vm2777, %v2729, 0.0
    %v2874 = vsel %vm2778, %v2730, 0.0
    %v2875 = vsel %vm2779, %v2731, 0.0
    %v2876 = vsel %vm2780, %v2732, 0.0
    %v2877 = vsel %vm2781, %v2733, 0.0
    %v2878 = vsel %vm2782, %v2734, 0.0
    %v2879 = vsel %vm2783, %v2735, 0.0
    %v2880 = vsel %vm2768, %v2736, 0.0
    %v2881 = vsel %vm2769, %v2737, 0.0
    %v2882 = vsel %vm2770, %v2738, 0.0
    %v2883 = vsel %vm2771, %v2739, 0.0
    %v2884 = vsel %vm2772, %v2740, 0.0
    %v2885 = vsel %vm2773, %v2741, 0.0
    %v2886 = vsel %vm2774, %v2742, 0.0
    %v2887 = vsel %vm2775, %v2743, 0.0
    %v2888 = vsel %vm2776, %v2744, 0.0
    %v2889 = vsel %vm2777, %v2745, 0.0
    %v2890 = vsel %vm2778, %v2746, 0.0
    %v2891 = vsel %vm2779, %v2747, 0.0
    %v2892 = vsel %vm2780, %v2748, 0.0
    %v2893 = vsel %vm2781, %v2749, 0.0
    %v2894 = vsel %vm2782, %v2750, 0.0
    %v2895 = vsel %vm2783, %v2751, 0.0
    %v2896 = vsel %vm2768, %v2752, 0.0
    %v2897 = vsel %vm2769, %v2753, 0.0
    %v2898 = vsel %vm2770, %v2754, 0.0
    %v2899 = vsel %vm2771, %v2755, 0.0
    %v2900 = vsel %vm2772, %v2756, 0.0
    %v2901 = vsel %vm2773, %v2757, 0.0
    %v2902 = vsel %vm2774, %v2758, 0.0
    %v2903 = vsel %vm2775, %v2759, 0.0
    %v2904 = vsel %vm2776, %v2760, 0.0
    %v2905 = vsel %vm2777, %v2761, 0.0
    %v2906 = vsel %vm2778, %v2762, 0.0
    %v2907 = vsel %vm2779, %v2763, 0.0
    %v2908 = vsel %vm2780, %v2764, 0.0
    %v2909 = vsel %vm2781, %v2765, 0.0
    %v2910 = vsel %vm2782, %v2766, 0.0
    %v2911 = vsel %vm2783, %v2767, 0.0
    %v2912 = vadd.f32 %v2784, %v2785
    %v2913 = vadd.f32 %v2912, %v2786
    %v2914 = vadd.f32 %v2913, %v2787
    %v2915 = vadd.f32 %v2914, %v2788
    %v2916 = vadd.f32 %v2915, %v2789
    %v2917 = vadd.f32 %v2916, %v2790
    %v2918 = vadd.f32 %v2917, %v2791
    %v2919 = vadd.f32 %v2918, %v2792
    %v2920 = vadd.f32 %v2919, %v2793
    %v2921 = vadd.f32 %v2920, %v2794
    %v2922 = vadd.f32 %v2921, %v2795
    %v2923 = vadd.f32 %v2922, %v2796
    %v2924 = vadd.f32 %v2923, %v2797
    %v2925 = vadd.f32 %v2924, %v2798
    %v2926 = vadd.f32 %v2925, %v2799
    %v2927 = vrot.slane %v2926, 4
    %v2928 = vadd.f32 %v2926, %v2927
    %v2929 = vrot.slane %v2928, 2
    %v2930 = vadd.f32 %v2928, %v2929
    %v2931 = vrot.slane %v2930, 1
    %v2932 = vadd.f32 %v2930, %v2931
    %v2933 = vadd.f32 %v2800, %v2801
    %v2934 = vadd.f32 %v2933, %v2802
    %v2935 = vadd.f32 %v2934, %v2803
    %v2936 = vadd.f32 %v2935, %v2804
    %v2937 = vadd.f32 %v2936, %v2805
    %v2938 = vadd.f32 %v2937, %v2806
    %v2939 = vadd.f32 %v2938, %v2807
    %v2940 = vadd.f32 %v2939, %v2808
    %v2941 = vadd.f32 %v2940, %v2809
    %v2942 = vadd.f32 %v2941, %v2810
    %v2943 = vadd.f32 %v2942, %v2811
    %v2944 = vadd.f32 %v2943, %v2812
    %v2945 = vadd.f32 %v2944, %v2813
    %v2946 = vadd.f32 %v2945, %v2814
    %v2947 = vadd.f32 %v2946, %v2815
    %v2948 = vrot.slane %v2947, 4
    %v2949 = vadd.f32 %v2947, %v2948
    %v2950 = vrot.slane %v2949, 2
    %v2951 = vadd.f32 %v2949, %v2950
    %v2952 = vrot.slane %v2951, 1
    %v2953 = vadd.f32 %v2951, %v2952
    %v2954 = vadd.f32 %v2816, %v2817
    %v2955 = vadd.f32 %v2954, %v2818
    %v2956 = vadd.f32 %v2955, %v2819
    %v2957 = vadd.f32 %v2956, %v2820
    %v2958 = vadd.f32 %v2957, %v2821
    %v2959 = vadd.f32 %v2958, %v2822
    %v2960 = vadd.f32 %v2959, %v2823
    %v2961 = vadd.f32 %v2960, %v2824
    %v2962 = vadd.f32 %v2961, %v2825
    %v2963 = vadd.f32 %v2962, %v2826
    %v2964 = vadd.f32 %v2963, %v2827
    %v2965 = vadd.f32 %v2964, %v2828
    %v2966 = vadd.f32 %v2965, %v2829
    %v2967 = vadd.f32 %v2966, %v2830
    %v2968 = vadd.f32 %v2967, %v2831
    %v2969 = vrot.slane %v2968, 4
    %v2970 = vadd.f32 %v2968, %v2969
    %v2971 = vrot.slane %v2970, 2
    %v2972 = vadd.f32 %v2970, %v2971
    %v2973 = vrot.slane %v2972, 1
    %v2974 = vadd.f32 %v2972, %v2973
    %v2975 = vadd.f32 %v2832, %v2833
    %v2976 = vadd.f32 %v2975, %v2834
    %v2977 = vadd.f32 %v2976, %v2835
    %v2978 = vadd.f32 %v2977, %v2836
    %v2979 = vadd.f32 %v2978, %v2837
    %v2980 = vadd.f32 %v2979, %v2838
    %v2981 = vadd.f32 %v2980, %v2839
    %v2982 = vadd.f32 %v2981, %v2840
    %v2983 = vadd.f32 %v2982, %v2841
    %v2984 = vadd.f32 %v2983, %v2842
    %v2985 = vadd.f32 %v2984, %v2843
    %v2986 = vadd.f32 %v2985, %v2844
    %v2987 = vadd.f32 %v2986, %v2845
    %v2988 = vadd.f32 %v2987, %v2846
    %v2989 = vadd.f32 %v2988, %v2847
    %v2990 = vrot.slane %v2989, 4
    %v2991 = vadd.f32 %v2989, %v2990
    %v2992 = vrot.slane %v2991, 2
    %v2993 = vadd.f32 %v2991, %v2992
    %v2994 = vrot.slane %v2993, 1
    %v2995 = vadd.f32 %v2993, %v2994
    %v2996 = vadd.f32 %v2848, %v2849
    %v2997 = vadd.f32 %v2996, %v2850
    %v2998 = vadd.f32 %v2997, %v2851
    %v2999 = vadd.f32 %v2998, %v2852
    %v3000 = vadd.f32 %v2999, %v2853
    %v3001 = vadd.f32 %v3000, %v2854
    %v3002 = vadd.f32 %v3001, %v2855
    %v3003 = vadd.f32 %v3002, %v2856
    %v3004 = vadd.f32 %v3003, %v2857
    %v3005 = vadd.f32 %v3004, %v2858
    %v3006 = vadd.f32 %v3005, %v2859
    %v3007 = vadd.f32 %v3006, %v2860
    %v3008 = vadd.f32 %v3007, %v2861
    %v3009 = vadd.f32 %v3008, %v2862
    %v3010 = vadd.f32 %v3009, %v2863
    %v3011 = vrot.slane %v3010, 4
    %v3012 = vadd.f32 %v3010, %v3011
    %v3013 = vrot.slane %v3012, 2
    %v3014 = vadd.f32 %v3012, %v3013
    %v3015 = vrot.slane %v3014, 1
    %v3016 = vadd.f32 %v3014, %v3015
    %v3017 = vadd.f32 %v2864, %v2865
    %v3018 = vadd.f32 %v3017, %v2866
    %v3019 = vadd.f32 %v3018, %v2867
    %v3020 = vadd.f32 %v3019, %v2868
    %v3021 = vadd.f32 %v3020, %v2869
    %v3022 = vadd.f32 %v3021, %v2870
    %v3023 = vadd.f32 %v3022, %v2871
    %v3024 = vadd.f32 %v3023, %v2872
    %v3025 = vadd.f32 %v3024, %v2873
    %v3026 = vadd.f32 %v3025, %v2874
    %v3027 = vadd.f32 %v3026, %v2875
    %v3028 = vadd.f32 %v3027, %v2876
    %v3029 = vadd.f32 %v3028, %v2877
    %v3030 = vadd.f32 %v3029, %v2878
    %v3031 = vadd.f32 %v3030, %v2879
    %v3032 = vrot.slane %v3031, 4
    %v3033 = vadd.f32 %v3031, %v3032
    %v3034 = vrot.slane %v3033, 2
    %v3035 = vadd.f32 %v3033, %v3034
    %v3036 = vrot.slane %v3035, 1
    %v3037 = vadd.f32 %v3035, %v3036
    %v3038 = vadd.f32 %v2880, %v2881
    %v3039 = vadd.f32 %v3038, %v2882
    %v3040 = vadd.f32 %v3039, %v2883
    %v3041 = vadd.f32 %v3040, %v2884
    %v3042 = vadd.f32 %v3041, %v2885
    %v3043 = vadd.f32 %v3042, %v2886
    %v3044 = vadd.f32 %v3043, %v2887
    %v3045 = vadd.f32 %v3044, %v2888
    %v3046 = vadd.f32 %v3045, %v2889
    %v3047 = vadd.f32 %v3046, %v2890
    %v3048 = vadd.f32 %v3047, %v2891
    %v3049 = vadd.f32 %v3048, %v2892
    %v3050 = vadd.f32 %v3049, %v2893
    %v3051 = vadd.f32 %v3050, %v2894
    %v3052 = vadd.f32 %v3051, %v2895
    %v3053 = vrot.slane %v3052, 4
    %v3054 = vadd.f32 %v3052, %v3053
    %v3055 = vrot.slane %v3054, 2
    %v3056 = vadd.f32 %v3054, %v3055
    %v3057 = vrot.slane %v3056, 1
    %v3058 = vadd.f32 %v3056, %v3057
    %v3059 = vadd.f32 %v2896, %v2897
    %v3060 = vadd.f32 %v3059, %v2898
    %v3061 = vadd.f32 %v3060, %v2899
    %v3062 = vadd.f32 %v3061, %v2900
    %v3063 = vadd.f32 %v3062, %v2901
    %v3064 = vadd.f32 %v3063, %v2902
    %v3065 = vadd.f32 %v3064, %v2903
    %v3066 = vadd.f32 %v3065, %v2904
    %v3067 = vadd.f32 %v3066, %v2905
    %v3068 = vadd.f32 %v3067, %v2906
    %v3069 = vadd.f32 %v3068, %v2907
    %v3070 = vadd.f32 %v3069, %v2908
    %v3071 = vadd.f32 %v3070, %v2909
    %v3072 = vadd.f32 %v3071, %v2910
    %v3073 = vadd.f32 %v3072, %v2911
    %v3074 = vrot.slane %v3073, 4
    %v3075 = vadd.f32 %v3073, %v3074
    %v3076 = vrot.slane %v3075, 2
    %v3077 = vadd.f32 %v3075, %v3076
    %v3078 = vrot.slane %v3077, 1
    %v3079 = vadd.f32 %v3077, %v3078
    %v3080 = vmax.f32 %v45, %v46
    %v3081 = vmax.f32 %v3080, %v47
    %v3082 = vmax.f32 %v3081, %v48
    %v3083 = vmax.f32 %v3082, %v49
    %v3084 = vmax.f32 %v3083, %v50
    %v3085 = vmax.f32 %v3084, %v51
    %v3086 = vmax.f32 %v3085, %v52
    %v3087 = vmax.f32 %v3086, %v53
    %v3088 = vmax.f32 %v3087, %v54
    %v3089 = vmax.f32 %v3088, %v55
    %v3090 = vmax.f32 %v3089, %v56
    %v3091 = vmax.f32 %v3090, %v57
    %v3092 = vmax.f32 %v3091, %v58
    %v3093 = vmax.f32 %v3092, %v59
    %v3094 = vmax.f32 %v3093, %v60
    %v3095 = vrot.slane %v3094, 4
    %v3096 = vmax.f32 %v3094, %v3095
    %v3097 = vrot.slane %v3096, 2
    %v3098 = vmax.f32 %v3096, %v3097
    %v3099 = vrot.slane %v3098, 1
    %v3100 = vmax.f32 %v3098, %v3099
    %v3101 = vmax.f32 %v61, %v62
    %v3102 = vmax.f32 %v3101, %v63
    %v3103 = vmax.f32 %v3102, %v64
    %v3104 = vmax.f32 %v3103, %v65
    %v3105 = vmax.f32 %v3104, %v66
    %v3106 = vmax.f32 %v3105, %v67
    %v3107 = vmax.f32 %v3106, %v68
    %v3108 = vmax.f32 %v3107, %v69
    %v3109 = vmax.f32 %v3108, %v70
    %v3110 = vmax.f32 %v3109, %v71
    %v3111 = vmax.f32 %v3110, %v72
    %v3112 = vmax.f32 %v3111, %v73
    %v3113 = vmax.f32 %v3112, %v74
    %v3114 = vmax.f32 %v3113, %v75
    %v3115 = vmax.f32 %v3114, %v76
    %v3116 = vrot.slane %v3115, 4
    %v3117 = vmax.f32 %v3115, %v3116
    %v3118 = vrot.slane %v3117, 2
    %v3119 = vmax.f32 %v3117, %v3118
    %v3120 = vrot.slane %v3119, 1
    %v3121 = vmax.f32 %v3119, %v3120
    %v3122 = vmax.f32 %v77, %v78
    %v3123 = vmax.f32 %v3122, %v79
    %v3124 = vmax.f32 %v3123, %v80
    %v3125 = vmax.f32 %v3124, %v81
    %v3126 = vmax.f32 %v3125, %v82
    %v3127 = vmax.f32 %v3126, %v83
    %v3128 = vmax.f32 %v3127, %v84
    %v3129 = vmax.f32 %v3128, %v85
    %v3130 = vmax.f32 %v3129, %v86
    %v3131 = vmax.f32 %v3130, %v87
    %v3132 = vmax.f32 %v3131, %v88
    %v3133 = vmax.f32 %v3132, %v89
    %v3134 = vmax.f32 %v3133, %v90
    %v3135 = vmax.f32 %v3134, %v91
    %v3136 = vmax.f32 %v3135, %v92
    %v3137 = vrot.slane %v3136, 4
    %v3138 = vmax.f32 %v3136, %v3137
    %v3139 = vrot.slane %v3138, 2
    %v3140 = vmax.f32 %v3138, %v3139
    %v3141 = vrot.slane %v3140, 1
    %v3142 = vmax.f32 %v3140, %v3141
    %v3143 = vmax.f32 %v93, %v94
    %v3144 = vmax.f32 %v3143, %v95
    %v3145 = vmax.f32 %v3144, %v96
    %v3146 = vmax.f32 %v3145, %v97
    %v3147 = vmax.f32 %v3146, %v98
    %v3148 = vmax.f32 %v3147, %v99
    %v3149 = vmax.f32 %v3148, %v100
    %v3150 = vmax.f32 %v3149, %v101
    %v3151 = vmax.f32 %v3150, %v102
    %v3152 = vmax.f32 %v3151, %v103
    %v3153 = vmax.f32 %v3152, %v104
    %v3154 = vmax.f32 %v3153, %v105
    %v3155 = vmax.f32 %v3154, %v106
    %v3156 = vmax.f32 %v3155, %v107
    %v3157 = vmax.f32 %v3156, %v108
    %v3158 = vrot.slane %v3157, 4
    %v3159 = vmax.f32 %v3157, %v3158
    %v3160 = vrot.slane %v3159, 2
    %v3161 = vmax.f32 %v3159, %v3160
    %v3162 = vrot.slane %v3161, 1
    %v3163 = vmax.f32 %v3161, %v3162
    %v3164 = vmax.f32 %v109, %v110
    %v3165 = vmax.f32 %v3164, %v111
    %v3166 = vmax.f32 %v3165, %v112
    %v3167 = vmax.f32 %v3166, %v113
    %v3168 = vmax.f32 %v3167, %v114
    %v3169 = vmax.f32 %v3168, %v115
    %v3170 = vmax.f32 %v3169, %v116
    %v3171 = vmax.f32 %v3170, %v117
    %v3172 = vmax.f32 %v3171, %v118
    %v3173 = vmax.f32 %v3172, %v119
    %v3174 = vmax.f32 %v3173, %v120
    %v3175 = vmax.f32 %v3174, %v121
    %v3176 = vmax.f32 %v3175, %v122
    %v3177 = vmax.f32 %v3176, %v123
    %v3178 = vmax.f32 %v3177, %v124
    %v3179 = vrot.slane %v3178, 4
    %v3180 = vmax.f32 %v3178, %v3179
    %v3181 = vrot.slane %v3180, 2
    %v3182 = vmax.f32 %v3180, %v3181
    %v3183 = vrot.slane %v3182, 1
    %v3184 = vmax.f32 %v3182, %v3183
    %v3185 = vmax.f32 %v125, %v126
    %v3186 = vmax.f32 %v3185, %v127
    %v3187 = vmax.f32 %v3186, %v128
    %v3188 = vmax.f32 %v3187, %v129
    %v3189 = vmax.f32 %v3188, %v130
    %v3190 = vmax.f32 %v3189, %v131
    %v3191 = vmax.f32 %v3190, %v132
    %v3192 = vmax.f32 %v3191, %v133
    %v3193 = vmax.f32 %v3192, %v134
    %v3194 = vmax.f32 %v3193, %v135
    %v3195 = vmax.f32 %v3194, %v136
    %v3196 = vmax.f32 %v3195, %v137
    %v3197 = vmax.f32 %v3196, %v138
    %v3198 = vmax.f32 %v3197, %v139
    %v3199 = vmax.f32 %v3198, %v140
    %v3200 = vrot.slane %v3199, 4
    %v3201 = vmax.f32 %v3199, %v3200
    %v3202 = vrot.slane %v3201, 2
    %v3203 = vmax.f32 %v3201, %v3202
    %v3204 = vrot.slane %v3203, 1
    %v3205 = vmax.f32 %v3203, %v3204
    %v3206 = vmax.f32 %v141, %v142
    %v3207 = vmax.f32 %v3206, %v143
    %v3208 = vmax.f32 %v3207, %v144
    %v3209 = vmax.f32 %v3208, %v145
    %v3210 = vmax.f32 %v3209, %v146
    %v3211 = vmax.f32 %v3210, %v147
    %v3212 = vmax.f32 %v3211, %v148
    %v3213 = vmax.f32 %v3212, %v149
    %v3214 = vmax.f32 %v3213, %v150
    %v3215 = vmax.f32 %v3214, %v151
    %v3216 = vmax.f32 %v3215, %v152
    %v3217 = vmax.f32 %v3216, %v153
    %v3218 = vmax.f32 %v3217, %v154
    %v3219 = vmax.f32 %v3218, %v155
    %v3220 = vmax.f32 %v3219, %v156
    %v3221 = vrot.slane %v3220, 4
    %v3222 = vmax.f32 %v3220, %v3221
    %v3223 = vrot.slane %v3222, 2
    %v3224 = vmax.f32 %v3222, %v3223
    %v3225 = vrot.slane %v3224, 1
    %v3226 = vmax.f32 %v3224, %v3225
    %v3227 = vmax.f32 %v157, %v158
    %v3228 = vmax.f32 %v3227, %v159
    %v3229 = vmax.f32 %v3228, %v160
    %v3230 = vmax.f32 %v3229, %v161
    %v3231 = vmax.f32 %v3230, %v162
    %v3232 = vmax.f32 %v3231, %v163
    %v3233 = vmax.f32 %v3232, %v164
    %v3234 = vmax.f32 %v3233, %v165
    %v3235 = vmax.f32 %v3234, %v166
    %v3236 = vmax.f32 %v3235, %v167
    %v3237 = vmax.f32 %v3236, %v168
    %v3238 = vmax.f32 %v3237, %v169
    %v3239 = vmax.f32 %v3238, %v170
    %v3240 = vmax.f32 %v3239, %v171
    %v3241 = vmax.f32 %v3240, %v172
    %v3242 = vrot.slane %v3241, 4
    %v3243 = vmax.f32 %v3241, %v3242
    %v3244 = vrot.slane %v3243, 2
    %v3245 = vmax.f32 %v3243, %v3244
    %v3246 = vrot.slane %v3245, 1
    %v3247 = vmax.f32 %v3245, %v3246
    %v3248 = vsub.f32 %v45, %v3100
    %v3249 = vsub.f32 %v46, %v3100
    %v3250 = vsub.f32 %v47, %v3100
    %v3251 = vsub.f32 %v48, %v3100
    %v3252 = vsub.f32 %v49, %v3100
    %v3253 = vsub.f32 %v50, %v3100
    %v3254 = vsub.f32 %v51, %v3100
    %v3255 = vsub.f32 %v52, %v3100
    %v3256 = vsub.f32 %v53, %v3100
    %v3257 = vsub.f32 %v54, %v3100
    %v3258 = vsub.f32 %v55, %v3100
    %v3259 = vsub.f32 %v56, %v3100
    %v3260 = vsub.f32 %v57, %v3100
    %v3261 = vsub.f32 %v58, %v3100
    %v3262 = vsub.f32 %v59, %v3100
    %v3263 = vsub.f32 %v60, %v3100
    %v3264 = vsub.f32 %v61, %v3121
    %v3265 = vsub.f32 %v62, %v3121
    %v3266 = vsub.f32 %v63, %v3121
    %v3267 = vsub.f32 %v64, %v3121
    %v3268 = vsub.f32 %v65, %v3121
    %v3269 = vsub.f32 %v66, %v3121
    %v3270 = vsub.f32 %v67, %v3121
    %v3271 = vsub.f32 %v68, %v3121
    %v3272 = vsub.f32 %v69, %v3121
    %v3273 = vsub.f32 %v70, %v3121
    %v3274 = vsub.f32 %v71, %v3121
    %v3275 = vsub.f32 %v72, %v3121
    %v3276 = vsub.f32 %v73, %v3121
    %v3277 = vsub.f32 %v74, %v3121
    %v3278 = vsub.f32 %v75, %v3121
    %v3279 = vsub.f32 %v76, %v3121
    %v3280 = vsub.f32 %v77, %v3142
    %v3281 = vsub.f32 %v78, %v3142
    %v3282 = vsub.f32 %v79, %v3142
    %v3283 = vsub.f32 %v80, %v3142
    %v3284 = vsub.f32 %v81, %v3142
    %v3285 = vsub.f32 %v82, %v3142
    %v3286 = vsub.f32 %v83, %v3142
    %v3287 = vsub.f32 %v84, %v3142
    %v3288 = vsub.f32 %v85, %v3142
    %v3289 = vsub.f32 %v86, %v3142
    %v3290 = vsub.f32 %v87, %v3142
    %v3291 = vsub.f32 %v88, %v3142
    %v3292 = vsub.f32 %v89, %v3142
    %v3293 = vsub.f32 %v90, %v3142
    %v3294 = vsub.f32 %v91, %v3142
    %v3295 = vsub.f32 %v92, %v3142
    %v3296 = vsub.f32 %v93, %v3163
    %v3297 = vsub.f32 %v94, %v3163
    %v3298 = vsub.f32 %v95, %v3163
    %v3299 = vsub.f32 %v96, %v3163
    %v3300 = vsub.f32 %v97, %v3163
    %v3301 = vsub.f32 %v98, %v3163
    %v3302 = vsub.f32 %v99, %v3163
    %v3303 = vsub.f32 %v100, %v3163
    %v3304 = vsub.f32 %v101, %v3163
    %v3305 = vsub.f32 %v102, %v3163
    %v3306 = vsub.f32 %v103, %v3163
    %v3307 = vsub.f32 %v104, %v3163
    %v3308 = vsub.f32 %v105, %v3163
    %v3309 = vsub.f32 %v106, %v3163
    %v3310 = vsub.f32 %v107, %v3163
    %v3311 = vsub.f32 %v108, %v3163
    %v3312 = vsub.f32 %v109, %v3184
    %v3313 = vsub.f32 %v110, %v3184
    %v3314 = vsub.f32 %v111, %v3184
    %v3315 = vsub.f32 %v112, %v3184
    %v3316 = vsub.f32 %v113, %v3184
    %v3317 = vsub.f32 %v114, %v3184
    %v3318 = vsub.f32 %v115, %v3184
    %v3319 = vsub.f32 %v116, %v3184
    %v3320 = vsub.f32 %v117, %v3184
    %v3321 = vsub.f32 %v118, %v3184
    %v3322 = vsub.f32 %v119, %v3184
    %v3323 = vsub.f32 %v120, %v3184
    %v3324 = vsub.f32 %v121, %v3184
    %v3325 = vsub.f32 %v122, %v3184
    %v3326 = vsub.f32 %v123, %v3184
    %v3327 = vsub.f32 %v124, %v3184
    %v3328 = vsub.f32 %v125, %v3205
    %v3329 = vsub.f32 %v126, %v3205
    %v3330 = vsub.f32 %v127, %v3205
    %v3331 = vsub.f32 %v128, %v3205
    %v3332 = vsub.f32 %v129, %v3205
    %v3333 = vsub.f32 %v130, %v3205
    %v3334 = vsub.f32 %v131, %v3205
    %v3335 = vsub.f32 %v132, %v3205
    %v3336 = vsub.f32 %v133, %v3205
    %v3337 = vsub.f32 %v134, %v3205
    %v3338 = vsub.f32 %v135, %v3205
    %v3339 = vsub.f32 %v136, %v3205
    %v3340 = vsub.f32 %v137, %v3205
    %v3341 = vsub.f32 %v138, %v3205
    %v3342 = vsub.f32 %v139, %v3205
    %v3343 = vsub.f32 %v140, %v3205
    %v3344 = vsub.f32 %v141, %v3226
    %v3345 = vsub.f32 %v142, %v3226
    %v3346 = vsub.f32 %v143, %v3226
    %v3347 = vsub.f32 %v144, %v3226
    %v3348 = vsub.f32 %v145, %v3226
    %v3349 = vsub.f32 %v146, %v3226
    %v3350 = vsub.f32 %v147, %v3226
    %v3351 = vsub.f32 %v148, %v3226
    %v3352 = vsub.f32 %v149, %v3226
    %v3353 = vsub.f32 %v150, %v3226
    %v3354 = vsub.f32 %v151, %v3226
    %v3355 = vsub.f32 %v152, %v3226
    %v3356 = vsub.f32 %v153, %v3226
    %v3357 = vsub.f32 %v154, %v3226
    %v3358 = vsub.f32 %v155, %v3226
    %v3359 = vsub.f32 %v156, %v3226
    %v3360 = vsub.f32 %v157, %v3247
    %v3361 = vsub.f32 %v158, %v3247
    %v3362 = vsub.f32 %v159, %v3247
    %v3363 = vsub.f32 %v160, %v3247
    %v3364 = vsub.f32 %v161, %v3247
    %v3365 = vsub.f32 %v162, %v3247
    %v3366 = vsub.f32 %v163, %v3247
    %v3367 = vsub.f32 %v164, %v3247
    %v3368 = vsub.f32 %v165, %v3247
    %v3369 = vsub.f32 %v166, %v3247
    %v3370 = vsub.f32 %v167, %v3247
    %v3371 = vsub.f32 %v168, %v3247
    %v3372 = vsub.f32 %v169, %v3247
    %v3373 = vsub.f32 %v170, %v3247
    %v3374 = vsub.f32 %v171, %v3247
    %v3375 = vsub.f32 %v172, %v3247
    %v3376 = vmul.f32 %v3248, 1.442695
    %v3377 = vpow.pop %v3376
    %v3378 = vmul.f32 %v3249, 1.442695
    %v3379 = vpow.pop %v3378
    %v3380 = vmul.f32 %v3250, 1.442695
    %v3381 = vpow.pop %v3380
    %v3382 = vmul.f32 %v3251, 1.442695
    %v3383 = vpow.pop %v3382
    %v3384 = vmul.f32 %v3252, 1.442695
    %v3385 = vpow.pop %v3384
    %v3386 = vmul.f32 %v3253, 1.442695
    %v3387 = vpow.pop %v3386
    %v3388 = vmul.f32 %v3254, 1.442695
    %v3389 = vpow.pop %v3388
    %v3390 = vmul.f32 %v3255, 1.442695
    %v3391 = vpow.pop %v3390
    %v3392 = vmul.f32 %v3256, 1.442695
    %v3393 = vpow.pop %v3392
    %v3394 = vmul.f32 %v3257, 1.442695
    %v3395 = vpow.pop %v3394
    %v3396 = vmul.f32 %v3258, 1.442695
    %v3397 = vpow.pop %v3396
    %v3398 = vmul.f32 %v3259, 1.442695
    %v3399 = vpow.pop %v3398
    %v3400 = vmul.f32 %v3260, 1.442695
    %v3401 = vpow.pop %v3400
    %v3402 = vmul.f32 %v3261, 1.442695
    %v3403 = vpow.pop %v3402
    %v3404 = vmul.f32 %v3262, 1.442695
    %v3405 = vpow.pop %v3404
    %v3406 = vmul.f32 %v3263, 1.442695
    %v3407 = vpow.pop %v3406
    %v3408 = vmul.f32 %v3264, 1.442695
    %v3409 = vpow.pop %v3408
    %v3410 = vmul.f32 %v3265, 1.442695
    %v3411 = vpow.pop %v3410
    %v3412 = vmul.f32 %v3266, 1.442695
    %v3413 = vpow.pop %v3412
    %v3414 = vmul.f32 %v3267, 1.442695
    %v3415 = vpow.pop %v3414
    %v3416 = vmul.f32 %v3268, 1.442695
    %v3417 = vpow.pop %v3416
    %v3418 = vmul.f32 %v3269, 1.442695
    %v3419 = vpow.pop %v3418
    %v3420 = vmul.f32 %v3270, 1.442695
    %v3421 = vpow.pop %v3420
    %v3422 = vmul.f32 %v3271, 1.442695
    %v3423 = vpow.pop %v3422
    %v3424 = vmul.f32 %v3272, 1.442695
    %v3425 = vpow.pop %v3424
    %v3426 = vmul.f32 %v3273, 1.442695
    %v3427 = vpow.pop %v3426
    %v3428 = vmul.f32 %v3274, 1.442695
    %v3429 = vpow.pop %v3428
    %v3430 = vmul.f32 %v3275, 1.442695
    %v3431 = vpow.pop %v3430
    %v3432 = vmul.f32 %v3276, 1.442695
    %v3433 = vpow.pop %v3432
    %v3434 = vmul.f32 %v3277, 1.442695
    %v3435 = vpow.pop %v3434
    %v3436 = vmul.f32 %v3278, 1.442695
    %v3437 = vpow.pop %v3436
    %v3438 = vmul.f32 %v3279, 1.442695
    %v3439 = vpow.pop %v3438
    %v3440 = vmul.f32 %v3280, 1.442695
    %v3441 = vpow.pop %v3440
    %v3442 = vmul.f32 %v3281, 1.442695
    %v3443 = vpow.pop %v3442
    %v3444 = vmul.f32 %v3282, 1.442695
    %v3445 = vpow.pop %v3444
    %v3446 = vmul.f32 %v3283, 1.442695
    %v3447 = vpow.pop %v3446
    %v3448 = vmul.f32 %v3284, 1.442695
    %v3449 = vpow.pop %v3448
    %v3450 = vmul.f32 %v3285, 1.442695
    %v3451 = vpow.pop %v3450
    %v3452 = vmul.f32 %v3286, 1.442695
    %v3453 = vpow.pop %v3452
    %v3454 = vmul.f32 %v3287, 1.442695
    %v3455 = vpow.pop %v3454
    %v3456 = vmul.f32 %v3288, 1.442695
    %v3457 = vpow.pop %v3456
    %v3458 = vmul.f32 %v3289, 1.442695
    %v3459 = vpow.pop %v3458
    %v3460 = vmul.f32 %v3290, 1.442695
    %v3461 = vpow.pop %v3460
    %v3462 = vmul.f32 %v3291, 1.442695
    %v3463 = vpow.pop %v3462
    %v3464 = vmul.f32 %v3292, 1.442695
    %v3465 = vpow.pop %v3464
    %v3466 = vmul.f32 %v3293, 1.442695
    %v3467 = vpow.pop %v3466
    %v3468 = vmul.f32 %v3294, 1.442695
    %v3469 = vpow.pop %v3468
    %v3470 = vmul.f32 %v3295, 1.442695
    %v3471 = vpow.pop %v3470
    %v3472 = vmul.f32 %v3296, 1.442695
    %v3473 = vpow.pop %v3472
    %v3474 = vmul.f32 %v3297, 1.442695
    %v3475 = vpow.pop %v3474
    %v3476 = vmul.f32 %v3298, 1.442695
    %v3477 = vpow.pop %v3476
    %v3478 = vmul.f32 %v3299, 1.442695
    %v3479 = vpow.pop %v3478
    %v3480 = vmul.f32 %v3300, 1.442695
    %v3481 = vpow.pop %v3480
    %v3482 = vmul.f32 %v3301, 1.442695
    %v3483 = vpow.pop %v3482
    %v3484 = vmul.f32 %v3302, 1.442695
    %v3485 = vpow.pop %v3484
    %v3486 = vmul.f32 %v3303, 1.442695
    %v3487 = vpow.pop %v3486
    %v3488 = vmul.f32 %v3304, 1.442695
    %v3489 = vpow.pop %v3488
    %v3490 = vmul.f32 %v3305, 1.442695
    %v3491 = vpow.pop %v3490
    %v3492 = vmul.f32 %v3306, 1.442695
    %v3493 = vpow.pop %v3492
    %v3494 = vmul.f32 %v3307, 1.442695
    %v3495 = vpow.pop %v3494
    %v3496 = vmul.f32 %v3308, 1.442695
    %v3497 = vpow.pop %v3496
    %v3498 = vmul.f32 %v3309, 1.442695
    %v3499 = vpow.pop %v3498
    %v3500 = vmul.f32 %v3310, 1.442695
    %v3501 = vpow.pop %v3500
    %v3502 = vmul.f32 %v3311, 1.442695
    %v3503 = vpow.pop %v3502
    %v3504 = vmul.f32 %v3312, 1.442695
    %v3505 = vpow.pop %v3504
    %v3506 = vmul.f32 %v3313, 1.442695
    %v3507 = vpow.pop %v3506
    %v3508 = vmul.f32 %v3314, 1.442695
    %v3509 = vpow.pop %v3508
    %v3510 = vmul.f32 %v3315, 1.442695
    %v3511 = vpow.pop %v3510
    %v3512 = vmul.f32 %v3316, 1.442695
    %v3513 = vpow.pop %v3512
    %v3514 = vmul.f32 %v3317, 1.442695
    %v3515 = vpow.pop %v3514
    %v3516 = vmul.f32 %v3318, 1.442695
    %v3517 = vpow.pop %v3516
    %v3518 = vmul.f32 %v3319, 1.442695
    %v3519 = vpow.pop %v3518
    %v3520 = vmul.f32 %v3320, 1.442695
    %v3521 = vpow.pop %v3520
    %v3522 = vmul.f32 %v3321, 1.442695
    %v3523 = vpow.pop %v3522
    %v3524 = vmul.f32 %v3322, 1.442695
    %v3525 = vpow.pop %v3524
    %v3526 = vmul.f32 %v3323, 1.442695
    %v3527 = vpow.pop %v3526
    %v3528 = vmul.f32 %v3324, 1.442695
    %v3529 = vpow.pop %v3528
    %v3530 = vmul.f32 %v3325, 1.442695
    %v3531 = vpow.pop %v3530
    %v3532 = vmul.f32 %v3326, 1.442695
    %v3533 = vpow.pop %v3532
    %v3534 = vmul.f32 %v3327, 1.442695
    %v3535 = vpow.pop %v3534
    %v3536 = vmul.f32 %v3328, 1.442695
    %v3537 = vpow.pop %v3536
    %v3538 = vmul.f32 %v3329, 1.442695
    %v3539 = vpow.pop %v3538
    %v3540 = vmul.f32 %v3330, 1.442695
    %v3541 = vpow.pop %v3540
    %v3542 = vmul.f32 %v3331, 1.442695
    %v3543 = vpow.pop %v3542
    %v3544 = vmul.f32 %v3332, 1.442695
    %v3545 = vpow.pop %v3544
    %v3546 = vmul.f32 %v3333, 1.442695
    %v3547 = vpow.pop %v3546
    %v3548 = vmul.f32 %v3334, 1.442695
    %v3549 = vpow.pop %v3548
    %v3550 = vmul.f32 %v3335, 1.442695
    %v3551 = vpow.pop %v3550
    %v3552 = vmul.f32 %v3336, 1.442695
    %v3553 = vpow.pop %v3552
    %v3554 = vmul.f32 %v3337, 1.442695
    %v3555 = vpow.pop %v3554
    %v3556 = vmul.f32 %v3338, 1.442695
    %v3557 = vpow.pop %v3556
    %v3558 = vmul.f32 %v3339, 1.442695
    %v3559 = vpow.pop %v3558
    %v3560 = vmul.f32 %v3340, 1.442695
    %v3561 = vpow.pop %v3560
    %v3562 = vmul.f32 %v3341, 1.442695
    %v3563 = vpow.pop %v3562
    %v3564 = vmul.f32 %v3342, 1.442695
    %v3565 = vpow.pop %v3564
    %v3566 = vmul.f32 %v3343, 1.442695
    %v3567 = vpow.pop %v3566
    %v3568 = vmul.f32 %v3344, 1.442695
    %v3569 = vpow.pop %v3568
    %v3570 = vmul.f32 %v3345, 1.442695
    %v3571 = vpow.pop %v3570
    %v3572 = vmul.f32 %v3346, 1.442695
    %v3573 = vpow.pop %v3572
    %v3574 = vmul.f32 %v3347, 1.442695
    %v3575 = vpow.pop %v3574
    %v3576 = vmul.f32 %v3348, 1.442695
    %v3577 = vpow.pop %v3576
    %v3578 = vmul.f32 %v3349, 1.442695
    %v3579 = vpow.pop %v3578
    %v3580 = vmul.f32 %v3350, 1.442695
    %v3581 = vpow.pop %v3580
    %v3582 = vmul.f32 %v3351, 1.442695
    %v3583 = vpow.pop %v3582
    %v3584 = vmul.f32 %v3352, 1.442695
    %v3585 = vpow.pop %v3584
    %v3586 = vmul.f32 %v3353, 1.442695
    %v3587 = vpow.pop %v3586
    %v3588 = vmul.f32 %v3354, 1.442695
    %v3589 = vpow.pop %v3588
    %v3590 = vmul.f32 %v3355, 1.442695
    %v3591 = vpow.pop %v3590
    %v3592 = vmul.f32 %v3356, 1.442695
    %v3593 = vpow.pop %v3592
    %v3594 = vmul.f32 %v3357, 1.442695
    %v3595 = vpow.pop %v3594
    %v3596 = vmul.f32 %v3358, 1.442695
    %v3597 = vpow.pop %v3596
    %v3598 = vmul.f32 %v3359, 1.442695
    %v3599 = vpow.pop %v3598
    %v3600 = vmul.f32 %v3360, 1.442695
    %v3601 = vpow.pop %v3600
    %v3602 = vmul.f32 %v3361, 1.442695
    %v3603 = vpow.pop %v3602
    %v3604 = vmul.f32 %v3362, 1.442695
    %v3605 = vpow.pop %v3604
    %v3606 = vmul.f32 %v3363, 1.442695
    %v3607 = vpow.pop %v3606
    %v3608 = vmul.f32 %v3364, 1.442695
    %v3609 = vpow.pop %v3608
    %v3610 = vmul.f32 %v3365, 1.442695
    %v3611 = vpow.pop %v3610
    %v3612 = vmul.f32 %v3366, 1.442695
    %v3613 = vpow.pop %v3612
    %v3614 = vmul.f32 %v3367, 1.442695
    %v3615 = vpow.pop %v3614
    %v3616 = vmul.f32 %v3368, 1.442695
    %v3617 = vpow.pop %v3616
    %v3618 = vmul.f32 %v3369, 1.442695
    %v3619 = vpow.pop %v3618
    %v3620 = vmul.f32 %v3370, 1.442695
    %v3621 = vpow.pop %v3620
    %v3622 = vmul.f32 %v3371, 1.442695
    %v3623 = vpow.pop %v3622
    %v3624 = vmul.f32 %v3372, 1.442695
    %v3625 = vpow.pop %v3624
    %v3626 = vmul.f32 %v3373, 1.442695
    %v3627 = vpow.pop %v3626
    %v3628 = vmul.f32 %v3374, 1.442695
    %v3629 = vpow.pop %v3628
    %v3630 = vmul.f32 %v3375, 1.442695
    %v3631 = vpow.pop %v3630
    %v3632 = vadd.f32 %v3377, %v3379
    %v3633 = vadd.f32 %v3632, %v3381
    %v3634 = vadd.f32 %v3633, %v3383
    %v3635 = vadd.f32 %v3634, %v3385
    %v3636 = vadd.f32 %v3635, %v3387
    %v3637 = vadd.f32 %v3636, %v3389
    %v3638 = vadd.f32 %v3637, %v3391
    %v3639 = vadd.f32 %v3638, %v3393
    %v3640 = vadd.f32 %v3639, %v3395
    %v3641 = vadd.f32 %v3640, %v3397
    %v3642 = vadd.f32 %v3641, %v3399
    %v3643 = vadd.f32 %v3642, %v3401
    %v3644 = vadd.f32 %v3643, %v3403
    %v3645 = vadd.f32 %v3644, %v3405
    %v3646 = vadd.f32 %v3645, %v3407
    %v3647 = vrot.slane %v3646, 4
    %v3648 = vadd.f32 %v3646, %v3647
    %v3649 = vrot.slane %v3648, 2
    %v3650 = vadd.f32 %v3648, %v3649
    %v3651 = vrot.slane %v3650, 1
    %v3652 = vadd.f32 %v3650, %v3651
    %v3653 = vadd.f32 %v3409, %v3411
    %v3654 = vadd.f32 %v3653, %v3413
    %v3655 = vadd.f32 %v3654, %v3415
    %v3656 = vadd.f32 %v3655, %v3417
    %v3657 = vadd.f32 %v3656, %v3419
    %v3658 = vadd.f32 %v3657, %v3421
    %v3659 = vadd.f32 %v3658, %v3423
    %v3660 = vadd.f32 %v3659, %v3425
    %v3661 = vadd.f32 %v3660, %v3427
    %v3662 = vadd.f32 %v3661, %v3429
    %v3663 = vadd.f32 %v3662, %v3431
    %v3664 = vadd.f32 %v3663, %v3433
    %v3665 = vadd.f32 %v3664, %v3435
    %v3666 = vadd.f32 %v3665, %v3437
    %v3667 = vadd.f32 %v3666, %v3439
    %v3668 = vrot.slane %v3667, 4
    %v3669 = vadd.f32 %v3667, %v3668
    %v3670 = vrot.slane %v3669, 2
    %v3671 = vadd.f32 %v3669, %v3670
    %v3672 = vrot.slane %v3671, 1
    %v3673 = vadd.f32 %v3671, %v3672
    %v3674 = vadd.f32 %v3441, %v3443
    %v3675 = vadd.f32 %v3674, %v3445
    %v3676 = vadd.f32 %v3675, %v3447
    %v3677 = vadd.f32 %v3676, %v3449
    %v3678 = vadd.f32 %v3677, %v3451
    %v3679 = vadd.f32 %v3678, %v3453
    %v3680 = vadd.f32 %v3679, %v3455
    %v3681 = vadd.f32 %v3680, %v3457
    %v3682 = vadd.f32 %v3681, %v3459
    %v3683 = vadd.f32 %v3682, %v3461
    %v3684 = vadd.f32 %v3683, %v3463
    %v3685 = vadd.f32 %v3684, %v3465
    %v3686 = vadd.f32 %v3685, %v3467
    %v3687 = vadd.f32 %v3686, %v3469
    %v3688 = vadd.f32 %v3687, %v3471
    %v3689 = vrot.slane %v3688, 4
    %v3690 = vadd.f32 %v3688, %v3689
    %v3691 = vrot.slane %v3690, 2
    %v3692 = vadd.f32 %v3690, %v3691
    %v3693 = vrot.slane %v3692, 1
    %v3694 = vadd.f32 %v3692, %v3693
    %v3695 = vadd.f32 %v3473, %v3475
    %v3696 = vadd.f32 %v3695, %v3477
    %v3697 = vadd.f32 %v3696, %v3479
    %v3698 = vadd.f32 %v3697, %v3481
    %v3699 = vadd.f32 %v3698, %v3483
    %v3700 = vadd.f32 %v3699, %v3485
    %v3701 = vadd.f32 %v3700, %v3487
    %v3702 = vadd.f32 %v3701, %v3489
    %v3703 = vadd.f32 %v3702, %v3491
    %v3704 = vadd.f32 %v3703, %v3493
    %v3705 = vadd.f32 %v3704, %v3495
    %v3706 = vadd.f32 %v3705, %v3497
    %v3707 = vadd.f32 %v3706, %v3499
    %v3708 = vadd.f32 %v3707, %v3501
    %v3709 = vadd.f32 %v3708, %v3503
    %v3710 = vrot.slane %v3709, 4
    %v3711 = vadd.f32 %v3709, %v3710
    %v3712 = vrot.slane %v3711, 2
    %v3713 = vadd.f32 %v3711, %v3712
    %v3714 = vrot.slane %v3713, 1
    %v3715 = vadd.f32 %v3713, %v3714
    %v3716 = vadd.f32 %v3505, %v3507
    %v3717 = vadd.f32 %v3716, %v3509
    %v3718 = vadd.f32 %v3717, %v3511
    %v3719 = vadd.f32 %v3718, %v3513
    %v3720 = vadd.f32 %v3719, %v3515
    %v3721 = vadd.f32 %v3720, %v3517
    %v3722 = vadd.f32 %v3721, %v3519
    %v3723 = vadd.f32 %v3722, %v3521
    %v3724 = vadd.f32 %v3723, %v3523
    %v3725 = vadd.f32 %v3724, %v3525
    %v3726 = vadd.f32 %v3725, %v3527
    %v3727 = vadd.f32 %v3726, %v3529
    %v3728 = vadd.f32 %v3727, %v3531
    %v3729 = vadd.f32 %v3728, %v3533
    %v3730 = vadd.f32 %v3729, %v3535
    %v3731 = vrot.slane %v3730, 4
    %v3732 = vadd.f32 %v3730, %v3731
    %v3733 = vrot.slane %v3732, 2
    %v3734 = vadd.f32 %v3732, %v3733
    %v3735 = vrot.slane %v3734, 1
    %v3736 = vadd.f32 %v3734, %v3735
    %v3737 = vadd.f32 %v3537, %v3539
    %v3738 = vadd.f32 %v3737, %v3541
    %v3739 = vadd.f32 %v3738, %v3543
    %v3740 = vadd.f32 %v3739, %v3545
    %v3741 = vadd.f32 %v3740, %v3547
    %v3742 = vadd.f32 %v3741, %v3549
    %v3743 = vadd.f32 %v3742, %v3551
    %v3744 = vadd.f32 %v3743, %v3553
    %v3745 = vadd.f32 %v3744, %v3555
    %v3746 = vadd.f32 %v3745, %v3557
    %v3747 = vadd.f32 %v3746, %v3559
    %v3748 = vadd.f32 %v3747, %v3561
    %v3749 = vadd.f32 %v3748, %v3563
    %v3750 = vadd.f32 %v3749, %v3565
    %v3751 = vadd.f32 %v3750, %v3567
    %v3752 = vrot.slane %v3751, 4
    %v3753 = vadd.f32 %v3751, %v3752
    %v3754 = vrot.slane %v3753, 2
    %v3755 = vadd.f32 %v3753, %v3754
    %v3756 = vrot.slane %v3755, 1
    %v3757 = vadd.f32 %v3755, %v3756
    %v3758 = vadd.f32 %v3569, %v3571
    %v3759 = vadd.f32 %v3758, %v3573
    %v3760 = vadd.f32 %v3759, %v3575
    %v3761 = vadd.f32 %v3760, %v3577
    %v3762 = vadd.f32 %v3761, %v3579
    %v3763 = vadd.f32 %v3762, %v3581
    %v3764 = vadd.f32 %v3763, %v3583
    %v3765 = vadd.f32 %v3764, %v3585
    %v3766 = vadd.f32 %v3765, %v3587
    %v3767 = vadd.f32 %v3766, %v3589
    %v3768 = vadd.f32 %v3767, %v3591
    %v3769 = vadd.f32 %v3768, %v3593
    %v3770 = vadd.f32 %v3769, %v3595
    %v3771 = vadd.f32 %v3770, %v3597
    %v3772 = vadd.f32 %v3771, %v3599
    %v3773 = vrot.slane %v3772, 4
    %v3774 = vadd.f32 %v3772, %v3773
    %v3775 = vrot.slane %v3774, 2
    %v3776 = vadd.f32 %v3774, %v3775
    %v3777 = vrot.slane %v3776, 1
    %v3778 = vadd.f32 %v3776, %v3777
    %v3779 = vadd.f32 %v3601, %v3603
    %v3780 = vadd.f32 %v3779, %v3605
    %v3781 = vadd.f32 %v3780, %v3607
    %v3782 = vadd.f32 %v3781, %v3609
    %v3783 = vadd.f32 %v3782, %v3611
    %v3784 = vadd.f32 %v3783, %v3613
    %v3785 = vadd.f32 %v3784, %v3615
    %v3786 = vadd.f32 %v3785, %v3617
    %v3787 = vadd.f32 %v3786, %v3619
    %v3788 = vadd.f32 %v3787, %v3621
    %v3789 = vadd.f32 %v3788, %v3623
    %v3790 = vadd.f32 %v3789, %v3625
    %v3791 = vadd.f32 %v3790, %v3627
    %v3792 = vadd.f32 %v3791, %v3629
    %v3793 = vadd.f32 %v3792, %v3631
    %v3794 = vrot.slane %v3793, 4
    %v3795 = vadd.f32 %v3793, %v3794
    %v3796 = vrot.slane %v3795, 2
    %v3797 = vadd.f32 %v3795, %v3796
    %v3798 = vrot.slane %v3797, 1
    %v3799 = vadd.f32 %v3797, %v3798
    %v3800 = vlog2.pop %v3652
    %v3801 = vmul.f32 %v3800, 0.6931472
    %v3802 = vlog2.pop %v3673
    %v3803 = vmul.f32 %v3802, 0.6931472
    %v3804 = vlog2.pop %v3694
    %v3805 = vmul.f32 %v3804, 0.6931472
    %v3806 = vlog2.pop %v3715
    %v3807 = vmul.f32 %v3806, 0.6931472
    %v3808 = vlog2.pop %v3736
    %v3809 = vmul.f32 %v3808, 0.6931472
    %v3810 = vlog2.pop %v3757
    %v3811 = vmul.f32 %v3810, 0.6931472
    %v3812 = vlog2.pop %v3778
    %v3813 = vmul.f32 %v3812, 0.6931472
    %v3814 = vlog2.pop %v3799
    %v3815 = vmul.f32 %v3814, 0.6931472
    %vm3816 = vcmp.eq.f32.partialorder %v45, %v3100
    %vm3817 = vcmp.eq.f32.partialorder %v46, %v3100
    %vm3818 = vcmp.eq.f32.partialorder %v47, %v3100
    %vm3819 = vcmp.eq.f32.partialorder %v48, %v3100
    %vm3820 = vcmp.eq.f32.partialorder %v49, %v3100
    %vm3821 = vcmp.eq.f32.partialorder %v50, %v3100
    %vm3822 = vcmp.eq.f32.partialorder %v51, %v3100
    %vm3823 = vcmp.eq.f32.partialorder %v52, %v3100
    %vm3824 = vcmp.eq.f32.partialorder %v53, %v3100
    %vm3825 = vcmp.eq.f32.partialorder %v54, %v3100
    %vm3826 = vcmp.eq.f32.partialorder %v55, %v3100
    %vm3827 = vcmp.eq.f32.partialorder %v56, %v3100
    %vm3828 = vcmp.eq.f32.partialorder %v57, %v3100
    %vm3829 = vcmp.eq.f32.partialorder %v58, %v3100
    %vm3830 = vcmp.eq.f32.partialorder %v59, %v3100
    %vm3831 = vcmp.eq.f32.partialorder %v60, %v3100
    %vm3832 = vcmp.eq.f32.partialorder %v61, %v3121
    %vm3833 = vcmp.eq.f32.partialorder %v62, %v3121
    %vm3834 = vcmp.eq.f32.partialorder %v63, %v3121
    %vm3835 = vcmp.eq.f32.partialorder %v64, %v3121
    %vm3836 = vcmp.eq.f32.partialorder %v65, %v3121
    %vm3837 = vcmp.eq.f32.partialorder %v66, %v3121
    %vm3838 = vcmp.eq.f32.partialorder %v67, %v3121
    %vm3839 = vcmp.eq.f32.partialorder %v68, %v3121
    %vm3840 = vcmp.eq.f32.partialorder %v69, %v3121
    %vm3841 = vcmp.eq.f32.partialorder %v70, %v3121
    %vm3842 = vcmp.eq.f32.partialorder %v71, %v3121
    %vm3843 = vcmp.eq.f32.partialorder %v72, %v3121
    %vm3844 = vcmp.eq.f32.partialorder %v73, %v3121
    %vm3845 = vcmp.eq.f32.partialorder %v74, %v3121
    %vm3846 = vcmp.eq.f32.partialorder %v75, %v3121
    %vm3847 = vcmp.eq.f32.partialorder %v76, %v3121
    %vm3848 = vcmp.eq.f32.partialorder %v77, %v3142
    %vm3849 = vcmp.eq.f32.partialorder %v78, %v3142
    %vm3850 = vcmp.eq.f32.partialorder %v79, %v3142
    %vm3851 = vcmp.eq.f32.partialorder %v80, %v3142
    %vm3852 = vcmp.eq.f32.partialorder %v81, %v3142
    %vm3853 = vcmp.eq.f32.partialorder %v82, %v3142
    %vm3854 = vcmp.eq.f32.partialorder %v83, %v3142
    %vm3855 = vcmp.eq.f32.partialorder %v84, %v3142
    %vm3856 = vcmp.eq.f32.partialorder %v85, %v3142
    %vm3857 = vcmp.eq.f32.partialorder %v86, %v3142
    %vm3858 = vcmp.eq.f32.partialorder %v87, %v3142
    %vm3859 = vcmp.eq.f32.partialorder %v88, %v3142
    %vm3860 = vcmp.eq.f32.partialorder %v89, %v3142
    %vm3861 = vcmp.eq.f32.partialorder %v90, %v3142
    %vm3862 = vcmp.eq.f32.partialorder %v91, %v3142
    %vm3863 = vcmp.eq.f32.partialorder %v92, %v3142
    %vm3864 = vcmp.eq.f32.partialorder %v93, %v3163
    %vm3865 = vcmp.eq.f32.partialorder %v94, %v3163
    %vm3866 = vcmp.eq.f32.partialorder %v95, %v3163
    %vm3867 = vcmp.eq.f32.partialorder %v96, %v3163
    %vm3868 = vcmp.eq.f32.partialorder %v97, %v3163
    %vm3869 = vcmp.eq.f32.partialorder %v98, %v3163
    %vm3870 = vcmp.eq.f32.partialorder %v99, %v3163
    %vm3871 = vcmp.eq.f32.partialorder %v100, %v3163
    %vm3872 = vcmp.eq.f32.partialorder %v101, %v3163
    %vm3873 = vcmp.eq.f32.partialorder %v102, %v3163
    %vm3874 = vcmp.eq.f32.partialorder %v103, %v3163
    %vm3875 = vcmp.eq.f32.partialorder %v104, %v3163
    %vm3876 = vcmp.eq.f32.partialorder %v105, %v3163
    %vm3877 = vcmp.eq.f32.partialorder %v106, %v3163
    %vm3878 = vcmp.eq.f32.partialorder %v107, %v3163
    %vm3879 = vcmp.eq.f32.partialorder %v108, %v3163
    %vm3880 = vcmp.eq.f32.partialorder %v109, %v3184
    %vm3881 = vcmp.eq.f32.partialorder %v110, %v3184
    %vm3882 = vcmp.eq.f32.partialorder %v111, %v3184
    %vm3883 = vcmp.eq.f32.partialorder %v112, %v3184
    %vm3884 = vcmp.eq.f32.partialorder %v113, %v3184
    %vm3885 = vcmp.eq.f32.partialorder %v114, %v3184
    %vm3886 = vcmp.eq.f32.partialorder %v115, %v3184
    %vm3887 = vcmp.eq.f32.partialorder %v116, %v3184
    %vm3888 = vcmp.eq.f32.partialorder %v117, %v3184
    %vm3889 = vcmp.eq.f32.partialorder %v118, %v3184
    %vm3890 = vcmp.eq.f32.partialorder %v119, %v3184
    %vm3891 = vcmp.eq.f32.partialorder %v120, %v3184
    %vm3892 = vcmp.eq.f32.partialorder %v121, %v3184
    %vm3893 = vcmp.eq.f32.partialorder %v122, %v3184
    %vm3894 = vcmp.eq.f32.partialorder %v123, %v3184
    %vm3895 = vcmp.eq.f32.partialorder %v124, %v3184
    %vm3896 = vcmp.eq.f32.partialorder %v125, %v3205
    %vm3897 = vcmp.eq.f32.partialorder %v126, %v3205
    %vm3898 = vcmp.eq.f32.partialorder %v127, %v3205
    %vm3899 = vcmp.eq.f32.partialorder %v128, %v3205
    %vm3900 = vcmp.eq.f32.partialorder %v129, %v3205
    %vm3901 = vcmp.eq.f32.partialorder %v130, %v3205
    %vm3902 = vcmp.eq.f32.partialorder %v131, %v3205
    %vm3903 = vcmp.eq.f32.partialorder %v132, %v3205
    %vm3904 = vcmp.eq.f32.partialorder %v133, %v3205
    %vm3905 = vcmp.eq.f32.partialorder %v134, %v3205
    %vm3906 = vcmp.eq.f32.partialorder %v135, %v3205
    %vm3907 = vcmp.eq.f32.partialorder %v136, %v3205
    %vm3908 = vcmp.eq.f32.partialorder %v137, %v3205
    %vm3909 = vcmp.eq.f32.partialorder %v138, %v3205
    %vm3910 = vcmp.eq.f32.partialorder %v139, %v3205
    %vm3911 = vcmp.eq.f32.partialorder %v140, %v3205
    %vm3912 = vcmp.eq.f32.partialorder %v141, %v3226
    %vm3913 = vcmp.eq.f32.partialorder %v142, %v3226
    %vm3914 = vcmp.eq.f32.partialorder %v143, %v3226
    %vm3915 = vcmp.eq.f32.partialorder %v144, %v3226
    %vm3916 = vcmp.eq.f32.partialorder %v145, %v3226
    %vm3917 = vcmp.eq.f32.partialorder %v146, %v3226
    %vm3918 = vcmp.eq.f32.partialorder %v147, %v3226
    %vm3919 = vcmp.eq.f32.partialorder %v148, %v3226
    %vm3920 = vcmp.eq.f32.partialorder %v149, %v3226
    %vm3921 = vcmp.eq.f32.partialorder %v150, %v3226
    %vm3922 = vcmp.eq.f32.partialorder %v151, %v3226
    %vm3923 = vcmp.eq.f32.partialorder %v152, %v3226
    %vm3924 = vcmp.eq.f32.partialorder %v153, %v3226
    %vm3925 = vcmp.eq.f32.partialorder %v154, %v3226
    %vm3926 = vcmp.eq.f32.partialorder %v155, %v3226
    %vm3927 = vcmp.eq.f32.partialorder %v156, %v3226
    %vm3928 = vcmp.eq.f32.partialorder %v157, %v3247
    %vm3929 = vcmp.eq.f32.partialorder %v158, %v3247
    %vm3930 = vcmp.eq.f32.partialorder %v159, %v3247
    %vm3931 = vcmp.eq.f32.partialorder %v160, %v3247
    %vm3932 = vcmp.eq.f32.partialorder %v161, %v3247
    %vm3933 = vcmp.eq.f32.partialorder %v162, %v3247
    %vm3934 = vcmp.eq.f32.partialorder %v163, %v3247
    %vm3935 = vcmp.eq.f32.partialorder %v164, %v3247
    %vm3936 = vcmp.eq.f32.partialorder %v165, %v3247
    %vm3937 = vcmp.eq.f32.partialorder %v166, %v3247
    %vm3938 = vcmp.eq.f32.partialorder %v167, %v3247
    %vm3939 = vcmp.eq.f32.partialorder %v168, %v3247
    %vm3940 = vcmp.eq.f32.partialorder %v169, %v3247
    %vm3941 = vcmp.eq.f32.partialorder %v170, %v3247
    %vm3942 = vcmp.eq.f32.partialorder %v171, %v3247
    %vm3943 = vcmp.eq.f32.partialorder %v172, %v3247
    %v3944 = vsel %vm3816, %v320, 128.0
    %v3945 = vsel %vm3817, %v321, 128.0
    %v3946 = vsel %vm3818, %v322, 128.0
    %v3947 = vsel %vm3819, %v323, 128.0
    %v3948 = vsel %vm3820, %v324, 128.0
    %v3949 = vsel %vm3821, %v325, 128.0
    %v3950 = vsel %vm3822, %v326, 128.0
    %v3951 = vsel %vm3823, %v327, 128.0
    %v3952 = vsel %vm3824, %v328, 128.0
    %v3953 = vsel %vm3825, %v329, 128.0
    %v3954 = vsel %vm3826, %v330, 128.0
    %v3955 = vsel %vm3827, %v331, 128.0
    %v3956 = vsel %vm3828, %v332, 128.0
    %v3957 = vsel %vm3829, %v333, 128.0
    %v3958 = vsel %vm3830, %v334, 128.0
    %v3959 = vsel %vm3831, %v335, 128.0
    %v3960 = vsel %vm3832, %v320, 128.0
    %v3961 = vsel %vm3833, %v321, 128.0
    %v3962 = vsel %vm3834, %v322, 128.0
    %v3963 = vsel %vm3835, %v323, 128.0
    %v3964 = vsel %vm3836, %v324, 128.0
    %v3965 = vsel %vm3837, %v325, 128.0
    %v3966 = vsel %vm3838, %v326, 128.0
    %v3967 = vsel %vm3839, %v327, 128.0
    %v3968 = vsel %vm3840, %v328, 128.0
    %v3969 = vsel %vm3841, %v329, 128.0
    %v3970 = vsel %vm3842, %v330, 128.0
    %v3971 = vsel %vm3843, %v331, 128.0
    %v3972 = vsel %vm3844, %v332, 128.0
    %v3973 = vsel %vm3845, %v333, 128.0
    %v3974 = vsel %vm3846, %v334, 128.0
    %v3975 = vsel %vm3847, %v335, 128.0
    %v3976 = vsel %vm3848, %v320, 128.0
    %v3977 = vsel %vm3849, %v321, 128.0
    %v3978 = vsel %vm3850, %v322, 128.0
    %v3979 = vsel %vm3851, %v323, 128.0
    %v3980 = vsel %vm3852, %v324, 128.0
    %v3981 = vsel %vm3853, %v325, 128.0
    %v3982 = vsel %vm3854, %v326, 128.0
    %v3983 = vsel %vm3855, %v327, 128.0
    %v3984 = vsel %vm3856, %v328, 128.0
    %v3985 = vsel %vm3857, %v329, 128.0
    %v3986 = vsel %vm3858, %v330, 128.0
    %v3987 = vsel %vm3859, %v331, 128.0
    %v3988 = vsel %vm3860, %v332, 128.0
    %v3989 = vsel %vm3861, %v333, 128.0
    %v3990 = vsel %vm3862, %v334, 128.0
    %v3991 = vsel %vm3863, %v335, 128.0
    %v3992 = vsel %vm3864, %v320, 128.0
    %v3993 = vsel %vm3865, %v321, 128.0
    %v3994 = vsel %vm3866, %v322, 128.0
    %v3995 = vsel %vm3867, %v323, 128.0
    %v3996 = vsel %vm3868, %v324, 128.0
    %v3997 = vsel %vm3869, %v325, 128.0
    %v3998 = vsel %vm3870, %v326, 128.0
    %v3999 = vsel %vm3871, %v327, 128.0
    %v4000 = vsel %vm3872, %v328, 128.0
    %v4001 = vsel %vm3873, %v329, 128.0
    %v4002 = vsel %vm3874, %v330, 128.0
    %v4003 = vsel %vm3875, %v331, 128.0
    %v4004 = vsel %vm3876, %v332, 128.0
    %v4005 = vsel %vm3877, %v333, 128.0
    %v4006 = vsel %vm3878, %v334, 128.0
    %v4007 = vsel %vm3879, %v335, 128.0
    %v4008 = vsel %vm3880, %v320, 128.0
    %v4009 = vsel %vm3881, %v321, 128.0
    %v4010 = vsel %vm3882, %v322, 128.0
    %v4011 = vsel %vm3883, %v323, 128.0
    %v4012 = vsel %vm3884, %v324, 128.0
    %v4013 = vsel %vm3885, %v325, 128.0
    %v4014 = vsel %vm3886, %v326, 128.0
    %v4015 = vsel %vm3887, %v327, 128.0
    %v4016 = vsel %vm3888, %v328, 128.0
    %v4017 = vsel %vm3889, %v329, 128.0
    %v4018 = vsel %vm3890, %v330, 128.0
    %v4019 = vsel %vm3891, %v331, 128.0
    %v4020 = vsel %vm3892, %v332, 128.0
    %v4021 = vsel %vm3893, %v333, 128.0
    %v4022 = vsel %vm3894, %v334, 128.0
    %v4023 = vsel %vm3895, %v335, 128.0
    %v4024 = vsel %vm3896, %v320, 128.0
    %v4025 = vsel %vm3897, %v321, 128.0
    %v4026 = vsel %vm3898, %v322, 128.0
    %v4027 = vsel %vm3899, %v323, 128.0
    %v4028 = vsel %vm3900, %v324, 128.0
    %v4029 = vsel %vm3901, %v325, 128.0
    %v4030 = vsel %vm3902, %v326, 128.0
    %v4031 = vsel %vm3903, %v327, 128.0
    %v4032 = vsel %vm3904, %v328, 128.0
    %v4033 = vsel %vm3905, %v329, 128.0
    %v4034 = vsel %vm3906, %v330, 128.0
    %v4035 = vsel %vm3907, %v331, 128.0
    %v4036 = vsel %vm3908, %v332, 128.0
    %v4037 = vsel %vm3909, %v333, 128.0
    %v4038 = vsel %vm3910, %v334, 128.0
    %v4039 = vsel %vm3911, %v335, 128.0
    %v4040 = vsel %vm3912, %v320, 128.0
    %v4041 = vsel %vm3913, %v321, 128.0
    %v4042 = vsel %vm3914, %v322, 128.0
    %v4043 = vsel %vm3915, %v323, 128.0
    %v4044 = vsel %vm3916, %v324, 128.0
    %v4045 = vsel %vm3917, %v325, 128.0
    %v4046 = vsel %vm3918, %v326, 128.0
    %v4047 = vsel %vm3919, %v327, 128.0
    %v4048 = vsel %vm3920, %v328, 128.0
    %v4049 = vsel %vm3921, %v329, 128.0
    %v4050 = vsel %vm3922, %v330, 128.0
    %v4051 = vsel %vm3923, %v331, 128.0
    %v4052 = vsel %vm3924, %v332, 128.0
    %v4053 = vsel %vm3925, %v333, 128.0
    %v4054 = vsel %vm3926, %v334, 128.0
    %v4055 = vsel %vm3927, %v335, 128.0
    %v4056 = vsel %vm3928, %v320, 128.0
    %v4057 = vsel %vm3929, %v321, 128.0
    %v4058 = vsel %vm3930, %v322, 128.0
    %v4059 = vsel %vm3931, %v323, 128.0
    %v4060 = vsel %vm3932, %v324, 128.0
    %v4061 = vsel %vm3933, %v325, 128.0
    %v4062 = vsel %vm3934, %v326, 128.0
    %v4063 = vsel %vm3935, %v327, 128.0
    %v4064 = vsel %vm3936, %v328, 128.0
    %v4065 = vsel %vm3937, %v329, 128.0
    %v4066 = vsel %vm3938, %v330, 128.0
    %v4067 = vsel %vm3939, %v331, 128.0
    %v4068 = vsel %vm3940, %v332, 128.0
    %v4069 = vsel %vm3941, %v333, 128.0
    %v4070 = vsel %vm3942, %v334, 128.0
    %v4071 = vsel %vm3943, %v335, 128.0
    %v4072 = vmin.f32 %v3944, %v3945
    %v4073 = vmin.f32 %v4072, %v3946
    %v4074 = vmin.f32 %v4073, %v3947
    %v4075 = vmin.f32 %v4074, %v3948
    %v4076 = vmin.f32 %v4075, %v3949
    %v4077 = vmin.f32 %v4076, %v3950
    %v4078 = vmin.f32 %v4077, %v3951
    %v4079 = vmin.f32 %v4078, %v3952
    %v4080 = vmin.f32 %v4079, %v3953
    %v4081 = vmin.f32 %v4080, %v3954
    %v4082 = vmin.f32 %v4081, %v3955
    %v4083 = vmin.f32 %v4082, %v3956
    %v4084 = vmin.f32 %v4083, %v3957
    %v4085 = vmin.f32 %v4084, %v3958
    %v4086 = vmin.f32 %v4085, %v3959
    %v4087 = vrot.slane %v4086, 4
    %v4088 = vmin.f32 %v4086, %v4087
    %v4089 = vrot.slane %v4088, 2
    %v4090 = vmin.f32 %v4088, %v4089
    %v4091 = vrot.slane %v4090, 1
    %v4092 = vmin.f32 %v4090, %v4091
    %v4093 = vmin.f32 %v3960, %v3961
    %v4094 = vmin.f32 %v4093, %v3962
    %v4095 = vmin.f32 %v4094, %v3963
    %v4096 = vmin.f32 %v4095, %v3964
    %v4097 = vmin.f32 %v4096, %v3965
    %v4098 = vmin.f32 %v4097, %v3966
    %v4099 = vmin.f32 %v4098, %v3967
    %v4100 = vmin.f32 %v4099, %v3968
    %v4101 = vmin.f32 %v4100, %v3969
    %v4102 = vmin.f32 %v4101, %v3970
    %v4103 = vmin.f32 %v4102, %v3971
    %v4104 = vmin.f32 %v4103, %v3972
    %v4105 = vmin.f32 %v4104, %v3973
    %v4106 = vmin.f32 %v4105, %v3974
    %v4107 = vmin.f32 %v4106, %v3975
    %v4108 = vrot.slane %v4107, 4
    %v4109 = vmin.f32 %v4107, %v4108
    %v4110 = vrot.slane %v4109, 2
    %v4111 = vmin.f32 %v4109, %v4110
    %v4112 = vrot.slane %v4111, 1
    %v4113 = vmin.f32 %v4111, %v4112
    %v4114 = vmin.f32 %v3976, %v3977
    %v4115 = vmin.f32 %v4114, %v3978
    %v4116 = vmin.f32 %v4115, %v3979
    %v4117 = vmin.f32 %v4116, %v3980
    %v4118 = vmin.f32 %v4117, %v3981
    %v4119 = vmin.f32 %v4118, %v3982
    %v4120 = vmin.f32 %v4119, %v3983
    %v4121 = vmin.f32 %v4120, %v3984
    %v4122 = vmin.f32 %v4121, %v3985
    %v4123 = vmin.f32 %v4122, %v3986
    %v4124 = vmin.f32 %v4123, %v3987
    %v4125 = vmin.f32 %v4124, %v3988
    %v4126 = vmin.f32 %v4125, %v3989
    %v4127 = vmin.f32 %v4126, %v3990
    %v4128 = vmin.f32 %v4127, %v3991
    %v4129 = vrot.slane %v4128, 4
    %v4130 = vmin.f32 %v4128, %v4129
    %v4131 = vrot.slane %v4130, 2
    %v4132 = vmin.f32 %v4130, %v4131
    %v4133 = vrot.slane %v4132, 1
    %v4134 = vmin.f32 %v4132, %v4133
    %v4135 = vmin.f32 %v3992, %v3993
    %v4136 = vmin.f32 %v4135, %v3994
    %v4137 = vmin.f32 %v4136, %v3995
    %v4138 = vmin.f32 %v4137, %v3996
    %v4139 = vmin.f32 %v4138, %v3997
    %v4140 = vmin.f32 %v4139, %v3998
    %v4141 = vmin.f32 %v4140, %v3999
    %v4142 = vmin.f32 %v4141, %v4000
    %v4143 = vmin.f32 %v4142, %v4001
    %v4144 = vmin.f32 %v4143, %v4002
    %v4145 = vmin.f32 %v4144, %v4003
    %v4146 = vmin.f32 %v4145, %v4004
    %v4147 = vmin.f32 %v4146, %v4005
    %v4148 = vmin.f32 %v4147, %v4006
    %v4149 = vmin.f32 %v4148, %v4007
    %v4150 = vrot.slane %v4149, 4
    %v4151 = vmin.f32 %v4149, %v4150
    %v4152 = vrot.slane %v4151, 2
    %v4153 = vmin.f32 %v4151, %v4152
    %v4154 = vrot.slane %v4153, 1
    %v4155 = vmin.f32 %v4153, %v4154
    %v4156 = vmin.f32 %v4008, %v4009
    %v4157 = vmin.f32 %v4156, %v4010
    %v4158 = vmin.f32 %v4157, %v4011
    %v4159 = vmin.f32 %v4158, %v4012
    %v4160 = vmin.f32 %v4159, %v4013
    %v4161 = vmin.f32 %v4160, %v4014
    %v4162 = vmin.f32 %v4161, %v4015
    %v4163 = vmin.f32 %v4162, %v4016
    %v4164 = vmin.f32 %v4163, %v4017
    %v4165 = vmin.f32 %v4164, %v4018
    %v4166 = vmin.f32 %v4165, %v4019
    %v4167 = vmin.f32 %v4166, %v4020
    %v4168 = vmin.f32 %v4167, %v4021
    %v4169 = vmin.f32 %v4168, %v4022
    %v4170 = vmin.f32 %v4169, %v4023
    %v4171 = vrot.slane %v4170, 4
    %v4172 = vmin.f32 %v4170, %v4171
    %v4173 = vrot.slane %v4172, 2
    %v4174 = vmin.f32 %v4172, %v4173
    %v4175 = vrot.slane %v4174, 1
    %v4176 = vmin.f32 %v4174, %v4175
    %v4177 = vmin.f32 %v4024, %v4025
    %v4178 = vmin.f32 %v4177, %v4026
    %v4179 = vmin.f32 %v4178, %v4027
    %v4180 = vmin.f32 %v4179, %v4028
    %v4181 = vmin.f32 %v4180, %v4029
    %v4182 = vmin.f32 %v4181, %v4030
    %v4183 = vmin.f32 %v4182, %v4031
    %v4184 = vmin.f32 %v4183, %v4032
    %v4185 = vmin.f32 %v4184, %v4033
    %v4186 = vmin.f32 %v4185, %v4034
    %v4187 = vmin.f32 %v4186, %v4035
    %v4188 = vmin.f32 %v4187, %v4036
    %v4189 = vmin.f32 %v4188, %v4037
    %v4190 = vmin.f32 %v4189, %v4038
    %v4191 = vmin.f32 %v4190, %v4039
    %v4192 = vrot.slane %v4191, 4
    %v4193 = vmin.f32 %v4191, %v4192
    %v4194 = vrot.slane %v4193, 2
    %v4195 = vmin.f32 %v4193, %v4194
    %v4196 = vrot.slane %v4195, 1
    %v4197 = vmin.f32 %v4195, %v4196
    %v4198 = vmin.f32 %v4040, %v4041
    %v4199 = vmin.f32 %v4198, %v4042
    %v4200 = vmin.f32 %v4199, %v4043
    %v4201 = vmin.f32 %v4200, %v4044
    %v4202 = vmin.f32 %v4201, %v4045
    %v4203 = vmin.f32 %v4202, %v4046
    %v4204 = vmin.f32 %v4203, %v4047
    %v4205 = vmin.f32 %v4204, %v4048
    %v4206 = vmin.f32 %v4205, %v4049
    %v4207 = vmin.f32 %v4206, %v4050
    %v4208 = vmin.f32 %v4207, %v4051
    %v4209 = vmin.f32 %v4208, %v4052
    %v4210 = vmin.f32 %v4209, %v4053
    %v4211 = vmin.f32 %v4210, %v4054
    %v4212 = vmin.f32 %v4211, %v4055
    %v4213 = vrot.slane %v4212, 4
    %v4214 = vmin.f32 %v4212, %v4213
    %v4215 = vrot.slane %v4214, 2
    %v4216 = vmin.f32 %v4214, %v4215
    %v4217 = vrot.slane %v4216, 1
    %v4218 = vmin.f32 %v4216, %v4217
    %v4219 = vmin.f32 %v4056, %v4057
    %v4220 = vmin.f32 %v4219, %v4058
    %v4221 = vmin.f32 %v4220, %v4059
    %v4222 = vmin.f32 %v4221, %v4060
    %v4223 = vmin.f32 %v4222, %v4061
    %v4224 = vmin.f32 %v4223, %v4062
    %v4225 = vmin.f32 %v4224, %v4063
    %v4226 = vmin.f32 %v4225, %v4064
    %v4227 = vmin.f32 %v4226, %v4065
    %v4228 = vmin.f32 %v4227, %v4066
    %v4229 = vmin.f32 %v4228, %v4067
    %v4230 = vmin.f32 %v4229, %v4068
    %v4231 = vmin.f32 %v4230, %v4069
    %v4232 = vmin.f32 %v4231, %v4070
    %v4233 = vmin.f32 %v4232, %v4071
    %v4234 = vrot.slane %v4233, 4
    %v4235 = vmin.f32 %v4233, %v4234
    %v4236 = vrot.slane %v4235, 2
    %v4237 = vmin.f32 %v4235, %v4236
    %v4238 = vrot.slane %v4237, 1
    %v4239 = vmin.f32 %v4237, %v4238
    %vm4240 = vcmp.eq.f32.partialorder %v320, %v2932
    %vm4241 = vcmp.eq.f32.partialorder %v321, %v2932
    %vm4242 = vcmp.eq.f32.partialorder %v322, %v2932
    %vm4243 = vcmp.eq.f32.partialorder %v323, %v2932
    %vm4244 = vcmp.eq.f32.partialorder %v324, %v2932
    %vm4245 = vcmp.eq.f32.partialorder %v325, %v2932
    %vm4246 = vcmp.eq.f32.partialorder %v326, %v2932
    %vm4247 = vcmp.eq.f32.partialorder %v327, %v2932
    %vm4248 = vcmp.eq.f32.partialorder %v328, %v2932
    %vm4249 = vcmp.eq.f32.partialorder %v329, %v2932
    %vm4250 = vcmp.eq.f32.partialorder %v330, %v2932
    %vm4251 = vcmp.eq.f32.partialorder %v331, %v2932
    %vm4252 = vcmp.eq.f32.partialorder %v332, %v2932
    %vm4253 = vcmp.eq.f32.partialorder %v333, %v2932
    %vm4254 = vcmp.eq.f32.partialorder %v334, %v2932
    %vm4255 = vcmp.eq.f32.partialorder %v335, %v2932
    %vm4256 = vcmp.eq.f32.partialorder %v320, %v2953
    %vm4257 = vcmp.eq.f32.partialorder %v321, %v2953
    %vm4258 = vcmp.eq.f32.partialorder %v322, %v2953
    %vm4259 = vcmp.eq.f32.partialorder %v323, %v2953
    %vm4260 = vcmp.eq.f32.partialorder %v324, %v2953
    %vm4261 = vcmp.eq.f32.partialorder %v325, %v2953
    %vm4262 = vcmp.eq.f32.partialorder %v326, %v2953
    %vm4263 = vcmp.eq.f32.partialorder %v327, %v2953
    %vm4264 = vcmp.eq.f32.partialorder %v328, %v2953
    %vm4265 = vcmp.eq.f32.partialorder %v329, %v2953
    %vm4266 = vcmp.eq.f32.partialorder %v330, %v2953
    %vm4267 = vcmp.eq.f32.partialorder %v331, %v2953
    %vm4268 = vcmp.eq.f32.partialorder %v332, %v2953
    %vm4269 = vcmp.eq.f32.partialorder %v333, %v2953
    %vm4270 = vcmp.eq.f32.partialorder %v334, %v2953
    %vm4271 = vcmp.eq.f32.partialorder %v335, %v2953
    %vm4272 = vcmp.eq.f32.partialorder %v320, %v2974
    %vm4273 = vcmp.eq.f32.partialorder %v321, %v2974
    %vm4274 = vcmp.eq.f32.partialorder %v322, %v2974
    %vm4275 = vcmp.eq.f32.partialorder %v323, %v2974
    %vm4276 = vcmp.eq.f32.partialorder %v324, %v2974
    %vm4277 = vcmp.eq.f32.partialorder %v325, %v2974
    %vm4278 = vcmp.eq.f32.partialorder %v326, %v2974
    %vm4279 = vcmp.eq.f32.partialorder %v327, %v2974
    %vm4280 = vcmp.eq.f32.partialorder %v328, %v2974
    %vm4281 = vcmp.eq.f32.partialorder %v329, %v2974
    %vm4282 = vcmp.eq.f32.partialorder %v330, %v2974
    %vm4283 = vcmp.eq.f32.partialorder %v331, %v2974
    %vm4284 = vcmp.eq.f32.partialorder %v332, %v2974
    %vm4285 = vcmp.eq.f32.partialorder %v333, %v2974
    %vm4286 = vcmp.eq.f32.partialorder %v334, %v2974
    %vm4287 = vcmp.eq.f32.partialorder %v335, %v2974
    %vm4288 = vcmp.eq.f32.partialorder %v320, %v2995
    %vm4289 = vcmp.eq.f32.partialorder %v321, %v2995
    %vm4290 = vcmp.eq.f32.partialorder %v322, %v2995
    %vm4291 = vcmp.eq.f32.partialorder %v323, %v2995
    %vm4292 = vcmp.eq.f32.partialorder %v324, %v2995
    %vm4293 = vcmp.eq.f32.partialorder %v325, %v2995
    %vm4294 = vcmp.eq.f32.partialorder %v326, %v2995
    %vm4295 = vcmp.eq.f32.partialorder %v327, %v2995
    %vm4296 = vcmp.eq.f32.partialorder %v328, %v2995
    %vm4297 = vcmp.eq.f32.partialorder %v329, %v2995
    %vm4298 = vcmp.eq.f32.partialorder %v330, %v2995
    %vm4299 = vcmp.eq.f32.partialorder %v331, %v2995
    %vm4300 = vcmp.eq.f32.partialorder %v332, %v2995
    %vm4301 = vcmp.eq.f32.partialorder %v333, %v2995
    %vm4302 = vcmp.eq.f32.partialorder %v334, %v2995
    %vm4303 = vcmp.eq.f32.partialorder %v335, %v2995
    %vm4304 = vcmp.eq.f32.partialorder %v320, %v3016
    %vm4305 = vcmp.eq.f32.partialorder %v321, %v3016
    %vm4306 = vcmp.eq.f32.partialorder %v322, %v3016
    %vm4307 = vcmp.eq.f32.partialorder %v323, %v3016
    %vm4308 = vcmp.eq.f32.partialorder %v324, %v3016
    %vm4309 = vcmp.eq.f32.partialorder %v325, %v3016
    %vm4310 = vcmp.eq.f32.partialorder %v326, %v3016
    %vm4311 = vcmp.eq.f32.partialorder %v327, %v3016
    %vm4312 = vcmp.eq.f32.partialorder %v328, %v3016
    %vm4313 = vcmp.eq.f32.partialorder %v329, %v3016
    %vm4314 = vcmp.eq.f32.partialorder %v330, %v3016
    %vm4315 = vcmp.eq.f32.partialorder %v331, %v3016
    %vm4316 = vcmp.eq.f32.partialorder %v332, %v3016
    %vm4317 = vcmp.eq.f32.partialorder %v333, %v3016
    %vm4318 = vcmp.eq.f32.partialorder %v334, %v3016
    %vm4319 = vcmp.eq.f32.partialorder %v335, %v3016
    %vm4320 = vcmp.eq.f32.partialorder %v320, %v3037
    %vm4321 = vcmp.eq.f32.partialorder %v321, %v3037
    %vm4322 = vcmp.eq.f32.partialorder %v322, %v3037
    %vm4323 = vcmp.eq.f32.partialorder %v323, %v3037
    %vm4324 = vcmp.eq.f32.partialorder %v324, %v3037
    %vm4325 = vcmp.eq.f32.partialorder %v325, %v3037
    %vm4326 = vcmp.eq.f32.partialorder %v326, %v3037
    %vm4327 = vcmp.eq.f32.partialorder %v327, %v3037
    %vm4328 = vcmp.eq.f32.partialorder %v328, %v3037
    %vm4329 = vcmp.eq.f32.partialorder %v329, %v3037
    %vm4330 = vcmp.eq.f32.partialorder %v330, %v3037
    %vm4331 = vcmp.eq.f32.partialorder %v331, %v3037
    %vm4332 = vcmp.eq.f32.partialorder %v332, %v3037
    %vm4333 = vcmp.eq.f32.partialorder %v333, %v3037
    %vm4334 = vcmp.eq.f32.partialorder %v334, %v3037
    %vm4335 = vcmp.eq.f32.partialorder %v335, %v3037
    %vm4336 = vcmp.eq.f32.partialorder %v320, %v3058
    %vm4337 = vcmp.eq.f32.partialorder %v321, %v3058
    %vm4338 = vcmp.eq.f32.partialorder %v322, %v3058
    %vm4339 = vcmp.eq.f32.partialorder %v323, %v3058
    %vm4340 = vcmp.eq.f32.partialorder %v324, %v3058
    %vm4341 = vcmp.eq.f32.partialorder %v325, %v3058
    %vm4342 = vcmp.eq.f32.partialorder %v326, %v3058
    %vm4343 = vcmp.eq.f32.partialorder %v327, %v3058
    %vm4344 = vcmp.eq.f32.partialorder %v328, %v3058
    %vm4345 = vcmp.eq.f32.partialorder %v329, %v3058
    %vm4346 = vcmp.eq.f32.partialorder %v330, %v3058
    %vm4347 = vcmp.eq.f32.partialorder %v331, %v3058
    %vm4348 = vcmp.eq.f32.partialorder %v332, %v3058
    %vm4349 = vcmp.eq.f32.partialorder %v333, %v3058
    %vm4350 = vcmp.eq.f32.partialorder %v334, %v3058
    %vm4351 = vcmp.eq.f32.partialorder %v335, %v3058
    %vm4352 = vcmp.eq.f32.partialorder %v320, %v3079
    %vm4353 = vcmp.eq.f32.partialorder %v321, %v3079
    %vm4354 = vcmp.eq.f32.partialorder %v322, %v3079
    %vm4355 = vcmp.eq.f32.partialorder %v323, %v3079
    %vm4356 = vcmp.eq.f32.partialorder %v324, %v3079
    %vm4357 = vcmp.eq.f32.partialorder %v325, %v3079
    %vm4358 = vcmp.eq.f32.partialorder %v326, %v3079
    %vm4359 = vcmp.eq.f32.partialorder %v327, %v3079
    %vm4360 = vcmp.eq.f32.partialorder %v328, %v3079
    %vm4361 = vcmp.eq.f32.partialorder %v329, %v3079
    %vm4362 = vcmp.eq.f32.partialorder %v330, %v3079
    %vm4363 = vcmp.eq.f32.partialorder %v331, %v3079
    %vm4364 = vcmp.eq.f32.partialorder %v332, %v3079
    %vm4365 = vcmp.eq.f32.partialorder %v333, %v3079
    %vm4366 = vcmp.eq.f32.partialorder %v334, %v3079
    %vm4367 = vcmp.eq.f32.partialorder %v335, %v3079
    %v4368 = vsel %vm4240, %v45, 0.0
    %v4369 = vsel %vm4241, %v46, 0.0
    %v4370 = vsel %vm4242, %v47, 0.0
    %v4371 = vsel %vm4243, %v48, 0.0
    %v4372 = vsel %vm4244, %v49, 0.0
    %v4373 = vsel %vm4245, %v50, 0.0
    %v4374 = vsel %vm4246, %v51, 0.0
    %v4375 = vsel %vm4247, %v52, 0.0
    %v4376 = vsel %vm4248, %v53, 0.0
    %v4377 = vsel %vm4249, %v54, 0.0
    %v4378 = vsel %vm4250, %v55, 0.0
    %v4379 = vsel %vm4251, %v56, 0.0
    %v4380 = vsel %vm4252, %v57, 0.0
    %v4381 = vsel %vm4253, %v58, 0.0
    %v4382 = vsel %vm4254, %v59, 0.0
    %v4383 = vsel %vm4255, %v60, 0.0
    %v4384 = vsel %vm4256, %v61, 0.0
    %v4385 = vsel %vm4257, %v62, 0.0
    %v4386 = vsel %vm4258, %v63, 0.0
    %v4387 = vsel %vm4259, %v64, 0.0
    %v4388 = vsel %vm4260, %v65, 0.0
    %v4389 = vsel %vm4261, %v66, 0.0
    %v4390 = vsel %vm4262, %v67, 0.0
    %v4391 = vsel %vm4263, %v68, 0.0
    %v4392 = vsel %vm4264, %v69, 0.0
    %v4393 = vsel %vm4265, %v70, 0.0
    %v4394 = vsel %vm4266, %v71, 0.0
    %v4395 = vsel %vm4267, %v72, 0.0
    %v4396 = vsel %vm4268, %v73, 0.0
    %v4397 = vsel %vm4269, %v74, 0.0
    %v4398 = vsel %vm4270, %v75, 0.0
    %v4399 = vsel %vm4271, %v76, 0.0
    %v4400 = vsel %vm4272, %v77, 0.0
    %v4401 = vsel %vm4273, %v78, 0.0
    %v4402 = vsel %vm4274, %v79, 0.0
    %v4403 = vsel %vm4275, %v80, 0.0
    %v4404 = vsel %vm4276, %v81, 0.0
    %v4405 = vsel %vm4277, %v82, 0.0
    %v4406 = vsel %vm4278, %v83, 0.0
    %v4407 = vsel %vm4279, %v84, 0.0
    %v4408 = vsel %vm4280, %v85, 0.0
    %v4409 = vsel %vm4281, %v86, 0.0
    %v4410 = vsel %vm4282, %v87, 0.0
    %v4411 = vsel %vm4283, %v88, 0.0
    %v4412 = vsel %vm4284, %v89, 0.0
    %v4413 = vsel %vm4285, %v90, 0.0
    %v4414 = vsel %vm4286, %v91, 0.0
    %v4415 = vsel %vm4287, %v92, 0.0
    %v4416 = vsel %vm4288, %v93, 0.0
    %v4417 = vsel %vm4289, %v94, 0.0
    %v4418 = vsel %vm4290, %v95, 0.0
    %v4419 = vsel %vm4291, %v96, 0.0
    %v4420 = vsel %vm4292, %v97, 0.0
    %v4421 = vsel %vm4293, %v98, 0.0
    %v4422 = vsel %vm4294, %v99, 0.0
    %v4423 = vsel %vm4295, %v100, 0.0
    %v4424 = vsel %vm4296, %v101, 0.0
    %v4425 = vsel %vm4297, %v102, 0.0
    %v4426 = vsel %vm4298, %v103, 0.0
    %v4427 = vsel %vm4299, %v104, 0.0
    %v4428 = vsel %vm4300, %v105, 0.0
    %v4429 = vsel %vm4301, %v106, 0.0
    %v4430 = vsel %vm4302, %v107, 0.0
    %v4431 = vsel %vm4303, %v108, 0.0
    %v4432 = vsel %vm4304, %v109, 0.0
    %v4433 = vsel %vm4305, %v110, 0.0
    %v4434 = vsel %vm4306, %v111, 0.0
    %v4435 = vsel %vm4307, %v112, 0.0
    %v4436 = vsel %vm4308, %v113, 0.0
    %v4437 = vsel %vm4309, %v114, 0.0
    %v4438 = vsel %vm4310, %v115, 0.0
    %v4439 = vsel %vm4311, %v116, 0.0
    %v4440 = vsel %vm4312, %v117, 0.0
    %v4441 = vsel %vm4313, %v118, 0.0
    %v4442 = vsel %vm4314, %v119, 0.0
    %v4443 = vsel %vm4315, %v120, 0.0
    %v4444 = vsel %vm4316, %v121, 0.0
    %v4445 = vsel %vm4317, %v122, 0.0
    %v4446 = vsel %vm4318, %v123, 0.0
    %v4447 = vsel %vm4319, %v124, 0.0
    %v4448 = vsel %vm4320, %v125, 0.0
    %v4449 = vsel %vm4321, %v126, 0.0
    %v4450 = vsel %vm4322, %v127, 0.0
    %v4451 = vsel %vm4323, %v128, 0.0
    %v4452 = vsel %vm4324, %v129, 0.0
    %v4453 = vsel %vm4325, %v130, 0.0
    %v4454 = vsel %vm4326, %v131, 0.0
    %v4455 = vsel %vm4327, %v132, 0.0
    %v4456 = vsel %vm4328, %v133, 0.0
    %v4457 = vsel %vm4329, %v134, 0.0
    %v4458 = vsel %vm4330, %v135, 0.0
    %v4459 = vsel %vm4331, %v136, 0.0
    %v4460 = vsel %vm4332, %v137, 0.0
    %v4461 = vsel %vm4333, %v138, 0.0
    %v4462 = vsel %vm4334, %v139, 0.0
    %v4463 = vsel %vm4335, %v140, 0.0
    %v4464 = vsel %vm4336, %v141, 0.0
    %v4465 = vsel %vm4337, %v142, 0.0
    %v4466 = vsel %vm4338, %v143, 0.0
    %v4467 = vsel %vm4339, %v144, 0.0
    %v4468 = vsel %vm4340, %v145, 0.0
    %v4469 = vsel %vm4341, %v146, 0.0
    %v4470 = vsel %vm4342, %v147, 0.0
    %v4471 = vsel %vm4343, %v148, 0.0
    %v4472 = vsel %vm4344, %v149, 0.0
    %v4473 = vsel %vm4345, %v150, 0.0
    %v4474 = vsel %vm4346, %v151, 0.0
    %v4475 = vsel %vm4347, %v152, 0.0
    %v4476 = vsel %vm4348, %v153, 0.0
    %v4477 = vsel %vm4349, %v154, 0.0
    %v4478 = vsel %vm4350, %v155, 0.0
    %v4479 = vsel %vm4351, %v156, 0.0
    %v4480 = vsel %vm4352, %v157, 0.0
    %v4481 = vsel %vm4353, %v158, 0.0
    %v4482 = vsel %vm4354, %v159, 0.0
    %v4483 = vsel %vm4355, %v160, 0.0
    %v4484 = vsel %vm4356, %v161, 0.0
    %v4485 = vsel %vm4357, %v162, 0.0
    %v4486 = vsel %vm4358, %v163, 0.0
    %v4487 = vsel %vm4359, %v164, 0.0
    %v4488 = vsel %vm4360, %v165, 0.0
    %v4489 = vsel %vm4361, %v166, 0.0
    %v4490 = vsel %vm4362, %v167, 0.0
    %v4491 = vsel %vm4363, %v168, 0.0
    %v4492 = vsel %vm4364, %v169, 0.0
    %v4493 = vsel %vm4365, %v170, 0.0
    %v4494 = vsel %vm4366, %v171, 0.0
    %v4495 = vsel %vm4367, %v172, 0.0
    %v4496 = vadd.f32 %v4368, %v4369
    %v4497 = vadd.f32 %v4496, %v4370
    %v4498 = vadd.f32 %v4497, %v4371
    %v4499 = vadd.f32 %v4498, %v4372
    %v4500 = vadd.f32 %v4499, %v4373
    %v4501 = vadd.f32 %v4500, %v4374
    %v4502 = vadd.f32 %v4501, %v4375
    %v4503 = vadd.f32 %v4502, %v4376
    %v4504 = vadd.f32 %v4503, %v4377
    %v4505 = vadd.f32 %v4504, %v4378
    %v4506 = vadd.f32 %v4505, %v4379
    %v4507 = vadd.f32 %v4506, %v4380
    %v4508 = vadd.f32 %v4507, %v4381
    %v4509 = vadd.f32 %v4508, %v4382
    %v4510 = vadd.f32 %v4509, %v4383
    %v4511 = vrot.slane %v4510, 4
    %v4512 = vadd.f32 %v4510, %v4511
    %v4513 = vrot.slane %v4512, 2
    %v4514 = vadd.f32 %v4512, %v4513
    %v4515 = vrot.slane %v4514, 1
    %v4516 = vadd.f32 %v4514, %v4515
    %v4517 = vadd.f32 %v4384, %v4385
    %v4518 = vadd.f32 %v4517, %v4386
    %v4519 = vadd.f32 %v4518, %v4387
    %v4520 = vadd.f32 %v4519, %v4388
    %v4521 = vadd.f32 %v4520, %v4389
    %v4522 = vadd.f32 %v4521, %v4390
    %v4523 = vadd.f32 %v4522, %v4391
    %v4524 = vadd.f32 %v4523, %v4392
    %v4525 = vadd.f32 %v4524, %v4393
    %v4526 = vadd.f32 %v4525, %v4394
    %v4527 = vadd.f32 %v4526, %v4395
    %v4528 = vadd.f32 %v4527, %v4396
    %v4529 = vadd.f32 %v4528, %v4397
    %v4530 = vadd.f32 %v4529, %v4398
    %v4531 = vadd.f32 %v4530, %v4399
    %v4532 = vrot.slane %v4531, 4
    %v4533 = vadd.f32 %v4531, %v4532
    %v4534 = vrot.slane %v4533, 2
    %v4535 = vadd.f32 %v4533, %v4534
    %v4536 = vrot.slane %v4535, 1
    %v4537 = vadd.f32 %v4535, %v4536
    %v4538 = vadd.f32 %v4400, %v4401
    %v4539 = vadd.f32 %v4538, %v4402
    %v4540 = vadd.f32 %v4539, %v4403
    %v4541 = vadd.f32 %v4540, %v4404
    %v4542 = vadd.f32 %v4541, %v4405
    %v4543 = vadd.f32 %v4542, %v4406
    %v4544 = vadd.f32 %v4543, %v4407
    %v4545 = vadd.f32 %v4544, %v4408
    %v4546 = vadd.f32 %v4545, %v4409
    %v4547 = vadd.f32 %v4546, %v4410
    %v4548 = vadd.f32 %v4547, %v4411
    %v4549 = vadd.f32 %v4548, %v4412
    %v4550 = vadd.f32 %v4549, %v4413
    %v4551 = vadd.f32 %v4550, %v4414
    %v4552 = vadd.f32 %v4551, %v4415
    %v4553 = vrot.slane %v4552, 4
    %v4554 = vadd.f32 %v4552, %v4553
    %v4555 = vrot.slane %v4554, 2
    %v4556 = vadd.f32 %v4554, %v4555
    %v4557 = vrot.slane %v4556, 1
    %v4558 = vadd.f32 %v4556, %v4557
    %v4559 = vadd.f32 %v4416, %v4417
    %v4560 = vadd.f32 %v4559, %v4418
    %v4561 = vadd.f32 %v4560, %v4419
    %v4562 = vadd.f32 %v4561, %v4420
    %v4563 = vadd.f32 %v4562, %v4421
    %v4564 = vadd.f32 %v4563, %v4422
    %v4565 = vadd.f32 %v4564, %v4423
    %v4566 = vadd.f32 %v4565, %v4424
    %v4567 = vadd.f32 %v4566, %v4425
    %v4568 = vadd.f32 %v4567, %v4426
    %v4569 = vadd.f32 %v4568, %v4427
    %v4570 = vadd.f32 %v4569, %v4428
    %v4571 = vadd.f32 %v4570, %v4429
    %v4572 = vadd.f32 %v4571, %v4430
    %v4573 = vadd.f32 %v4572, %v4431
    %v4574 = vrot.slane %v4573, 4
    %v4575 = vadd.f32 %v4573, %v4574
    %v4576 = vrot.slane %v4575, 2
    %v4577 = vadd.f32 %v4575, %v4576
    %v4578 = vrot.slane %v4577, 1
    %v4579 = vadd.f32 %v4577, %v4578
    %v4580 = vadd.f32 %v4432, %v4433
    %v4581 = vadd.f32 %v4580, %v4434
    %v4582 = vadd.f32 %v4581, %v4435
    %v4583 = vadd.f32 %v4582, %v4436
    %v4584 = vadd.f32 %v4583, %v4437
    %v4585 = vadd.f32 %v4584, %v4438
    %v4586 = vadd.f32 %v4585, %v4439
    %v4587 = vadd.f32 %v4586, %v4440
    %v4588 = vadd.f32 %v4587, %v4441
    %v4589 = vadd.f32 %v4588, %v4442
    %v4590 = vadd.f32 %v4589, %v4443
    %v4591 = vadd.f32 %v4590, %v4444
    %v4592 = vadd.f32 %v4591, %v4445
    %v4593 = vadd.f32 %v4592, %v4446
    %v4594 = vadd.f32 %v4593, %v4447
    %v4595 = vrot.slane %v4594, 4
    %v4596 = vadd.f32 %v4594, %v4595
    %v4597 = vrot.slane %v4596, 2
    %v4598 = vadd.f32 %v4596, %v4597
    %v4599 = vrot.slane %v4598, 1
    %v4600 = vadd.f32 %v4598, %v4599
    %v4601 = vadd.f32 %v4448, %v4449
    %v4602 = vadd.f32 %v4601, %v4450
    %v4603 = vadd.f32 %v4602, %v4451
    %v4604 = vadd.f32 %v4603, %v4452
    %v4605 = vadd.f32 %v4604, %v4453
    %v4606 = vadd.f32 %v4605, %v4454
    %v4607 = vadd.f32 %v4606, %v4455
    %v4608 = vadd.f32 %v4607, %v4456
    %v4609 = vadd.f32 %v4608, %v4457
    %v4610 = vadd.f32 %v4609, %v4458
    %v4611 = vadd.f32 %v4610, %v4459
    %v4612 = vadd.f32 %v4611, %v4460
    %v4613 = vadd.f32 %v4612, %v4461
    %v4614 = vadd.f32 %v4613, %v4462
    %v4615 = vadd.f32 %v4614, %v4463
    %v4616 = vrot.slane %v4615, 4
    %v4617 = vadd.f32 %v4615, %v4616
    %v4618 = vrot.slane %v4617, 2
    %v4619 = vadd.f32 %v4617, %v4618
    %v4620 = vrot.slane %v4619, 1
    %v4621 = vadd.f32 %v4619, %v4620
    %v4622 = vadd.f32 %v4464, %v4465
    %v4623 = vadd.f32 %v4622, %v4466
    %v4624 = vadd.f32 %v4623, %v4467
    %v4625 = vadd.f32 %v4624, %v4468
    %v4626 = vadd.f32 %v4625, %v4469
    %v4627 = vadd.f32 %v4626, %v4470
    %v4628 = vadd.f32 %v4627, %v4471
    %v4629 = vadd.f32 %v4628, %v4472
    %v4630 = vadd.f32 %v4629, %v4473
    %v4631 = vadd.f32 %v4630, %v4474
    %v4632 = vadd.f32 %v4631, %v4475
    %v4633 = vadd.f32 %v4632, %v4476
    %v4634 = vadd.f32 %v4633, %v4477
    %v4635 = vadd.f32 %v4634, %v4478
    %v4636 = vadd.f32 %v4635, %v4479
    %v4637 = vrot.slane %v4636, 4
    %v4638 = vadd.f32 %v4636, %v4637
    %v4639 = vrot.slane %v4638, 2
    %v4640 = vadd.f32 %v4638, %v4639
    %v4641 = vrot.slane %v4640, 1
    %v4642 = vadd.f32 %v4640, %v4641
    %v4643 = vadd.f32 %v4480, %v4481
    %v4644 = vadd.f32 %v4643, %v4482
    %v4645 = vadd.f32 %v4644, %v4483
    %v4646 = vadd.f32 %v4645, %v4484
    %v4647 = vadd.f32 %v4646, %v4485
    %v4648 = vadd.f32 %v4647, %v4486
    %v4649 = vadd.f32 %v4648, %v4487
    %v4650 = vadd.f32 %v4649, %v4488
    %v4651 = vadd.f32 %v4650, %v4489
    %v4652 = vadd.f32 %v4651, %v4490
    %v4653 = vadd.f32 %v4652, %v4491
    %v4654 = vadd.f32 %v4653, %v4492
    %v4655 = vadd.f32 %v4654, %v4493
    %v4656 = vadd.f32 %v4655, %v4494
    %v4657 = vadd.f32 %v4656, %v4495
    %v4658 = vrot.slane %v4657, 4
    %v4659 = vadd.f32 %v4657, %v4658
    %v4660 = vrot.slane %v4659, 2
    %v4661 = vadd.f32 %v4659, %v4660
    %v4662 = vrot.slane %v4661, 1
    %v4663 = vadd.f32 %v4661, %v4662
    %v4664 = vadd.f32 %v3100, %v3801
    %v4665 = vadd.f32 %v3121, %v3803
    %v4666 = vadd.f32 %v3142, %v3805
    %v4667 = vadd.f32 %v3163, %v3807
    %v4668 = vadd.f32 %v3184, %v3809
    %v4669 = vadd.f32 %v3205, %v3811
    %v4670 = vadd.f32 %v3226, %v3813
    %v4671 = vadd.f32 %v3247, %v3815
    %v4672 = vsub.f32 %v4664, %v4516
    %v4673 = vsub.f32 %v4665, %v4537
    %v4674 = vsub.f32 %v4666, %v4558
    %v4675 = vsub.f32 %v4667, %v4579
    %v4676 = vsub.f32 %v4668, %v4600
    %v4677 = vsub.f32 %v4669, %v4621
    %v4678 = vsub.f32 %v4670, %v4642
    %v4679 = vsub.f32 %v4671, %v4663
    %vm4688 = vcmask 1041409
    %v4689 = vsel %vm4688, %v4673, %v4672
    %vm4690 = vcmask 1042434
    %v4691 = vsel %vm4690, %v4674, %v4689
    %vm4692 = vcmask 1043459
    %v4693 = vsel %vm4692, %v4675, %v4691
    %vm4694 = vcmask 1044484
    %v4695 = vsel %vm4694, %v4676, %v4693
    %vm4696 = vcmask 1045509
    %v4697 = vsel %vm4696, %v4677, %v4695
    %vm4698 = vcmask 1046534
    %v4699 = vsel %vm4698, %v4678, %v4697
    %vm4700 = vcmask 1047559
    %v4701 = vsel %vm4700, %v4679, %v4699
    %4703 = vst [vmem:[%s2] sm:$0xff] %v4701
    %vm4704 = vcmp.eq.f32.partialorder %v4092, %v2932
    %vm4705 = vcmp.eq.f32.partialorder %v4113, %v2953
    %vm4706 = vcmp.eq.f32.partialorder %v4134, %v2974
    %vm4707 = vcmp.eq.f32.partialorder %v4155, %v2995
    %vm4708 = vcmp.eq.f32.partialorder %v4176, %v3016
    %vm4709 = vcmp.eq.f32.partialorder %v4197, %v3037
    %vm4710 = vcmp.eq.f32.partialorder %v4218, %v3058
    %vm4711 = vcmp.eq.f32.partialorder %v4239, %v3079
    %v4712 = vsel %vm4704, 1, 0
    %v4713 = vsel %vm4705, 1, 0
    %v4714 = vsel %vm4706, 1, 0
    %v4715 = vsel %vm4707, 1, 0
    %v4716 = vsel %vm4708, 1, 0
    %v4717 = vsel %vm4709, 1, 0
    %v4718 = vsel %vm4710, 1, 0
    %v4719 = vsel %vm4711, 1, 0
    %v4720 = vcvt.s32.f32 %v4712
    %v4721 = vcvt.s32.f32 %v4713
    %v4722 = vcvt.s32.f32 %v4714
    %v4723 = vcvt.s32.f32 %v4715
    %v4724 = vcvt.s32.f32 %v4716
    %v4725 = vcvt.s32.f32 %v4717
    %v4726 = vcvt.s32.f32 %v4718
    %v4727 = vcvt.s32.f32 %v4719
    %v4736 = vsel %vm4688, %v4721, %v4720
    %v4737 = vsel %vm4690, %v4722, %v4736
    %v4738 = vsel %vm4692, %v4723, %v4737
    %v4739 = vsel %vm4694, %v4724, %v4738
    %v4740 = vsel %vm4696, %v4725, %v4739
    %v4741 = vsel %vm4698, %v4726, %v4740
    %v4742 = vsel %vm4700, %v4727, %v4741
    %4744 = vst [vmem:[%s3] sm:$0xff] %v4742
    // Predicated region
    $region18: #{weight_binding_loss.1} parent=1 // pred_check
      _
    $region19: #{weight_binding_loss.1} parent=1 // pred_check_branch
      %4746 = sbr.rel (0) target = $region21
    $region20: #{weight_binding_loss.1} parent=1 // pred_region
      _
    $region21: #{weight_binding_loss.1} parent=1 // pred_fallthru
      _
    // Predicated region
    $region22: #{weight_binding_loss.1} parent=1 // pred_check
      _
    $region23: #{weight_binding_loss.1} parent=1 // pred_check_branch
      %4748 = sbr.rel (0) target = $region25
    $region24: #{weight_binding_loss.1} parent=1 // pred_region
      _
    $region25: #{weight_binding_loss.1} parent=1 // pred_fallthru
      _
    // Predicated region
    $region26: #{weight_binding_loss.1} parent=1 // pred_check
      _
    $region27: #{weight_binding_loss.1} parent=1 // pred_check_branch
      %4750 = sbr.rel (0) target = $region29
    $region28: #{weight_binding_loss.1} parent=1 // pred_region
      _
    $region29: #{weight_binding_loss.1} parent=1 // pred_fallthru
      _
    // Predicated region
    $region30: #{weight_binding_loss.1} parent=1 // pred_check
      _
    $region31: #{weight_binding_loss.1} parent=1 // pred_check_branch
      %4752 = sbr.rel (0) target = $region33
    $region32: #{weight_binding_loss.1} parent=1 // pred_region
      _
    $region33: #{weight_binding_loss.1} parent=1 // pred_fallthru
      _
    %4753 = vsyncpa [#allocation3], 1
    %4754 = vsyncpa [#allocation5], 1

</llo_original>
